<compile_context>
chip_gen: v5e
topology: v5e:2x2
jax: 0.10.0
libtpu: 0.0.40
codegen_flags: <defaults>
</compile_context>

<pallas_src>
import functools

import jax
import jax.numpy as jnp
from jax.experimental import pallas as pl
from jax.experimental.pallas import tpu as pltpu


# ------------------------------ fused kernel --------------------------------

def _fused_transformer_kernel(
        x_ref, ifc_w, ifc_b, ofc_w, ofc_b,
        qw, qb, kw, kb, vw, vb, ow, ob,
        l1w, l1b, l2w, l2b, n1g, n1b, n2g, n2b,
        o_ref, *, nhead, num_layers, eps):
    B, S, In = x_ref.shape
    E = ifc_w.shape[1]
    H = nhead
    Dh = E // H
    scale = 1.0 / float(Dh) ** 0.5

    # rows ordered (batch, seq): row r = b*S + s.  PyTorch's permute(1,0,2) only changes which
    # axis attention mixes over; here attention mixes over s within each b -> identical math.
    x = x_ref[...].astype(jnp.float32).reshape(B * S, In)

    # ---- input_fc ----
    h = jnp.dot(x, ifc_w[...], preferred_element_type=jnp.float32) + ifc_b[...]

    def layer_norm(y, g, b):
        # residual already folded in by caller; biased variance + eps, like torch.LayerNorm
        mu = jnp.mean(y, axis=-1, keepdims=True)
        yc = y - mu
        var = jnp.mean(yc * yc, axis=-1, keepdims=True)
        return yc * jax.lax.rsqrt(var + eps) * g + b

    for l in range(num_layers):
        # -------- self-attention block (post-LN), per-head, all in VMEM --------
        attn = jnp.zeros((B * S, E), jnp.float32)
        for hd in range(H):
            qh = (jnp.dot(h, qw[l, hd], preferred_element_type=jnp.float32)
                  + qb[l, hd]).reshape(B, S, Dh)
            kh = (jnp.dot(h, kw[l, hd], preferred_element_type=jnp.float32)
                  + kb[l, hd]).reshape(B, S, Dh)
            vh = (jnp.dot(h, vw[l, hd], preferred_element_type=jnp.float32)
                  + vb[l, hd]).reshape(B, S, Dh)

            s = jnp.einsum('bqd,bkd->bqk', qh, kh,
                           preferred_element_type=jnp.float32) * scale          # (B, S, S)
            m = jnp.max(s, axis=-1, keepdims=True)
            p = jnp.exp(s - m)
            p = p * pl.reciprocal(jnp.sum(p, axis=-1, keepdims=True), approx=True)
            oh = jnp.einsum('bqk,bkd->bqd', p, vh,
                            preferred_element_type=jnp.float32).reshape(B * S, Dh)
            # out_proj applied per head (== concat-heads then project)
            attn = attn + jnp.dot(oh, ow[l, hd], preferred_element_type=jnp.float32)
        attn = attn + ob[l]

        # residual + LayerNorm fused
        h1 = layer_norm(h + attn, n1g[l], n1b[l])

        # -------- feed-forward block (post-LN); hidden (rows x dim_ff) stays in VMEM --------
        ff = jnp.maximum(
            jnp.dot(h1, l1w[l], preferred_element_type=jnp.float32) + l1b[l], 0.0)
        ff = jnp.dot(ff, l2w[l], preferred_element_type=jnp.float32) + l2b[l]
        h = layer_norm(h1 + ff, n2g[l], n2b[l])

    # ---- x[0] (seq position 0 of every batch) -> output_fc -> sigmoid ----
    seq0 = h.reshape(B, S, E)[:, 0, :]                                           # (B, E)
    out = jnp.dot(seq0, ofc_w[...], preferred_element_type=jnp.float32) + ofc_b[...]
    o_ref[...] = jax.nn.sigmoid(out).astype(o_ref.dtype)


# --------------------------- parameter construction -------------------------

def _uniform(key, shape, bound):
    return jax.random.uniform(key, shape, jnp.float32, -bound, bound)


def init_params(key, input_size, output_size, d_model, num_layers, dim_ff):
    E, F, L = d_model, dim_ff, num_layers
    keys = jax.random.split(key, 12)
    b_in = 1.0 / float(input_size) ** 0.5
    b_e = 1.0 / float(E) ** 0.5
    b_f = 1.0 / float(F) ** 0.5
    # weights stored as (in, out) so the kernel does y = x @ W + b
    return {
        "input_fc_w": _uniform(keys[0], (input_size, E), b_in),
        "input_fc_b": _uniform(keys[1], (1, E), b_in),
        "output_fc_w": _uniform(keys[2], (E, output_size), b_e),
        "output_fc_b": _uniform(keys[3], (1, output_size), b_e),
        # per-layer encoder weights stacked along a leading L axis
        "in_proj_w": _uniform(keys[4], (L, E, 3 * E), b_e),
        "in_proj_b": _uniform(keys[5], (L, 1, 3 * E), b_e),
        "out_proj_w": _uniform(keys[6], (L, E, E), b_e),
        "out_proj_b": _uniform(keys[7], (L, 1, E), b_e),
        "linear1_w": _uniform(keys[8], (L, E, F), b_e),
        "linear1_b": _uniform(keys[9], (L, 1, F), b_e),
        "linear2_w": _uniform(keys[10], (L, F, E), b_f),
        "linear2_b": _uniform(keys[11], (L, 1, E), b_f),
        "norm1_g": jnp.ones((L, 1, E), jnp.float32),
        "norm1_b": jnp.zeros((L, 1, E), jnp.float32),
        "norm2_g": jnp.ones((L, 1, E), jnp.float32),
        "norm2_b": jnp.zeros((L, 1, E), jnp.float32),
    }


# --------------------------------- forward ----------------------------------

def transformer_forward(x, params, *, nhead):
    B, S, _ = x.shape
    L, E, _ = params["in_proj_w"].shape
    H = nhead
    Dh = E // H
    O = params["output_fc_w"].shape[1]

    # ----- kernel-friendly per-head weight layout (pure layout plumbing, outside kernel) -----
    ipw, ipb = params["in_proj_w"], params["in_proj_b"]          # (L,E,3E), (L,1,3E)

    def split_w(w):   # (L, E, E) -> (L, H, E, Dh)
        return w.reshape(L, E, H, Dh).transpose(0, 2, 1, 3)

    def split_b(b):   # (L, 1, E) -> (L, H, 1, Dh)
        return b.reshape(L, H, Dh)[:, :, None, :]

    qw = split_w(ipw[:, :, 0 * E:1 * E])
    kw = split_w(ipw[:, :, 1 * E:2 * E])
    vw = split_w(ipw[:, :, 2 * E:3 * E])
    qb = split_b(ipb[:, :, 0 * E:1 * E])
    kb = split_b(ipb[:, :, 1 * E:2 * E])
    vb = split_b(ipb[:, :, 2 * E:3 * E])
    ow = params["out_proj_w"].reshape(L, H, Dh, E)               # rows grouped by head
    ob = params["out_proj_b"]                                    # (L, 1, E)

    vmem = pl.BlockSpec(memory_space=pltpu.MemorySpace.VMEM)
    kernel = functools.partial(_fused_transformer_kernel,
                               nhead=nhead, num_layers=L, eps=1e-5)
    return pl.pallas_call(
        kernel,
        out_shape=jax.ShapeDtypeStruct((B, O), jnp.float32),
        in_specs=[vmem] * 21,
        out_specs=vmem,
        compiler_params=pltpu.CompilerParams(vmem_limit_bytes=64 * 1024 * 1024),
    )(x.astype(jnp.float32),
      params["input_fc_w"], params["input_fc_b"],
      params["output_fc_w"], params["output_fc_b"],
      qw, qb, kw, kb, vw, vb, ow, ob,
      params["linear1_w"], params["linear1_b"],
      params["linear2_w"], params["linear2_b"],
      params["norm1_g"], params["norm1_b"],
      params["norm2_g"], params["norm2_b"])


# ----------------------------------- main ------------------------------------

if __name__ == "__main__":
    B, S = 2, 8
    input_size, output_size = 16, 4
    d_model, nhead, num_layers = 32, 4, 2
    dim_ff = 2048  # nn.TransformerEncoderLayer default dim_feedforward

    key = jax.random.PRNGKey(0)
    pkey, xkey = jax.random.split(key)
    params = init_params(pkey, input_size, output_size, d_model, num_layers, dim_ff)
    x = jax.random.normal(xkey, (B, S, input_size), jnp.float32)

    fwd = jax.jit(functools.partial(transformer_forward, nhead=nhead))
    out = fwd(x, params)
    jax.block_until_ready(out)

    assert out.shape == (B, output_size), out.shape
    assert bool(jnp.all(jnp.isfinite(out)))
    assert bool(jnp.all((out >= 0.0) & (out <= 1.0)))
    print("KERNEL_OK")
</pallas_src>

<mosaic_0001>
module attributes {stable_mosaic.version = 11 : i64} {
  func.func @_fused_transformer_kernel(%arg0: memref<2x8x16xf32, #tpu.memory_space<vmem>>, %arg1: memref<16x32xf32, #tpu.memory_space<vmem>>, %arg2: memref<1x32xf32, #tpu.memory_space<vmem>>, %arg3: memref<32x4xf32, #tpu.memory_space<vmem>>, %arg4: memref<1x4xf32, #tpu.memory_space<vmem>>, %arg5: memref<2x4x32x8xf32, #tpu.memory_space<vmem>>, %arg6: memref<2x4x1x8xf32, #tpu.memory_space<vmem>>, %arg7: memref<2x4x32x8xf32, #tpu.memory_space<vmem>>, %arg8: memref<2x4x1x8xf32, #tpu.memory_space<vmem>>, %arg9: memref<2x4x32x8xf32, #tpu.memory_space<vmem>>, %arg10: memref<2x4x1x8xf32, #tpu.memory_space<vmem>>, %arg11: memref<2x4x8x32xf32, #tpu.memory_space<vmem>>, %arg12: memref<2x1x32xf32, #tpu.memory_space<vmem>>, %arg13: memref<2x32x2048xf32, #tpu.memory_space<vmem>>, %arg14: memref<2x1x2048xf32, #tpu.memory_space<vmem>>, %arg15: memref<2x2048x32xf32, #tpu.memory_space<vmem>>, %arg16: memref<2x1x32xf32, #tpu.memory_space<vmem>>, %arg17: memref<2x1x32xf32, #tpu.memory_space<vmem>>, %arg18: memref<2x1x32xf32, #tpu.memory_space<vmem>>, %arg19: memref<2x1x32xf32, #tpu.memory_space<vmem>>, %arg20: memref<2x1x32xf32, #tpu.memory_space<vmem>>, %arg21: memref<2x4xf32, #tpu.memory_space<vmem>>) attributes {dimension_semantics = [], scalar_prefetch = 0 : i64, scratch_operands = 0 : i64, tpu.core_type = #tpu.core_type<tc>} {
    %c0 = arith.constant 0 : index
    %c0_0 = arith.constant 0 : index
    %c0_1 = arith.constant 0 : index
    %0 = vector.load %arg0[%c0, %c0_0, %c0_1] : memref<2x8x16xf32, #tpu.memory_space<vmem>>, vector<2x8x16xf32>
    %1 = vector.shape_cast %0 : vector<2x8x16xf32> to vector<16x16xf32>
    %c0_2 = arith.constant 0 : index
    %c0_3 = arith.constant 0 : index
    %2 = vector.load %arg1[%c0_2, %c0_3] : memref<16x32xf32, #tpu.memory_space<vmem>>, vector<16x32xf32>
    %cst = arith.constant dense<0.000000e+00> : vector<16x32xf32>
    %3 = tpu.matmul %1, %2, %cst {dimension_numbers = #tpu.dot_dimension_numbers<[1], [0], [0], [1], [0, 0, 1, 1], [], []>} : vector<16x16xf32>, vector<16x32xf32>, vector<16x32xf32> -> vector<16x32xf32>
    %c0_4 = arith.constant 0 : index
    %c0_5 = arith.constant 0 : index
    %4 = vector.load %arg2[%c0_4, %c0_5] : memref<1x32xf32, #tpu.memory_space<vmem>>, vector<1x32xf32>
    %5 = vector.broadcast %4 : vector<1x32xf32> to vector<16x32xf32>
    %6 = arith.addf %3, %5 : vector<16x32xf32>
    %cst_6 = arith.constant 0.000000e+00 : f32
    %7 = vector.broadcast %cst_6 : f32 to vector<16x32xf32>
    %c0_7 = arith.constant 0 : index
    %c0_8 = arith.constant 0 : index
    %c0_9 = arith.constant 0 : index
    %c0_10 = arith.constant 0 : index
    %8 = vector.load %arg5[%c0_7, %c0_8, %c0_9, %c0_10] : memref<2x4x32x8xf32, #tpu.memory_space<vmem>>, vector<1x1x32x8xf32>
    %9 = vector.shape_cast %8 : vector<1x1x32x8xf32> to vector<32x8xf32>
    %cst_11 = arith.constant dense<0.000000e+00> : vector<16x8xf32>
    %10 = tpu.matmul %6, %9, %cst_11 {dimension_numbers = #tpu.dot_dimension_numbers<[1], [0], [0], [1], [0, 0, 1, 1], [], []>} : vector<16x32xf32>, vector<32x8xf32>, vector<16x8xf32> -> vector<16x8xf32>
    %c0_12 = arith.constant 0 : index
    %c0_13 = arith.constant 0 : index
    %c0_14 = arith.constant 0 : index
    %c0_15 = arith.constant 0 : index
    %11 = vector.load %arg6[%c0_12, %c0_13, %c0_14, %c0_15] : memref<2x4x1x8xf32, #tpu.memory_space<vmem>>, vector<1x1x1x8xf32>
    %12 = vector.shape_cast %11 : vector<1x1x1x8xf32> to vector<1x8xf32>
    %13 = vector.broadcast %12 : vector<1x8xf32> to vector<16x8xf32>
    %14 = arith.addf %10, %13 : vector<16x8xf32>
    %15 = vector.shape_cast %14 : vector<16x8xf32> to vector<2x8x8xf32>
    %c0_16 = arith.constant 0 : index
    %c0_17 = arith.constant 0 : index
    %c0_18 = arith.constant 0 : index
    %c0_19 = arith.constant 0 : index
    %16 = vector.load %arg7[%c0_16, %c0_17, %c0_18, %c0_19] : memref<2x4x32x8xf32, #tpu.memory_space<vmem>>, vector<1x1x32x8xf32>
    %17 = vector.shape_cast %16 : vector<1x1x32x8xf32> to vector<32x8xf32>
    %cst_20 = arith.constant dense<0.000000e+00> : vector<16x8xf32>
    %18 = tpu.matmul %6, %17, %cst_20 {dimension_numbers = #tpu.dot_dimension_numbers<[1], [0], [0], [1], [0, 0, 1, 1], [], []>} : vector<16x32xf32>, vector<32x8xf32>, vector<16x8xf32> -> vector<16x8xf32>
    %c0_21 = arith.constant 0 : index
    %c0_22 = arith.constant 0 : index
    %c0_23 = arith.constant 0 : index
    %c0_24 = arith.constant 0 : index
    %19 = vector.load %arg8[%c0_21, %c0_22, %c0_23, %c0_24] : memref<2x4x1x8xf32, #tpu.memory_space<vmem>>, vector<1x1x1x8xf32>
    %20 = vector.shape_cast %19 : vector<1x1x1x8xf32> to vector<1x8xf32>
    %21 = vector.broadcast %20 : vector<1x8xf32> to vector<16x8xf32>
    %22 = arith.addf %18, %21 : vector<16x8xf32>
    %23 = vector.shape_cast %22 : vector<16x8xf32> to vector<2x8x8xf32>
    %c0_25 = arith.constant 0 : index
    %c0_26 = arith.constant 0 : index
    %c0_27 = arith.constant 0 : index
    %c0_28 = arith.constant 0 : index
    %24 = vector.load %arg9[%c0_25, %c0_26, %c0_27, %c0_28] : memref<2x4x32x8xf32, #tpu.memory_space<vmem>>, vector<1x1x32x8xf32>
    %25 = vector.shape_cast %24 : vector<1x1x32x8xf32> to vector<32x8xf32>
    %cst_29 = arith.constant dense<0.000000e+00> : vector<16x8xf32>
    %26 = tpu.matmul %6, %25, %cst_29 {dimension_numbers = #tpu.dot_dimension_numbers<[1], [0], [0], [1], [0, 0, 1, 1], [], []>} : vector<16x32xf32>, vector<32x8xf32>, vector<16x8xf32> -> vector<16x8xf32>
    %c0_30 = arith.constant 0 : index
    %c0_31 = arith.constant 0 : index
    %c0_32 = arith.constant 0 : index
    %c0_33 = arith.constant 0 : index
    %27 = vector.load %arg10[%c0_30, %c0_31, %c0_32, %c0_33] : memref<2x4x1x8xf32, #tpu.memory_space<vmem>>, vector<1x1x1x8xf32>
    %28 = vector.shape_cast %27 : vector<1x1x1x8xf32> to vector<1x8xf32>
    %29 = vector.broadcast %28 : vector<1x8xf32> to vector<16x8xf32>
    %30 = arith.addf %26, %29 : vector<16x8xf32>
    %31 = vector.shape_cast %30 : vector<16x8xf32> to vector<2x8x8xf32>
    "tpu.trace_start"() <{level = 10 : i32, message = "bqd,bkd->bqk"}> : () -> ()
    %cst_34 = arith.constant dense<0.000000e+00> : vector<2x8x8xf32>
    %32 = tpu.matmul %15, %23, %cst_34 {dimension_numbers = #tpu.dot_dimension_numbers<[2], [2], [1], [1], [0, 0, 0, 1, 1, 1], [0], [0]>} : vector<2x8x8xf32>, vector<2x8x8xf32>, vector<2x8x8xf32> -> vector<2x8x8xf32>
    "tpu.trace_stop"() : () -> ()
    %cst_35 = arith.constant 0.353553385 : f32
    %33 = vector.broadcast %cst_35 : f32 to vector<2x8x8xf32>
    %34 = arith.mulf %32, %33 : vector<2x8x8xf32>
    %cst_36 = arith.constant dense<0xFF800000> : vector<2x8xf32>
    %35 = vector.multi_reduction <maximumf>, %34, %cst_36 [2] : vector<2x8x8xf32> to vector<2x8xf32>
    %36 = vector.shape_cast %35 : vector<2x8xf32> to vector<2x8x1xf32>
    %37 = vector.broadcast %36 : vector<2x8x1xf32> to vector<2x8x8xf32>
    %38 = arith.subf %34, %37 : vector<2x8x8xf32>
    %39 = math.exp %38 : vector<2x8x8xf32>
    %cst_37 = arith.constant dense<0.000000e+00> : vector<2x8xf32>
    %40 = vector.multi_reduction <add>, %39, %cst_37 [2] : vector<2x8x8xf32> to vector<2x8xf32>
    %41 = vector.shape_cast %40 : vector<2x8xf32> to vector<2x8x1xf32>
    %42 = tpu.reciprocal %41 {approx = true} : vector<2x8x1xf32> -> vector<2x8x1xf32>
    %43 = vector.broadcast %42 : vector<2x8x1xf32> to vector<2x8x8xf32>
    %44 = arith.mulf %39, %43 : vector<2x8x8xf32>
    "tpu.trace_start"() <{level = 10 : i32, message = "bqk,bkd->bqd"}> : () -> ()
    %cst_38 = arith.constant dense<0.000000e+00> : vector<2x8x8xf32>
    %45 = tpu.matmul %44, %31, %cst_38 {dimension_numbers = #tpu.dot_dimension_numbers<[2], [1], [1], [2], [0, 0, 0, 1, 1, 2], [0], [0]>} : vector<2x8x8xf32>, vector<2x8x8xf32>, vector<2x8x8xf32> -> vector<2x8x8xf32>
    "tpu.trace_stop"() : () -> ()
    %46 = vector.shape_cast %45 : vector<2x8x8xf32> to vector<16x8xf32>
    %c0_39 = arith.constant 0 : index
    %c0_40 = arith.constant 0 : index
    %c0_41 = arith.constant 0 : index
    %c0_42 = arith.constant 0 : index
    %47 = vector.load %arg11[%c0_39, %c0_40, %c0_41, %c0_42] : memref<2x4x8x32xf32, #tpu.memory_space<vmem>>, vector<1x1x8x32xf32>
    %48 = vector.shape_cast %47 : vector<1x1x8x32xf32> to vector<8x32xf32>
    %cst_43 = arith.constant dense<0.000000e+00> : vector<16x32xf32>
    %49 = tpu.matmul %46, %48, %cst_43 {dimension_numbers = #tpu.dot_dimension_numbers<[1], [0], [0], [1], [0, 0, 1, 1], [], []>} : vector<16x8xf32>, vector<8x32xf32>, vector<16x32xf32> -> vector<16x32xf32>
    %50 = arith.addf %7, %49 : vector<16x32xf32>
    %c0_44 = arith.constant 0 : index
    %c1 = arith.constant 1 : index
    %c0_45 = arith.constant 0 : index
    %c0_46 = arith.constant 0 : index
    %51 = vector.load %arg5[%c0_44, %c1, %c0_45, %c0_46] : memref<2x4x32x8xf32, #tpu.memory_space<vmem>>, vector<1x1x32x8xf32>
    %52 = vector.shape_cast %51 : vector<1x1x32x8xf32> to vector<32x8xf32>
    %cst_47 = arith.constant dense<0.000000e+00> : vector<16x8xf32>
    %53 = tpu.matmul %6, %52, %cst_47 {dimension_numbers = #tpu.dot_dimension_numbers<[1], [0], [0], [1], [0, 0, 1, 1], [], []>} : vector<16x32xf32>, vector<32x8xf32>, vector<16x8xf32> -> vector<16x8xf32>
    %c0_48 = arith.constant 0 : index
    %c1_49 = arith.constant 1 : index
    %c0_50 = arith.constant 0 : index
    %c0_51 = arith.constant 0 : index
    %54 = vector.load %arg6[%c0_48, %c1_49, %c0_50, %c0_51] : memref<2x4x1x8xf32, #tpu.memory_space<vmem>>, vector<1x1x1x8xf32>
    %55 = vector.shape_cast %54 : vector<1x1x1x8xf32> to vector<1x8xf32>
    %56 = vector.broadcast %55 : vector<1x8xf32> to vector<16x8xf32>
    %57 = arith.addf %53, %56 : vector<16x8xf32>
    %58 = vector.shape_cast %57 : vector<16x8xf32> to vector<2x8x8xf32>
    %c0_52 = arith.constant 0 : index
    %c1_53 = arith.constant 1 : index
    %c0_54 = arith.constant 0 : index
    %c0_55 = arith.constant 0 : index
    %59 = vector.load %arg7[%c0_52, %c1_53, %c0_54, %c0_55] : memref<2x4x32x8xf32, #tpu.memory_space<vmem>>, vector<1x1x32x8xf32>
    %60 = vector.shape_cast %59 : vector<1x1x32x8xf32> to vector<32x8xf32>
    %cst_56 = arith.constant dense<0.000000e+00> : vector<16x8xf32>
    %61 = tpu.matmul %6, %60, %cst_56 {dimension_numbers = #tpu.dot_dimension_numbers<[1], [0], [0], [1], [0, 0, 1, 1], [], []>} : vector<16x32xf32>, vector<32x8xf32>, vector<16x8xf32> -> vector<16x8xf32>
    %c0_57 = arith.constant 0 : index
    %c1_58 = arith.constant 1 : index
    %c0_59 = arith.constant 0 : index
    %c0_60 = arith.constant 0 : index
    %62 = vector.load %arg8[%c0_57, %c1_58, %c0_59, %c0_60] : memref<2x4x1x8xf32, #tpu.memory_space<vmem>>, vector<1x1x1x8xf32>
    %63 = vector.shape_cast %62 : vector<1x1x1x8xf32> to vector<1x8xf32>
    %64 = vector.broadcast %63 : vector<1x8xf32> to vector<16x8xf32>
    %65 = arith.addf %61, %64 : vector<16x8xf32>
    %66 = vector.shape_cast %65 : vector<16x8xf32> to vector<2x8x8xf32>
    %c0_61 = arith.constant 0 : index
    %c1_62 = arith.constant 1 : index
    %c0_63 = arith.constant 0 : index
    %c0_64 = arith.constant 0 : index
    %67 = vector.load %arg9[%c0_61, %c1_62, %c0_63, %c0_64] : memref<2x4x32x8xf32, #tpu.memory_space<vmem>>, vector<1x1x32x8xf32>
    %68 = vector.shape_cast %67 : vector<1x1x32x8xf32> to vector<32x8xf32>
    %cst_65 = arith.constant dense<0.000000e+00> : vector<16x8xf32>
    %69 = tpu.matmul %6, %68, %cst_65 {dimension_numbers = #tpu.dot_dimension_numbers<[1], [0], [0], [1], [0, 0, 1, 1], [], []>} : vector<16x32xf32>, vector<32x8xf32>, vector<16x8xf32> -> vector<16x8xf32>
    %c0_66 = arith.constant 0 : index
    %c1_67 = arith.constant 1 : index
    %c0_68 = arith.constant 0 : index
    %c0_69 = arith.constant 0 : index
    %70 = vector.load %arg10[%c0_66, %c1_67, %c0_68, %c0_69] : memref<2x4x1x8xf32, #tpu.memory_space<vmem>>, vector<1x1x1x8xf32>
    %71 = vector.shape_cast %70 : vector<1x1x1x8xf32> to vector<1x8xf32>
    %72 = vector.broadcast %71 : vector<1x8xf32> to vector<16x8xf32>
    %73 = arith.addf %69, %72 : vector<16x8xf32>
    %74 = vector.shape_cast %73 : vector<16x8xf32> to vector<2x8x8xf32>
    "tpu.trace_start"() <{level = 10 : i32, message = "bqd,bkd->bqk"}> : () -> ()
    %cst_70 = arith.constant dense<0.000000e+00> : vector<2x8x8xf32>
    %75 = tpu.matmul %58, %66, %cst_70 {dimension_numbers = #tpu.dot_dimension_numbers<[2], [2], [1], [1], [0, 0, 0, 1, 1, 1], [0], [0]>} : vector<2x8x8xf32>, vector<2x8x8xf32>, vector<2x8x8xf32> -> vector<2x8x8xf32>
    "tpu.trace_stop"() : () -> ()
    %cst_71 = arith.constant 0.353553385 : f32
    %76 = vector.broadcast %cst_71 : f32 to vector<2x8x8xf32>
    %77 = arith.mulf %75, %76 : vector<2x8x8xf32>
    %cst_72 = arith.constant dense<0xFF800000> : vector<2x8xf32>
    %78 = vector.multi_reduction <maximumf>, %77, %cst_72 [2] : vector<2x8x8xf32> to vector<2x8xf32>
    %79 = vector.shape_cast %78 : vector<2x8xf32> to vector<2x8x1xf32>
    %80 = vector.broadcast %79 : vector<2x8x1xf32> to vector<2x8x8xf32>
    %81 = arith.subf %77, %80 : vector<2x8x8xf32>
    %82 = math.exp %81 : vector<2x8x8xf32>
    %cst_73 = arith.constant dense<0.000000e+00> : vector<2x8xf32>
    %83 = vector.multi_reduction <add>, %82, %cst_73 [2] : vector<2x8x8xf32> to vector<2x8xf32>
    %84 = vector.shape_cast %83 : vector<2x8xf32> to vector<2x8x1xf32>
    %85 = tpu.reciprocal %84 {approx = true} : vector<2x8x1xf32> -> vector<2x8x1xf32>
    %86 = vector.broadcast %85 : vector<2x8x1xf32> to vector<2x8x8xf32>
    %87 = arith.mulf %82, %86 : vector<2x8x8xf32>
    "tpu.trace_start"() <{level = 10 : i32, message = "bqk,bkd->bqd"}> : () -> ()
    %cst_74 = arith.constant dense<0.000000e+00> : vector<2x8x8xf32>
    %88 = tpu.matmul %87, %74, %cst_74 {dimension_numbers = #tpu.dot_dimension_numbers<[2], [1], [1], [2], [0, 0, 0, 1, 1, 2], [0], [0]>} : vector<2x8x8xf32>, vector<2x8x8xf32>, vector<2x8x8xf32> -> vector<2x8x8xf32>
    "tpu.trace_stop"() : () -> ()
    %89 = vector.shape_cast %88 : vector<2x8x8xf32> to vector<16x8xf32>
    %c0_75 = arith.constant 0 : index
    %c1_76 = arith.constant 1 : index
    %c0_77 = arith.constant 0 : index
    %c0_78 = arith.constant 0 : index
    %90 = vector.load %arg11[%c0_75, %c1_76, %c0_77, %c0_78] : memref<2x4x8x32xf32, #tpu.memory_space<vmem>>, vector<1x1x8x32xf32>
    %91 = vector.shape_cast %90 : vector<1x1x8x32xf32> to vector<8x32xf32>
    %cst_79 = arith.constant dense<0.000000e+00> : vector<16x32xf32>
    %92 = tpu.matmul %89, %91, %cst_79 {dimension_numbers = #tpu.dot_dimension_numbers<[1], [0], [0], [1], [0, 0, 1, 1], [], []>} : vector<16x8xf32>, vector<8x32xf32>, vector<16x32xf32> -> vector<16x32xf32>
    %93 = arith.addf %50, %92 : vector<16x32xf32>
    %c0_80 = arith.constant 0 : index
    %c2 = arith.constant 2 : index
    %c0_81 = arith.constant 0 : index
    %c0_82 = arith.constant 0 : index
    %94 = vector.load %arg5[%c0_80, %c2, %c0_81, %c0_82] : memref<2x4x32x8xf32, #tpu.memory_space<vmem>>, vector<1x1x32x8xf32>
    %95 = vector.shape_cast %94 : vector<1x1x32x8xf32> to vector<32x8xf32>
    %cst_83 = arith.constant dense<0.000000e+00> : vector<16x8xf32>
    %96 = tpu.matmul %6, %95, %cst_83 {dimension_numbers = #tpu.dot_dimension_numbers<[1], [0], [0], [1], [0, 0, 1, 1], [], []>} : vector<16x32xf32>, vector<32x8xf32>, vector<16x8xf32> -> vector<16x8xf32>
    %c0_84 = arith.constant 0 : index
    %c2_85 = arith.constant 2 : index
    %c0_86 = arith.constant 0 : index
    %c0_87 = arith.constant 0 : index
    %97 = vector.load %arg6[%c0_84, %c2_85, %c0_86, %c0_87] : memref<2x4x1x8xf32, #tpu.memory_space<vmem>>, vector<1x1x1x8xf32>
    %98 = vector.shape_cast %97 : vector<1x1x1x8xf32> to vector<1x8xf32>
    %99 = vector.broadcast %98 : vector<1x8xf32> to vector<16x8xf32>
    %100 = arith.addf %96, %99 : vector<16x8xf32>
    %101 = vector.shape_cast %100 : vector<16x8xf32> to vector<2x8x8xf32>
    %c0_88 = arith.constant 0 : index
    %c2_89 = arith.constant 2 : index
    %c0_90 = arith.constant 0 : index
    %c0_91 = arith.constant 0 : index
    %102 = vector.load %arg7[%c0_88, %c2_89, %c0_90, %c0_91] : memref<2x4x32x8xf32, #tpu.memory_space<vmem>>, vector<1x1x32x8xf32>
    %103 = vector.shape_cast %102 : vector<1x1x32x8xf32> to vector<32x8xf32>
    %cst_92 = arith.constant dense<0.000000e+00> : vector<16x8xf32>
    %104 = tpu.matmul %6, %103, %cst_92 {dimension_numbers = #tpu.dot_dimension_numbers<[1], [0], [0], [1], [0, 0, 1, 1], [], []>} : vector<16x32xf32>, vector<32x8xf32>, vector<16x8xf32> -> vector<16x8xf32>
    %c0_93 = arith.constant 0 : index
    %c2_94 = arith.constant 2 : index
    %c0_95 = arith.constant 0 : index
    %c0_96 = arith.constant 0 : index
    %105 = vector.load %arg8[%c0_93, %c2_94, %c0_95, %c0_96] : memref<2x4x1x8xf32, #tpu.memory_space<vmem>>, vector<1x1x1x8xf32>
    %106 = vector.shape_cast %105 : vector<1x1x1x8xf32> to vector<1x8xf32>
    %107 = vector.broadcast %106 : vector<1x8xf32> to vector<16x8xf32>
    %108 = arith.addf %104, %107 : vector<16x8xf32>
    %109 = vector.shape_cast %108 : vector<16x8xf32> to vector<2x8x8xf32>
    %c0_97 = arith.constant 0 : index
    %c2_98 = arith.constant 2 : index
    %c0_99 = arith.constant 0 : index
    %c0_100 = arith.constant 0 : index
    %110 = vector.load %arg9[%c0_97, %c2_98, %c0_99, %c0_100] : memref<2x4x32x8xf32, #tpu.memory_space<vmem>>, vector<1x1x32x8xf32>
    %111 = vector.shape_cast %110 : vector<1x1x32x8xf32> to vector<32x8xf32>
    %cst_101 = arith.constant dense<0.000000e+00> : vector<16x8xf32>
    %112 = tpu.matmul %6, %111, %cst_101 {dimension_numbers = #tpu.dot_dimension_numbers<[1], [0], [0], [1], [0, 0, 1, 1], [], []>} : vector<16x32xf32>, vector<32x8xf32>, vector<16x8xf32> -> vector<16x8xf32>
    %c0_102 = arith.constant 0 : index
    %c2_103 = arith.constant 2 : index
    %c0_104 = arith.constant 0 : index
    %c0_105 = arith.constant 0 : index
    %113 = vector.load %arg10[%c0_102, %c2_103, %c0_104, %c0_105] : memref<2x4x1x8xf32, #tpu.memory_space<vmem>>, vector<1x1x1x8xf32>
    %114 = vector.shape_cast %113 : vector<1x1x1x8xf32> to vector<1x8xf32>
    %115 = vector.broadcast %114 : vector<1x8xf32> to vector<16x8xf32>
    %116 = arith.addf %112, %115 : vector<16x8xf32>
    %117 = vector.shape_cast %116 : vector<16x8xf32> to vector<2x8x8xf32>
    "tpu.trace_start"() <{level = 10 : i32, message = "bqd,bkd->bqk"}> : () -> ()
    %cst_106 = arith.constant dense<0.000000e+00> : vector<2x8x8xf32>
    %118 = tpu.matmul %101, %109, %cst_106 {dimension_numbers = #tpu.dot_dimension_numbers<[2], [2], [1], [1], [0, 0, 0, 1, 1, 1], [0], [0]>} : vector<2x8x8xf32>, vector<2x8x8xf32>, vector<2x8x8xf32> -> vector<2x8x8xf32>
    "tpu.trace_stop"() : () -> ()
    %cst_107 = arith.constant 0.353553385 : f32
    %119 = vector.broadcast %cst_107 : f32 to vector<2x8x8xf32>
    %120 = arith.mulf %118, %119 : vector<2x8x8xf32>
    %cst_108 = arith.constant dense<0xFF800000> : vector<2x8xf32>
    %121 = vector.multi_reduction <maximumf>, %120, %cst_108 [2] : vector<2x8x8xf32> to vector<2x8xf32>
    %122 = vector.shape_cast %121 : vector<2x8xf32> to vector<2x8x1xf32>
    %123 = vector.broadcast %122 : vector<2x8x1xf32> to vector<2x8x8xf32>
    %124 = arith.subf %120, %123 : vector<2x8x8xf32>
    %125 = math.exp %124 : vector<2x8x8xf32>
    %cst_109 = arith.constant dense<0.000000e+00> : vector<2x8xf32>
    %126 = vector.multi_reduction <add>, %125, %cst_109 [2] : vector<2x8x8xf32> to vector<2x8xf32>
    %127 = vector.shape_cast %126 : vector<2x8xf32> to vector<2x8x1xf32>
    %128 = tpu.reciprocal %127 {approx = true} : vector<2x8x1xf32> -> vector<2x8x1xf32>
    %129 = vector.broadcast %128 : vector<2x8x1xf32> to vector<2x8x8xf32>
    %130 = arith.mulf %125, %129 : vector<2x8x8xf32>
    "tpu.trace_start"() <{level = 10 : i32, message = "bqk,bkd->bqd"}> : () -> ()
    %cst_110 = arith.constant dense<0.000000e+00> : vector<2x8x8xf32>
    %131 = tpu.matmul %130, %117, %cst_110 {dimension_numbers = #tpu.dot_dimension_numbers<[2], [1], [1], [2], [0, 0, 0, 1, 1, 2], [0], [0]>} : vector<2x8x8xf32>, vector<2x8x8xf32>, vector<2x8x8xf32> -> vector<2x8x8xf32>
    "tpu.trace_stop"() : () -> ()
    %132 = vector.shape_cast %131 : vector<2x8x8xf32> to vector<16x8xf32>
    %c0_111 = arith.constant 0 : index
    %c2_112 = arith.constant 2 : index
    %c0_113 = arith.constant 0 : index
    %c0_114 = arith.constant 0 : index
    %133 = vector.load %arg11[%c0_111, %c2_112, %c0_113, %c0_114] : memref<2x4x8x32xf32, #tpu.memory_space<vmem>>, vector<1x1x8x32xf32>
    %134 = vector.shape_cast %133 : vector<1x1x8x32xf32> to vector<8x32xf32>
    %cst_115 = arith.constant dense<0.000000e+00> : vector<16x32xf32>
    %135 = tpu.matmul %132, %134, %cst_115 {dimension_numbers = #tpu.dot_dimension_numbers<[1], [0], [0], [1], [0, 0, 1, 1], [], []>} : vector<16x8xf32>, vector<8x32xf32>, vector<16x32xf32> -> vector<16x32xf32>
    %136 = arith.addf %93, %135 : vector<16x32xf32>
    %c0_116 = arith.constant 0 : index
    %c3 = arith.constant 3 : index
    %c0_117 = arith.constant 0 : index
    %c0_118 = arith.constant 0 : index
    %137 = vector.load %arg5[%c0_116, %c3, %c0_117, %c0_118] : memref<2x4x32x8xf32, #tpu.memory_space<vmem>>, vector<1x1x32x8xf32>
    %138 = vector.shape_cast %137 : vector<1x1x32x8xf32> to vector<32x8xf32>
    %cst_119 = arith.constant dense<0.000000e+00> : vector<16x8xf32>
    %139 = tpu.matmul %6, %138, %cst_119 {dimension_numbers = #tpu.dot_dimension_numbers<[1], [0], [0], [1], [0, 0, 1, 1], [], []>} : vector<16x32xf32>, vector<32x8xf32>, vector<16x8xf32> -> vector<16x8xf32>
    %c0_120 = arith.constant 0 : index
    %c3_121 = arith.constant 3 : index
    %c0_122 = arith.constant 0 : index
    %c0_123 = arith.constant 0 : index
    %140 = vector.load %arg6[%c0_120, %c3_121, %c0_122, %c0_123] : memref<2x4x1x8xf32, #tpu.memory_space<vmem>>, vector<1x1x1x8xf32>
    %141 = vector.shape_cast %140 : vector<1x1x1x8xf32> to vector<1x8xf32>
    %142 = vector.broadcast %141 : vector<1x8xf32> to vector<16x8xf32>
    %143 = arith.addf %139, %142 : vector<16x8xf32>
    %144 = vector.shape_cast %143 : vector<16x8xf32> to vector<2x8x8xf32>
    %c0_124 = arith.constant 0 : index
    %c3_125 = arith.constant 3 : index
    %c0_126 = arith.constant 0 : index
    %c0_127 = arith.constant 0 : index
    %145 = vector.load %arg7[%c0_124, %c3_125, %c0_126, %c0_127] : memref<2x4x32x8xf32, #tpu.memory_space<vmem>>, vector<1x1x32x8xf32>
    %146 = vector.shape_cast %145 : vector<1x1x32x8xf32> to vector<32x8xf32>
    %cst_128 = arith.constant dense<0.000000e+00> : vector<16x8xf32>
    %147 = tpu.matmul %6, %146, %cst_128 {dimension_numbers = #tpu.dot_dimension_numbers<[1], [0], [0], [1], [0, 0, 1, 1], [], []>} : vector<16x32xf32>, vector<32x8xf32>, vector<16x8xf32> -> vector<16x8xf32>
    %c0_129 = arith.constant 0 : index
    %c3_130 = arith.constant 3 : index
    %c0_131 = arith.constant 0 : index
    %c0_132 = arith.constant 0 : index
    %148 = vector.load %arg8[%c0_129, %c3_130, %c0_131, %c0_132] : memref<2x4x1x8xf32, #tpu.memory_space<vmem>>, vector<1x1x1x8xf32>
    %149 = vector.shape_cast %148 : vector<1x1x1x8xf32> to vector<1x8xf32>
    %150 = vector.broadcast %149 : vector<1x8xf32> to vector<16x8xf32>
    %151 = arith.addf %147, %150 : vector<16x8xf32>
    %152 = vector.shape_cast %151 : vector<16x8xf32> to vector<2x8x8xf32>
    %c0_133 = arith.constant 0 : index
    %c3_134 = arith.constant 3 : index
    %c0_135 = arith.constant 0 : index
    %c0_136 = arith.constant 0 : index
    %153 = vector.load %arg9[%c0_133, %c3_134, %c0_135, %c0_136] : memref<2x4x32x8xf32, #tpu.memory_space<vmem>>, vector<1x1x32x8xf32>
    %154 = vector.shape_cast %153 : vector<1x1x32x8xf32> to vector<32x8xf32>
    %cst_137 = arith.constant dense<0.000000e+00> : vector<16x8xf32>
    %155 = tpu.matmul %6, %154, %cst_137 {dimension_numbers = #tpu.dot_dimension_numbers<[1], [0], [0], [1], [0, 0, 1, 1], [], []>} : vector<16x32xf32>, vector<32x8xf32>, vector<16x8xf32> -> vector<16x8xf32>
    %c0_138 = arith.constant 0 : index
    %c3_139 = arith.constant 3 : index
    %c0_140 = arith.constant 0 : index
    %c0_141 = arith.constant 0 : index
    %156 = vector.load %arg10[%c0_138, %c3_139, %c0_140, %c0_141] : memref<2x4x1x8xf32, #tpu.memory_space<vmem>>, vector<1x1x1x8xf32>
    %157 = vector.shape_cast %156 : vector<1x1x1x8xf32> to vector<1x8xf32>
    %158 = vector.broadcast %157 : vector<1x8xf32> to vector<16x8xf32>
    %159 = arith.addf %155, %158 : vector<16x8xf32>
    %160 = vector.shape_cast %159 : vector<16x8xf32> to vector<2x8x8xf32>
    "tpu.trace_start"() <{level = 10 : i32, message = "bqd,bkd->bqk"}> : () -> ()
    %cst_142 = arith.constant dense<0.000000e+00> : vector<2x8x8xf32>
    %161 = tpu.matmul %144, %152, %cst_142 {dimension_numbers = #tpu.dot_dimension_numbers<[2], [2], [1], [1], [0, 0, 0, 1, 1, 1], [0], [0]>} : vector<2x8x8xf32>, vector<2x8x8xf32>, vector<2x8x8xf32> -> vector<2x8x8xf32>
    "tpu.trace_stop"() : () -> ()
    %cst_143 = arith.constant 0.353553385 : f32
    %162 = vector.broadcast %cst_143 : f32 to vector<2x8x8xf32>
    %163 = arith.mulf %161, %162 : vector<2x8x8xf32>
    %cst_144 = arith.constant dense<0xFF800000> : vector<2x8xf32>
    %164 = vector.multi_reduction <maximumf>, %163, %cst_144 [2] : vector<2x8x8xf32> to vector<2x8xf32>
    %165 = vector.shape_cast %164 : vector<2x8xf32> to vector<2x8x1xf32>
    %166 = vector.broadcast %165 : vector<2x8x1xf32> to vector<2x8x8xf32>
    %167 = arith.subf %163, %166 : vector<2x8x8xf32>
    %168 = math.exp %167 : vector<2x8x8xf32>
    %cst_145 = arith.constant dense<0.000000e+00> : vector<2x8xf32>
    %169 = vector.multi_reduction <add>, %168, %cst_145 [2] : vector<2x8x8xf32> to vector<2x8xf32>
    %170 = vector.shape_cast %169 : vector<2x8xf32> to vector<2x8x1xf32>
    %171 = tpu.reciprocal %170 {approx = true} : vector<2x8x1xf32> -> vector<2x8x1xf32>
    %172 = vector.broadcast %171 : vector<2x8x1xf32> to vector<2x8x8xf32>
    %173 = arith.mulf %168, %172 : vector<2x8x8xf32>
    "tpu.trace_start"() <{level = 10 : i32, message = "bqk,bkd->bqd"}> : () -> ()
    %cst_146 = arith.constant dense<0.000000e+00> : vector<2x8x8xf32>
    %174 = tpu.matmul %173, %160, %cst_146 {dimension_numbers = #tpu.dot_dimension_numbers<[2], [1], [1], [2], [0, 0, 0, 1, 1, 2], [0], [0]>} : vector<2x8x8xf32>, vector<2x8x8xf32>, vector<2x8x8xf32> -> vector<2x8x8xf32>
    "tpu.trace_stop"() : () -> ()
    %175 = vector.shape_cast %174 : vector<2x8x8xf32> to vector<16x8xf32>
    %c0_147 = arith.constant 0 : index
    %c3_148 = arith.constant 3 : index
    %c0_149 = arith.constant 0 : index
    %c0_150 = arith.constant 0 : index
    %176 = vector.load %arg11[%c0_147, %c3_148, %c0_149, %c0_150] : memref<2x4x8x32xf32, #tpu.memory_space<vmem>>, vector<1x1x8x32xf32>
    %177 = vector.shape_cast %176 : vector<1x1x8x32xf32> to vector<8x32xf32>
    %cst_151 = arith.constant dense<0.000000e+00> : vector<16x32xf32>
    %178 = tpu.matmul %175, %177, %cst_151 {dimension_numbers = #tpu.dot_dimension_numbers<[1], [0], [0], [1], [0, 0, 1, 1], [], []>} : vector<16x8xf32>, vector<8x32xf32>, vector<16x32xf32> -> vector<16x32xf32>
    %179 = arith.addf %136, %178 : vector<16x32xf32>
    %c0_152 = arith.constant 0 : index
    %c0_153 = arith.constant 0 : index
    %c0_154 = arith.constant 0 : index
    %180 = vector.load %arg12[%c0_152, %c0_153, %c0_154] : memref<2x1x32xf32, #tpu.memory_space<vmem>>, vector<1x1x32xf32>
    %181 = vector.shape_cast %180 : vector<1x1x32xf32> to vector<1x32xf32>
    %182 = vector.broadcast %181 : vector<1x32xf32> to vector<16x32xf32>
    %183 = arith.addf %179, %182 : vector<16x32xf32>
    %184 = arith.addf %6, %183 : vector<16x32xf32>
    %c0_155 = arith.constant 0 : index
    %c0_156 = arith.constant 0 : index
    %c0_157 = arith.constant 0 : index
    %185 = vector.load %arg17[%c0_155, %c0_156, %c0_157] : memref<2x1x32xf32, #tpu.memory_space<vmem>>, vector<1x1x32xf32>
    %186 = vector.shape_cast %185 : vector<1x1x32xf32> to vector<1x32xf32>
    %c0_158 = arith.constant 0 : index
    %c0_159 = arith.constant 0 : index
    %c0_160 = arith.constant 0 : index
    %187 = vector.load %arg18[%c0_158, %c0_159, %c0_160] : memref<2x1x32xf32, #tpu.memory_space<vmem>>, vector<1x1x32xf32>
    %188 = vector.shape_cast %187 : vector<1x1x32xf32> to vector<1x32xf32>
    %cst_161 = arith.constant dense<0.000000e+00> : vector<16xf32>
    %189 = vector.multi_reduction <add>, %184, %cst_161 [1] : vector<16x32xf32> to vector<16xf32>
    %190 = vector.shape_cast %189 : vector<16xf32> to vector<16x1xf32>
    %cst_162 = arith.constant 3.200000e+01 : f32
    %191 = vector.broadcast %cst_162 : f32 to vector<16x1xf32>
    %192 = arith.divf %190, %191 : vector<16x1xf32>
    %193 = vector.broadcast %192 : vector<16x1xf32> to vector<16x32xf32>
    %194 = arith.subf %184, %193 : vector<16x32xf32>
    %195 = arith.mulf %194, %194 : vector<16x32xf32>
    %cst_163 = arith.constant dense<0.000000e+00> : vector<16xf32>
    %196 = vector.multi_reduction <add>, %195, %cst_163 [1] : vector<16x32xf32> to vector<16xf32>
    %197 = vector.shape_cast %196 : vector<16xf32> to vector<16x1xf32>
    %cst_164 = arith.constant 3.200000e+01 : f32
    %198 = vector.broadcast %cst_164 : f32 to vector<16x1xf32>
    %199 = arith.divf %197, %198 : vector<16x1xf32>
    %cst_165 = arith.constant 9.99999974E-6 : f32
    %200 = vector.broadcast %cst_165 : f32 to vector<16x1xf32>
    %201 = arith.addf %199, %200 : vector<16x1xf32>
    %202 = math.rsqrt %201 : vector<16x1xf32>
    %203 = vector.broadcast %202 : vector<16x1xf32> to vector<16x32xf32>
    %204 = arith.mulf %194, %203 : vector<16x32xf32>
    %205 = vector.broadcast %186 : vector<1x32xf32> to vector<16x32xf32>
    %206 = arith.mulf %204, %205 : vector<16x32xf32>
    %207 = vector.broadcast %188 : vector<1x32xf32> to vector<16x32xf32>
    %208 = arith.addf %206, %207 : vector<16x32xf32>
    %c0_166 = arith.constant 0 : index
    %c0_167 = arith.constant 0 : index
    %c0_168 = arith.constant 0 : index
    %209 = vector.load %arg13[%c0_166, %c0_167, %c0_168] : memref<2x32x2048xf32, #tpu.memory_space<vmem>>, vector<1x32x2048xf32>
    %210 = vector.shape_cast %209 : vector<1x32x2048xf32> to vector<32x2048xf32>
    %cst_169 = arith.constant dense<0.000000e+00> : vector<16x2048xf32>
    %211 = tpu.matmul %208, %210, %cst_169 {dimension_numbers = #tpu.dot_dimension_numbers<[1], [0], [0], [1], [0, 0, 1, 1], [], []>} : vector<16x32xf32>, vector<32x2048xf32>, vector<16x2048xf32> -> vector<16x2048xf32>
    %c0_170 = arith.constant 0 : index
    %c0_171 = arith.constant 0 : index
    %c0_172 = arith.constant 0 : index
    %212 = vector.load %arg14[%c0_170, %c0_171, %c0_172] : memref<2x1x2048xf32, #tpu.memory_space<vmem>>, vector<1x1x2048xf32>
    %213 = vector.shape_cast %212 : vector<1x1x2048xf32> to vector<1x2048xf32>
    %214 = vector.broadcast %213 : vector<1x2048xf32> to vector<16x2048xf32>
    %215 = arith.addf %211, %214 : vector<16x2048xf32>
    %cst_173 = arith.constant 0.000000e+00 : f32
    %216 = vector.broadcast %cst_173 : f32 to vector<16x2048xf32>
    %217 = arith.maximumf %215, %216 : vector<16x2048xf32>
    %c0_174 = arith.constant 0 : index
    %c0_175 = arith.constant 0 : index
    %c0_176 = arith.constant 0 : index
    %218 = vector.load %arg15[%c0_174, %c0_175, %c0_176] : memref<2x2048x32xf32, #tpu.memory_space<vmem>>, vector<1x2048x32xf32>
    %219 = vector.shape_cast %218 : vector<1x2048x32xf32> to vector<2048x32xf32>
    %cst_177 = arith.constant dense<0.000000e+00> : vector<16x32xf32>
    %220 = tpu.matmul %217, %219, %cst_177 {dimension_numbers = #tpu.dot_dimension_numbers<[1], [0], [0], [1], [0, 0, 1, 1], [], []>} : vector<16x2048xf32>, vector<2048x32xf32>, vector<16x32xf32> -> vector<16x32xf32>
    %c0_178 = arith.constant 0 : index
    %c0_179 = arith.constant 0 : index
    %c0_180 = arith.constant 0 : index
    %221 = vector.load %arg16[%c0_178, %c0_179, %c0_180] : memref<2x1x32xf32, #tpu.memory_space<vmem>>, vector<1x1x32xf32>
    %222 = vector.shape_cast %221 : vector<1x1x32xf32> to vector<1x32xf32>
    %223 = vector.broadcast %222 : vector<1x32xf32> to vector<16x32xf32>
    %224 = arith.addf %220, %223 : vector<16x32xf32>
    %225 = arith.addf %208, %224 : vector<16x32xf32>
    %c0_181 = arith.constant 0 : index
    %c0_182 = arith.constant 0 : index
    %c0_183 = arith.constant 0 : index
    %226 = vector.load %arg19[%c0_181, %c0_182, %c0_183] : memref<2x1x32xf32, #tpu.memory_space<vmem>>, vector<1x1x32xf32>
    %227 = vector.shape_cast %226 : vector<1x1x32xf32> to vector<1x32xf32>
    %c0_184 = arith.constant 0 : index
    %c0_185 = arith.constant 0 : index
    %c0_186 = arith.constant 0 : index
    %228 = vector.load %arg20[%c0_184, %c0_185, %c0_186] : memref<2x1x32xf32, #tpu.memory_space<vmem>>, vector<1x1x32xf32>
    %229 = vector.shape_cast %228 : vector<1x1x32xf32> to vector<1x32xf32>
    %cst_187 = arith.constant dense<0.000000e+00> : vector<16xf32>
    %230 = vector.multi_reduction <add>, %225, %cst_187 [1] : vector<16x32xf32> to vector<16xf32>
    %231 = vector.shape_cast %230 : vector<16xf32> to vector<16x1xf32>
    %cst_188 = arith.constant 3.200000e+01 : f32
    %232 = vector.broadcast %cst_188 : f32 to vector<16x1xf32>
    %233 = arith.divf %231, %232 : vector<16x1xf32>
    %234 = vector.broadcast %233 : vector<16x1xf32> to vector<16x32xf32>
    %235 = arith.subf %225, %234 : vector<16x32xf32>
    %236 = arith.mulf %235, %235 : vector<16x32xf32>
    %cst_189 = arith.constant dense<0.000000e+00> : vector<16xf32>
    %237 = vector.multi_reduction <add>, %236, %cst_189 [1] : vector<16x32xf32> to vector<16xf32>
    %238 = vector.shape_cast %237 : vector<16xf32> to vector<16x1xf32>
    %cst_190 = arith.constant 3.200000e+01 : f32
    %239 = vector.broadcast %cst_190 : f32 to vector<16x1xf32>
    %240 = arith.divf %238, %239 : vector<16x1xf32>
    %cst_191 = arith.constant 9.99999974E-6 : f32
    %241 = vector.broadcast %cst_191 : f32 to vector<16x1xf32>
    %242 = arith.addf %240, %241 : vector<16x1xf32>
    %243 = math.rsqrt %242 : vector<16x1xf32>
    %244 = vector.broadcast %243 : vector<16x1xf32> to vector<16x32xf32>
    %245 = arith.mulf %235, %244 : vector<16x32xf32>
    %246 = vector.broadcast %227 : vector<1x32xf32> to vector<16x32xf32>
    %247 = arith.mulf %245, %246 : vector<16x32xf32>
    %248 = vector.broadcast %229 : vector<1x32xf32> to vector<16x32xf32>
    %249 = arith.addf %247, %248 : vector<16x32xf32>
    %cst_192 = arith.constant 0.000000e+00 : f32
    %250 = vector.broadcast %cst_192 : f32 to vector<16x32xf32>
    %c1_193 = arith.constant 1 : index
    %c0_194 = arith.constant 0 : index
    %c0_195 = arith.constant 0 : index
    %c0_196 = arith.constant 0 : index
    %251 = vector.load %arg5[%c1_193, %c0_194, %c0_195, %c0_196] : memref<2x4x32x8xf32, #tpu.memory_space<vmem>>, vector<1x1x32x8xf32>
    %252 = vector.shape_cast %251 : vector<1x1x32x8xf32> to vector<32x8xf32>
    %cst_197 = arith.constant dense<0.000000e+00> : vector<16x8xf32>
    %253 = tpu.matmul %249, %252, %cst_197 {dimension_numbers = #tpu.dot_dimension_numbers<[1], [0], [0], [1], [0, 0, 1, 1], [], []>} : vector<16x32xf32>, vector<32x8xf32>, vector<16x8xf32> -> vector<16x8xf32>
    %c1_198 = arith.constant 1 : index
    %c0_199 = arith.constant 0 : index
    %c0_200 = arith.constant 0 : index
    %c0_201 = arith.constant 0 : index
    %254 = vector.load %arg6[%c1_198, %c0_199, %c0_200, %c0_201] : memref<2x4x1x8xf32, #tpu.memory_space<vmem>>, vector<1x1x1x8xf32>
    %255 = vector.shape_cast %254 : vector<1x1x1x8xf32> to vector<1x8xf32>
    %256 = vector.broadcast %255 : vector<1x8xf32> to vector<16x8xf32>
    %257 = arith.addf %253, %256 : vector<16x8xf32>
    %258 = vector.shape_cast %257 : vector<16x8xf32> to vector<2x8x8xf32>
    %c1_202 = arith.constant 1 : index
    %c0_203 = arith.constant 0 : index
    %c0_204 = arith.constant 0 : index
    %c0_205 = arith.constant 0 : index
    %259 = vector.load %arg7[%c1_202, %c0_203, %c0_204, %c0_205] : memref<2x4x32x8xf32, #tpu.memory_space<vmem>>, vector<1x1x32x8xf32>
    %260 = vector.shape_cast %259 : vector<1x1x32x8xf32> to vector<32x8xf32>
    %cst_206 = arith.constant dense<0.000000e+00> : vector<16x8xf32>
    %261 = tpu.matmul %249, %260, %cst_206 {dimension_numbers = #tpu.dot_dimension_numbers<[1], [0], [0], [1], [0, 0, 1, 1], [], []>} : vector<16x32xf32>, vector<32x8xf32>, vector<16x8xf32> -> vector<16x8xf32>
    %c1_207 = arith.constant 1 : index
    %c0_208 = arith.constant 0 : index
    %c0_209 = arith.constant 0 : index
    %c0_210 = arith.constant 0 : index
    %262 = vector.load %arg8[%c1_207, %c0_208, %c0_209, %c0_210] : memref<2x4x1x8xf32, #tpu.memory_space<vmem>>, vector<1x1x1x8xf32>
    %263 = vector.shape_cast %262 : vector<1x1x1x8xf32> to vector<1x8xf32>
    %264 = vector.broadcast %263 : vector<1x8xf32> to vector<16x8xf32>
    %265 = arith.addf %261, %264 : vector<16x8xf32>
    %266 = vector.shape_cast %265 : vector<16x8xf32> to vector<2x8x8xf32>
    %c1_211 = arith.constant 1 : index
    %c0_212 = arith.constant 0 : index
    %c0_213 = arith.constant 0 : index
    %c0_214 = arith.constant 0 : index
    %267 = vector.load %arg9[%c1_211, %c0_212, %c0_213, %c0_214] : memref<2x4x32x8xf32, #tpu.memory_space<vmem>>, vector<1x1x32x8xf32>
    %268 = vector.shape_cast %267 : vector<1x1x32x8xf32> to vector<32x8xf32>
    %cst_215 = arith.constant dense<0.000000e+00> : vector<16x8xf32>
    %269 = tpu.matmul %249, %268, %cst_215 {dimension_numbers = #tpu.dot_dimension_numbers<[1], [0], [0], [1], [0, 0, 1, 1], [], []>} : vector<16x32xf32>, vector<32x8xf32>, vector<16x8xf32> -> vector<16x8xf32>
    %c1_216 = arith.constant 1 : index
    %c0_217 = arith.constant 0 : index
    %c0_218 = arith.constant 0 : index
    %c0_219 = arith.constant 0 : index
    %270 = vector.load %arg10[%c1_216, %c0_217, %c0_218, %c0_219] : memref<2x4x1x8xf32, #tpu.memory_space<vmem>>, vector<1x1x1x8xf32>
    %271 = vector.shape_cast %270 : vector<1x1x1x8xf32> to vector<1x8xf32>
    %272 = vector.broadcast %271 : vector<1x8xf32> to vector<16x8xf32>
    %273 = arith.addf %269, %272 : vector<16x8xf32>
    %274 = vector.shape_cast %273 : vector<16x8xf32> to vector<2x8x8xf32>
    "tpu.trace_start"() <{level = 10 : i32, message = "bqd,bkd->bqk"}> : () -> ()
    %cst_220 = arith.constant dense<0.000000e+00> : vector<2x8x8xf32>
    %275 = tpu.matmul %258, %266, %cst_220 {dimension_numbers = #tpu.dot_dimension_numbers<[2], [2], [1], [1], [0, 0, 0, 1, 1, 1], [0], [0]>} : vector<2x8x8xf32>, vector<2x8x8xf32>, vector<2x8x8xf32> -> vector<2x8x8xf32>
    "tpu.trace_stop"() : () -> ()
    %cst_221 = arith.constant 0.353553385 : f32
    %276 = vector.broadcast %cst_221 : f32 to vector<2x8x8xf32>
    %277 = arith.mulf %275, %276 : vector<2x8x8xf32>
    %cst_222 = arith.constant dense<0xFF800000> : vector<2x8xf32>
    %278 = vector.multi_reduction <maximumf>, %277, %cst_222 [2] : vector<2x8x8xf32> to vector<2x8xf32>
    %279 = vector.shape_cast %278 : vector<2x8xf32> to vector<2x8x1xf32>
    %280 = vector.broadcast %279 : vector<2x8x1xf32> to vector<2x8x8xf32>
    %281 = arith.subf %277, %280 : vector<2x8x8xf32>
    %282 = math.exp %281 : vector<2x8x8xf32>
    %cst_223 = arith.constant dense<0.000000e+00> : vector<2x8xf32>
    %283 = vector.multi_reduction <add>, %282, %cst_223 [2] : vector<2x8x8xf32> to vector<2x8xf32>
    %284 = vector.shape_cast %283 : vector<2x8xf32> to vector<2x8x1xf32>
    %285 = tpu.reciprocal %284 {approx = true} : vector<2x8x1xf32> -> vector<2x8x1xf32>
    %286 = vector.broadcast %285 : vector<2x8x1xf32> to vector<2x8x8xf32>
    %287 = arith.mulf %282, %286 : vector<2x8x8xf32>
    "tpu.trace_start"() <{level = 10 : i32, message = "bqk,bkd->bqd"}> : () -> ()
    %cst_224 = arith.constant dense<0.000000e+00> : vector<2x8x8xf32>
    %288 = tpu.matmul %287, %274, %cst_224 {dimension_numbers = #tpu.dot_dimension_numbers<[2], [1], [1], [2], [0, 0, 0, 1, 1, 2], [0], [0]>} : vector<2x8x8xf32>, vector<2x8x8xf32>, vector<2x8x8xf32> -> vector<2x8x8xf32>
    "tpu.trace_stop"() : () -> ()
    %289 = vector.shape_cast %288 : vector<2x8x8xf32> to vector<16x8xf32>
    %c1_225 = arith.constant 1 : index
    %c0_226 = arith.constant 0 : index
    %c0_227 = arith.constant 0 : index
    %c0_228 = arith.constant 0 : index
    %290 = vector.load %arg11[%c1_225, %c0_226, %c0_227, %c0_228] : memref<2x4x8x32xf32, #tpu.memory_space<vmem>>, vector<1x1x8x32xf32>
    %291 = vector.shape_cast %290 : vector<1x1x8x32xf32> to vector<8x32xf32>
    %cst_229 = arith.constant dense<0.000000e+00> : vector<16x32xf32>
    %292 = tpu.matmul %289, %291, %cst_229 {dimension_numbers = #tpu.dot_dimension_numbers<[1], [0], [0], [1], [0, 0, 1, 1], [], []>} : vector<16x8xf32>, vector<8x32xf32>, vector<16x32xf32> -> vector<16x32xf32>
    %293 = arith.addf %250, %292 : vector<16x32xf32>
    %c1_230 = arith.constant 1 : index
    %c1_231 = arith.constant 1 : index
    %c0_232 = arith.constant 0 : index
    %c0_233 = arith.constant 0 : index
    %294 = vector.load %arg5[%c1_230, %c1_231, %c0_232, %c0_233] : memref<2x4x32x8xf32, #tpu.memory_space<vmem>>, vector<1x1x32x8xf32>
    %295 = vector.shape_cast %294 : vector<1x1x32x8xf32> to vector<32x8xf32>
    %cst_234 = arith.constant dense<0.000000e+00> : vector<16x8xf32>
    %296 = tpu.matmul %249, %295, %cst_234 {dimension_numbers = #tpu.dot_dimension_numbers<[1], [0], [0], [1], [0, 0, 1, 1], [], []>} : vector<16x32xf32>, vector<32x8xf32>, vector<16x8xf32> -> vector<16x8xf32>
    %c1_235 = arith.constant 1 : index
    %c1_236 = arith.constant 1 : index
    %c0_237 = arith.constant 0 : index
    %c0_238 = arith.constant 0 : index
    %297 = vector.load %arg6[%c1_235, %c1_236, %c0_237, %c0_238] : memref<2x4x1x8xf32, #tpu.memory_space<vmem>>, vector<1x1x1x8xf32>
    %298 = vector.shape_cast %297 : vector<1x1x1x8xf32> to vector<1x8xf32>
    %299 = vector.broadcast %298 : vector<1x8xf32> to vector<16x8xf32>
    %300 = arith.addf %296, %299 : vector<16x8xf32>
    %301 = vector.shape_cast %300 : vector<16x8xf32> to vector<2x8x8xf32>
    %c1_239 = arith.constant 1 : index
    %c1_240 = arith.constant 1 : index
    %c0_241 = arith.constant 0 : index
    %c0_242 = arith.constant 0 : index
    %302 = vector.load %arg7[%c1_239, %c1_240, %c0_241, %c0_242] : memref<2x4x32x8xf32, #tpu.memory_space<vmem>>, vector<1x1x32x8xf32>
    %303 = vector.shape_cast %302 : vector<1x1x32x8xf32> to vector<32x8xf32>
    %cst_243 = arith.constant dense<0.000000e+00> : vector<16x8xf32>
    %304 = tpu.matmul %249, %303, %cst_243 {dimension_numbers = #tpu.dot_dimension_numbers<[1], [0], [0], [1], [0, 0, 1, 1], [], []>} : vector<16x32xf32>, vector<32x8xf32>, vector<16x8xf32> -> vector<16x8xf32>
    %c1_244 = arith.constant 1 : index
    %c1_245 = arith.constant 1 : index
    %c0_246 = arith.constant 0 : index
    %c0_247 = arith.constant 0 : index
    %305 = vector.load %arg8[%c1_244, %c1_245, %c0_246, %c0_247] : memref<2x4x1x8xf32, #tpu.memory_space<vmem>>, vector<1x1x1x8xf32>
    %306 = vector.shape_cast %305 : vector<1x1x1x8xf32> to vector<1x8xf32>
    %307 = vector.broadcast %306 : vector<1x8xf32> to vector<16x8xf32>
    %308 = arith.addf %304, %307 : vector<16x8xf32>
    %309 = vector.shape_cast %308 : vector<16x8xf32> to vector<2x8x8xf32>
    %c1_248 = arith.constant 1 : index
    %c1_249 = arith.constant 1 : index
    %c0_250 = arith.constant 0 : index
    %c0_251 = arith.constant 0 : index
    %310 = vector.load %arg9[%c1_248, %c1_249, %c0_250, %c0_251] : memref<2x4x32x8xf32, #tpu.memory_space<vmem>>, vector<1x1x32x8xf32>
    %311 = vector.shape_cast %310 : vector<1x1x32x8xf32> to vector<32x8xf32>
    %cst_252 = arith.constant dense<0.000000e+00> : vector<16x8xf32>
    %312 = tpu.matmul %249, %311, %cst_252 {dimension_numbers = #tpu.dot_dimension_numbers<[1], [0], [0], [1], [0, 0, 1, 1], [], []>} : vector<16x32xf32>, vector<32x8xf32>, vector<16x8xf32> -> vector<16x8xf32>
    %c1_253 = arith.constant 1 : index
    %c1_254 = arith.constant 1 : index
    %c0_255 = arith.constant 0 : index
    %c0_256 = arith.constant 0 : index
    %313 = vector.load %arg10[%c1_253, %c1_254, %c0_255, %c0_256] : memref<2x4x1x8xf32, #tpu.memory_space<vmem>>, vector<1x1x1x8xf32>
    %314 = vector.shape_cast %313 : vector<1x1x1x8xf32> to vector<1x8xf32>
    %315 = vector.broadcast %314 : vector<1x8xf32> to vector<16x8xf32>
    %316 = arith.addf %312, %315 : vector<16x8xf32>
    %317 = vector.shape_cast %316 : vector<16x8xf32> to vector<2x8x8xf32>
    "tpu.trace_start"() <{level = 10 : i32, message = "bqd,bkd->bqk"}> : () -> ()
    %cst_257 = arith.constant dense<0.000000e+00> : vector<2x8x8xf32>
    %318 = tpu.matmul %301, %309, %cst_257 {dimension_numbers = #tpu.dot_dimension_numbers<[2], [2], [1], [1], [0, 0, 0, 1, 1, 1], [0], [0]>} : vector<2x8x8xf32>, vector<2x8x8xf32>, vector<2x8x8xf32> -> vector<2x8x8xf32>
    "tpu.trace_stop"() : () -> ()
    %cst_258 = arith.constant 0.353553385 : f32
    %319 = vector.broadcast %cst_258 : f32 to vector<2x8x8xf32>
    %320 = arith.mulf %318, %319 : vector<2x8x8xf32>
    %cst_259 = arith.constant dense<0xFF800000> : vector<2x8xf32>
    %321 = vector.multi_reduction <maximumf>, %320, %cst_259 [2] : vector<2x8x8xf32> to vector<2x8xf32>
    %322 = vector.shape_cast %321 : vector<2x8xf32> to vector<2x8x1xf32>
    %323 = vector.broadcast %322 : vector<2x8x1xf32> to vector<2x8x8xf32>
    %324 = arith.subf %320, %323 : vector<2x8x8xf32>
    %325 = math.exp %324 : vector<2x8x8xf32>
    %cst_260 = arith.constant dense<0.000000e+00> : vector<2x8xf32>
    %326 = vector.multi_reduction <add>, %325, %cst_260 [2] : vector<2x8x8xf32> to vector<2x8xf32>
    %327 = vector.shape_cast %326 : vector<2x8xf32> to vector<2x8x1xf32>
    %328 = tpu.reciprocal %327 {approx = true} : vector<2x8x1xf32> -> vector<2x8x1xf32>
    %329 = vector.broadcast %328 : vector<2x8x1xf32> to vector<2x8x8xf32>
    %330 = arith.mulf %325, %329 : vector<2x8x8xf32>
    "tpu.trace_start"() <{level = 10 : i32, message = "bqk,bkd->bqd"}> : () -> ()
    %cst_261 = arith.constant dense<0.000000e+00> : vector<2x8x8xf32>
    %331 = tpu.matmul %330, %317, %cst_261 {dimension_numbers = #tpu.dot_dimension_numbers<[2], [1], [1], [2], [0, 0, 0, 1, 1, 2], [0], [0]>} : vector<2x8x8xf32>, vector<2x8x8xf32>, vector<2x8x8xf32> -> vector<2x8x8xf32>
    "tpu.trace_stop"() : () -> ()
    %332 = vector.shape_cast %331 : vector<2x8x8xf32> to vector<16x8xf32>
    %c1_262 = arith.constant 1 : index
    %c1_263 = arith.constant 1 : index
    %c0_264 = arith.constant 0 : index
    %c0_265 = arith.constant 0 : index
    %333 = vector.load %arg11[%c1_262, %c1_263, %c0_264, %c0_265] : memref<2x4x8x32xf32, #tpu.memory_space<vmem>>, vector<1x1x8x32xf32>
    %334 = vector.shape_cast %333 : vector<1x1x8x32xf32> to vector<8x32xf32>
    %cst_266 = arith.constant dense<0.000000e+00> : vector<16x32xf32>
    %335 = tpu.matmul %332, %334, %cst_266 {dimension_numbers = #tpu.dot_dimension_numbers<[1], [0], [0], [1], [0, 0, 1, 1], [], []>} : vector<16x8xf32>, vector<8x32xf32>, vector<16x32xf32> -> vector<16x32xf32>
    %336 = arith.addf %293, %335 : vector<16x32xf32>
    %c1_267 = arith.constant 1 : index
    %c2_268 = arith.constant 2 : index
    %c0_269 = arith.constant 0 : index
    %c0_270 = arith.constant 0 : index
    %337 = vector.load %arg5[%c1_267, %c2_268, %c0_269, %c0_270] : memref<2x4x32x8xf32, #tpu.memory_space<vmem>>, vector<1x1x32x8xf32>
    %338 = vector.shape_cast %337 : vector<1x1x32x8xf32> to vector<32x8xf32>
    %cst_271 = arith.constant dense<0.000000e+00> : vector<16x8xf32>
    %339 = tpu.matmul %249, %338, %cst_271 {dimension_numbers = #tpu.dot_dimension_numbers<[1], [0], [0], [1], [0, 0, 1, 1], [], []>} : vector<16x32xf32>, vector<32x8xf32>, vector<16x8xf32> -> vector<16x8xf32>
    %c1_272 = arith.constant 1 : index
    %c2_273 = arith.constant 2 : index
    %c0_274 = arith.constant 0 : index
    %c0_275 = arith.constant 0 : index
    %340 = vector.load %arg6[%c1_272, %c2_273, %c0_274, %c0_275] : memref<2x4x1x8xf32, #tpu.memory_space<vmem>>, vector<1x1x1x8xf32>
    %341 = vector.shape_cast %340 : vector<1x1x1x8xf32> to vector<1x8xf32>
    %342 = vector.broadcast %341 : vector<1x8xf32> to vector<16x8xf32>
    %343 = arith.addf %339, %342 : vector<16x8xf32>
    %344 = vector.shape_cast %343 : vector<16x8xf32> to vector<2x8x8xf32>
    %c1_276 = arith.constant 1 : index
    %c2_277 = arith.constant 2 : index
    %c0_278 = arith.constant 0 : index
    %c0_279 = arith.constant 0 : index
    %345 = vector.load %arg7[%c1_276, %c2_277, %c0_278, %c0_279] : memref<2x4x32x8xf32, #tpu.memory_space<vmem>>, vector<1x1x32x8xf32>
    %346 = vector.shape_cast %345 : vector<1x1x32x8xf32> to vector<32x8xf32>
    %cst_280 = arith.constant dense<0.000000e+00> : vector<16x8xf32>
    %347 = tpu.matmul %249, %346, %cst_280 {dimension_numbers = #tpu.dot_dimension_numbers<[1], [0], [0], [1], [0, 0, 1, 1], [], []>} : vector<16x32xf32>, vector<32x8xf32>, vector<16x8xf32> -> vector<16x8xf32>
    %c1_281 = arith.constant 1 : index
    %c2_282 = arith.constant 2 : index
    %c0_283 = arith.constant 0 : index
    %c0_284 = arith.constant 0 : index
    %348 = vector.load %arg8[%c1_281, %c2_282, %c0_283, %c0_284] : memref<2x4x1x8xf32, #tpu.memory_space<vmem>>, vector<1x1x1x8xf32>
    %349 = vector.shape_cast %348 : vector<1x1x1x8xf32> to vector<1x8xf32>
    %350 = vector.broadcast %349 : vector<1x8xf32> to vector<16x8xf32>
    %351 = arith.addf %347, %350 : vector<16x8xf32>
    %352 = vector.shape_cast %351 : vector<16x8xf32> to vector<2x8x8xf32>
    %c1_285 = arith.constant 1 : index
    %c2_286 = arith.constant 2 : index
    %c0_287 = arith.constant 0 : index
    %c0_288 = arith.constant 0 : index
    %353 = vector.load %arg9[%c1_285, %c2_286, %c0_287, %c0_288] : memref<2x4x32x8xf32, #tpu.memory_space<vmem>>, vector<1x1x32x8xf32>
    %354 = vector.shape_cast %353 : vector<1x1x32x8xf32> to vector<32x8xf32>
    %cst_289 = arith.constant dense<0.000000e+00> : vector<16x8xf32>
    %355 = tpu.matmul %249, %354, %cst_289 {dimension_numbers = #tpu.dot_dimension_numbers<[1], [0], [0], [1], [0, 0, 1, 1], [], []>} : vector<16x32xf32>, vector<32x8xf32>, vector<16x8xf32> -> vector<16x8xf32>
    %c1_290 = arith.constant 1 : index
    %c2_291 = arith.constant 2 : index
    %c0_292 = arith.constant 0 : index
    %c0_293 = arith.constant 0 : index
    %356 = vector.load %arg10[%c1_290, %c2_291, %c0_292, %c0_293] : memref<2x4x1x8xf32, #tpu.memory_space<vmem>>, vector<1x1x1x8xf32>
    %357 = vector.shape_cast %356 : vector<1x1x1x8xf32> to vector<1x8xf32>
    %358 = vector.broadcast %357 : vector<1x8xf32> to vector<16x8xf32>
    %359 = arith.addf %355, %358 : vector<16x8xf32>
    %360 = vector.shape_cast %359 : vector<16x8xf32> to vector<2x8x8xf32>
    "tpu.trace_start"() <{level = 10 : i32, message = "bqd,bkd->bqk"}> : () -> ()
    %cst_294 = arith.constant dense<0.000000e+00> : vector<2x8x8xf32>
    %361 = tpu.matmul %344, %352, %cst_294 {dimension_numbers = #tpu.dot_dimension_numbers<[2], [2], [1], [1], [0, 0, 0, 1, 1, 1], [0], [0]>} : vector<2x8x8xf32>, vector<2x8x8xf32>, vector<2x8x8xf32> -> vector<2x8x8xf32>
    "tpu.trace_stop"() : () -> ()
    %cst_295 = arith.constant 0.353553385 : f32
    %362 = vector.broadcast %cst_295 : f32 to vector<2x8x8xf32>
    %363 = arith.mulf %361, %362 : vector<2x8x8xf32>
    %cst_296 = arith.constant dense<0xFF800000> : vector<2x8xf32>
    %364 = vector.multi_reduction <maximumf>, %363, %cst_296 [2] : vector<2x8x8xf32> to vector<2x8xf32>
    %365 = vector.shape_cast %364 : vector<2x8xf32> to vector<2x8x1xf32>
    %366 = vector.broadcast %365 : vector<2x8x1xf32> to vector<2x8x8xf32>
    %367 = arith.subf %363, %366 : vector<2x8x8xf32>
    %368 = math.exp %367 : vector<2x8x8xf32>
    %cst_297 = arith.constant dense<0.000000e+00> : vector<2x8xf32>
    %369 = vector.multi_reduction <add>, %368, %cst_297 [2] : vector<2x8x8xf32> to vector<2x8xf32>
    %370 = vector.shape_cast %369 : vector<2x8xf32> to vector<2x8x1xf32>
    %371 = tpu.reciprocal %370 {approx = true} : vector<2x8x1xf32> -> vector<2x8x1xf32>
    %372 = vector.broadcast %371 : vector<2x8x1xf32> to vector<2x8x8xf32>
    %373 = arith.mulf %368, %372 : vector<2x8x8xf32>
    "tpu.trace_start"() <{level = 10 : i32, message = "bqk,bkd->bqd"}> : () -> ()
    %cst_298 = arith.constant dense<0.000000e+00> : vector<2x8x8xf32>
    %374 = tpu.matmul %373, %360, %cst_298 {dimension_numbers = #tpu.dot_dimension_numbers<[2], [1], [1], [2], [0, 0, 0, 1, 1, 2], [0], [0]>} : vector<2x8x8xf32>, vector<2x8x8xf32>, vector<2x8x8xf32> -> vector<2x8x8xf32>
    "tpu.trace_stop"() : () -> ()
    %375 = vector.shape_cast %374 : vector<2x8x8xf32> to vector<16x8xf32>
    %c1_299 = arith.constant 1 : index
    %c2_300 = arith.constant 2 : index
    %c0_301 = arith.constant 0 : index
    %c0_302 = arith.constant 0 : index
    %376 = vector.load %arg11[%c1_299, %c2_300, %c0_301, %c0_302] : memref<2x4x8x32xf32, #tpu.memory_space<vmem>>, vector<1x1x8x32xf32>
    %377 = vector.shape_cast %376 : vector<1x1x8x32xf32> to vector<8x32xf32>
    %cst_303 = arith.constant dense<0.000000e+00> : vector<16x32xf32>
    %378 = tpu.matmul %375, %377, %cst_303 {dimension_numbers = #tpu.dot_dimension_numbers<[1], [0], [0], [1], [0, 0, 1, 1], [], []>} : vector<16x8xf32>, vector<8x32xf32>, vector<16x32xf32> -> vector<16x32xf32>
    %379 = arith.addf %336, %378 : vector<16x32xf32>
    %c1_304 = arith.constant 1 : index
    %c3_305 = arith.constant 3 : index
    %c0_306 = arith.constant 0 : index
    %c0_307 = arith.constant 0 : index
    %380 = vector.load %arg5[%c1_304, %c3_305, %c0_306, %c0_307] : memref<2x4x32x8xf32, #tpu.memory_space<vmem>>, vector<1x1x32x8xf32>
    %381 = vector.shape_cast %380 : vector<1x1x32x8xf32> to vector<32x8xf32>
    %cst_308 = arith.constant dense<0.000000e+00> : vector<16x8xf32>
    %382 = tpu.matmul %249, %381, %cst_308 {dimension_numbers = #tpu.dot_dimension_numbers<[1], [0], [0], [1], [0, 0, 1, 1], [], []>} : vector<16x32xf32>, vector<32x8xf32>, vector<16x8xf32> -> vector<16x8xf32>
    %c1_309 = arith.constant 1 : index
    %c3_310 = arith.constant 3 : index
    %c0_311 = arith.constant 0 : index
    %c0_312 = arith.constant 0 : index
    %383 = vector.load %arg6[%c1_309, %c3_310, %c0_311, %c0_312] : memref<2x4x1x8xf32, #tpu.memory_space<vmem>>, vector<1x1x1x8xf32>
    %384 = vector.shape_cast %383 : vector<1x1x1x8xf32> to vector<1x8xf32>
    %385 = vector.broadcast %384 : vector<1x8xf32> to vector<16x8xf32>
    %386 = arith.addf %382, %385 : vector<16x8xf32>
    %387 = vector.shape_cast %386 : vector<16x8xf32> to vector<2x8x8xf32>
    %c1_313 = arith.constant 1 : index
    %c3_314 = arith.constant 3 : index
    %c0_315 = arith.constant 0 : index
    %c0_316 = arith.constant 0 : index
    %388 = vector.load %arg7[%c1_313, %c3_314, %c0_315, %c0_316] : memref<2x4x32x8xf32, #tpu.memory_space<vmem>>, vector<1x1x32x8xf32>
    %389 = vector.shape_cast %388 : vector<1x1x32x8xf32> to vector<32x8xf32>
    %cst_317 = arith.constant dense<0.000000e+00> : vector<16x8xf32>
    %390 = tpu.matmul %249, %389, %cst_317 {dimension_numbers = #tpu.dot_dimension_numbers<[1], [0], [0], [1], [0, 0, 1, 1], [], []>} : vector<16x32xf32>, vector<32x8xf32>, vector<16x8xf32> -> vector<16x8xf32>
    %c1_318 = arith.constant 1 : index
    %c3_319 = arith.constant 3 : index
    %c0_320 = arith.constant 0 : index
    %c0_321 = arith.constant 0 : index
    %391 = vector.load %arg8[%c1_318, %c3_319, %c0_320, %c0_321] : memref<2x4x1x8xf32, #tpu.memory_space<vmem>>, vector<1x1x1x8xf32>
    %392 = vector.shape_cast %391 : vector<1x1x1x8xf32> to vector<1x8xf32>
    %393 = vector.broadcast %392 : vector<1x8xf32> to vector<16x8xf32>
    %394 = arith.addf %390, %393 : vector<16x8xf32>
    %395 = vector.shape_cast %394 : vector<16x8xf32> to vector<2x8x8xf32>
    %c1_322 = arith.constant 1 : index
    %c3_323 = arith.constant 3 : index
    %c0_324 = arith.constant 0 : index
    %c0_325 = arith.constant 0 : index
    %396 = vector.load %arg9[%c1_322, %c3_323, %c0_324, %c0_325] : memref<2x4x32x8xf32, #tpu.memory_space<vmem>>, vector<1x1x32x8xf32>
    %397 = vector.shape_cast %396 : vector<1x1x32x8xf32> to vector<32x8xf32>
    %cst_326 = arith.constant dense<0.000000e+00> : vector<16x8xf32>
    %398 = tpu.matmul %249, %397, %cst_326 {dimension_numbers = #tpu.dot_dimension_numbers<[1], [0], [0], [1], [0, 0, 1, 1], [], []>} : vector<16x32xf32>, vector<32x8xf32>, vector<16x8xf32> -> vector<16x8xf32>
    %c1_327 = arith.constant 1 : index
    %c3_328 = arith.constant 3 : index
    %c0_329 = arith.constant 0 : index
    %c0_330 = arith.constant 0 : index
    %399 = vector.load %arg10[%c1_327, %c3_328, %c0_329, %c0_330] : memref<2x4x1x8xf32, #tpu.memory_space<vmem>>, vector<1x1x1x8xf32>
    %400 = vector.shape_cast %399 : vector<1x1x1x8xf32> to vector<1x8xf32>
    %401 = vector.broadcast %400 : vector<1x8xf32> to vector<16x8xf32>
    %402 = arith.addf %398, %401 : vector<16x8xf32>
    %403 = vector.shape_cast %402 : vector<16x8xf32> to vector<2x8x8xf32>
    "tpu.trace_start"() <{level = 10 : i32, message = "bqd,bkd->bqk"}> : () -> ()
    %cst_331 = arith.constant dense<0.000000e+00> : vector<2x8x8xf32>
    %404 = tpu.matmul %387, %395, %cst_331 {dimension_numbers = #tpu.dot_dimension_numbers<[2], [2], [1], [1], [0, 0, 0, 1, 1, 1], [0], [0]>} : vector<2x8x8xf32>, vector<2x8x8xf32>, vector<2x8x8xf32> -> vector<2x8x8xf32>
    "tpu.trace_stop"() : () -> ()
    %cst_332 = arith.constant 0.353553385 : f32
    %405 = vector.broadcast %cst_332 : f32 to vector<2x8x8xf32>
    %406 = arith.mulf %404, %405 : vector<2x8x8xf32>
    %cst_333 = arith.constant dense<0xFF800000> : vector<2x8xf32>
    %407 = vector.multi_reduction <maximumf>, %406, %cst_333 [2] : vector<2x8x8xf32> to vector<2x8xf32>
    %408 = vector.shape_cast %407 : vector<2x8xf32> to vector<2x8x1xf32>
    %409 = vector.broadcast %408 : vector<2x8x1xf32> to vector<2x8x8xf32>
    %410 = arith.subf %406, %409 : vector<2x8x8xf32>
    %411 = math.exp %410 : vector<2x8x8xf32>
    %cst_334 = arith.constant dense<0.000000e+00> : vector<2x8xf32>
    %412 = vector.multi_reduction <add>, %411, %cst_334 [2] : vector<2x8x8xf32> to vector<2x8xf32>
    %413 = vector.shape_cast %412 : vector<2x8xf32> to vector<2x8x1xf32>
    %414 = tpu.reciprocal %413 {approx = true} : vector<2x8x1xf32> -> vector<2x8x1xf32>
    %415 = vector.broadcast %414 : vector<2x8x1xf32> to vector<2x8x8xf32>
    %416 = arith.mulf %411, %415 : vector<2x8x8xf32>
    "tpu.trace_start"() <{level = 10 : i32, message = "bqk,bkd->bqd"}> : () -> ()
    %cst_335 = arith.constant dense<0.000000e+00> : vector<2x8x8xf32>
    %417 = tpu.matmul %416, %403, %cst_335 {dimension_numbers = #tpu.dot_dimension_numbers<[2], [1], [1], [2], [0, 0, 0, 1, 1, 2], [0], [0]>} : vector<2x8x8xf32>, vector<2x8x8xf32>, vector<2x8x8xf32> -> vector<2x8x8xf32>
    "tpu.trace_stop"() : () -> ()
    %418 = vector.shape_cast %417 : vector<2x8x8xf32> to vector<16x8xf32>
    %c1_336 = arith.constant 1 : index
    %c3_337 = arith.constant 3 : index
    %c0_338 = arith.constant 0 : index
    %c0_339 = arith.constant 0 : index
    %419 = vector.load %arg11[%c1_336, %c3_337, %c0_338, %c0_339] : memref<2x4x8x32xf32, #tpu.memory_space<vmem>>, vector<1x1x8x32xf32>
    %420 = vector.shape_cast %419 : vector<1x1x8x32xf32> to vector<8x32xf32>
    %cst_340 = arith.constant dense<0.000000e+00> : vector<16x32xf32>
    %421 = tpu.matmul %418, %420, %cst_340 {dimension_numbers = #tpu.dot_dimension_numbers<[1], [0], [0], [1], [0, 0, 1, 1], [], []>} : vector<16x8xf32>, vector<8x32xf32>, vector<16x32xf32> -> vector<16x32xf32>
    %422 = arith.addf %379, %421 : vector<16x32xf32>
    %c1_341 = arith.constant 1 : index
    %c0_342 = arith.constant 0 : index
    %c0_343 = arith.constant 0 : index
    %423 = vector.load %arg12[%c1_341, %c0_342, %c0_343] : memref<2x1x32xf32, #tpu.memory_space<vmem>>, vector<1x1x32xf32>
    %424 = vector.shape_cast %423 : vector<1x1x32xf32> to vector<1x32xf32>
    %425 = vector.broadcast %424 : vector<1x32xf32> to vector<16x32xf32>
    %426 = arith.addf %422, %425 : vector<16x32xf32>
    %427 = arith.addf %249, %426 : vector<16x32xf32>
    %c1_344 = arith.constant 1 : index
    %c0_345 = arith.constant 0 : index
    %c0_346 = arith.constant 0 : index
    %428 = vector.load %arg17[%c1_344, %c0_345, %c0_346] : memref<2x1x32xf32, #tpu.memory_space<vmem>>, vector<1x1x32xf32>
    %429 = vector.shape_cast %428 : vector<1x1x32xf32> to vector<1x32xf32>
    %c1_347 = arith.constant 1 : index
    %c0_348 = arith.constant 0 : index
    %c0_349 = arith.constant 0 : index
    %430 = vector.load %arg18[%c1_347, %c0_348, %c0_349] : memref<2x1x32xf32, #tpu.memory_space<vmem>>, vector<1x1x32xf32>
    %431 = vector.shape_cast %430 : vector<1x1x32xf32> to vector<1x32xf32>
    %cst_350 = arith.constant dense<0.000000e+00> : vector<16xf32>
    %432 = vector.multi_reduction <add>, %427, %cst_350 [1] : vector<16x32xf32> to vector<16xf32>
    %433 = vector.shape_cast %432 : vector<16xf32> to vector<16x1xf32>
    %cst_351 = arith.constant 3.200000e+01 : f32
    %434 = vector.broadcast %cst_351 : f32 to vector<16x1xf32>
    %435 = arith.divf %433, %434 : vector<16x1xf32>
    %436 = vector.broadcast %435 : vector<16x1xf32> to vector<16x32xf32>
    %437 = arith.subf %427, %436 : vector<16x32xf32>
    %438 = arith.mulf %437, %437 : vector<16x32xf32>
    %cst_352 = arith.constant dense<0.000000e+00> : vector<16xf32>
    %439 = vector.multi_reduction <add>, %438, %cst_352 [1] : vector<16x32xf32> to vector<16xf32>
    %440 = vector.shape_cast %439 : vector<16xf32> to vector<16x1xf32>
    %cst_353 = arith.constant 3.200000e+01 : f32
    %441 = vector.broadcast %cst_353 : f32 to vector<16x1xf32>
    %442 = arith.divf %440, %441 : vector<16x1xf32>
    %cst_354 = arith.constant 9.99999974E-6 : f32
    %443 = vector.broadcast %cst_354 : f32 to vector<16x1xf32>
    %444 = arith.addf %442, %443 : vector<16x1xf32>
    %445 = math.rsqrt %444 : vector<16x1xf32>
    %446 = vector.broadcast %445 : vector<16x1xf32> to vector<16x32xf32>
    %447 = arith.mulf %437, %446 : vector<16x32xf32>
    %448 = vector.broadcast %429 : vector<1x32xf32> to vector<16x32xf32>
    %449 = arith.mulf %447, %448 : vector<16x32xf32>
    %450 = vector.broadcast %431 : vector<1x32xf32> to vector<16x32xf32>
    %451 = arith.addf %449, %450 : vector<16x32xf32>
    %c1_355 = arith.constant 1 : index
    %c0_356 = arith.constant 0 : index
    %c0_357 = arith.constant 0 : index
    %452 = vector.load %arg13[%c1_355, %c0_356, %c0_357] : memref<2x32x2048xf32, #tpu.memory_space<vmem>>, vector<1x32x2048xf32>
    %453 = vector.shape_cast %452 : vector<1x32x2048xf32> to vector<32x2048xf32>
    %cst_358 = arith.constant dense<0.000000e+00> : vector<16x2048xf32>
    %454 = tpu.matmul %451, %453, %cst_358 {dimension_numbers = #tpu.dot_dimension_numbers<[1], [0], [0], [1], [0, 0, 1, 1], [], []>} : vector<16x32xf32>, vector<32x2048xf32>, vector<16x2048xf32> -> vector<16x2048xf32>
    %c1_359 = arith.constant 1 : index
    %c0_360 = arith.constant 0 : index
    %c0_361 = arith.constant 0 : index
    %455 = vector.load %arg14[%c1_359, %c0_360, %c0_361] : memref<2x1x2048xf32, #tpu.memory_space<vmem>>, vector<1x1x2048xf32>
    %456 = vector.shape_cast %455 : vector<1x1x2048xf32> to vector<1x2048xf32>
    %457 = vector.broadcast %456 : vector<1x2048xf32> to vector<16x2048xf32>
    %458 = arith.addf %454, %457 : vector<16x2048xf32>
    %cst_362 = arith.constant 0.000000e+00 : f32
    %459 = vector.broadcast %cst_362 : f32 to vector<16x2048xf32>
    %460 = arith.maximumf %458, %459 : vector<16x2048xf32>
    %c1_363 = arith.constant 1 : index
    %c0_364 = arith.constant 0 : index
    %c0_365 = arith.constant 0 : index
    %461 = vector.load %arg15[%c1_363, %c0_364, %c0_365] : memref<2x2048x32xf32, #tpu.memory_space<vmem>>, vector<1x2048x32xf32>
    %462 = vector.shape_cast %461 : vector<1x2048x32xf32> to vector<2048x32xf32>
    %cst_366 = arith.constant dense<0.000000e+00> : vector<16x32xf32>
    %463 = tpu.matmul %460, %462, %cst_366 {dimension_numbers = #tpu.dot_dimension_numbers<[1], [0], [0], [1], [0, 0, 1, 1], [], []>} : vector<16x2048xf32>, vector<2048x32xf32>, vector<16x32xf32> -> vector<16x32xf32>
    %c1_367 = arith.constant 1 : index
    %c0_368 = arith.constant 0 : index
    %c0_369 = arith.constant 0 : index
    %464 = vector.load %arg16[%c1_367, %c0_368, %c0_369] : memref<2x1x32xf32, #tpu.memory_space<vmem>>, vector<1x1x32xf32>
    %465 = vector.shape_cast %464 : vector<1x1x32xf32> to vector<1x32xf32>
    %466 = vector.broadcast %465 : vector<1x32xf32> to vector<16x32xf32>
    %467 = arith.addf %463, %466 : vector<16x32xf32>
    %468 = arith.addf %451, %467 : vector<16x32xf32>
    %c1_370 = arith.constant 1 : index
    %c0_371 = arith.constant 0 : index
    %c0_372 = arith.constant 0 : index
    %469 = vector.load %arg19[%c1_370, %c0_371, %c0_372] : memref<2x1x32xf32, #tpu.memory_space<vmem>>, vector<1x1x32xf32>
    %470 = vector.shape_cast %469 : vector<1x1x32xf32> to vector<1x32xf32>
    %c1_373 = arith.constant 1 : index
    %c0_374 = arith.constant 0 : index
    %c0_375 = arith.constant 0 : index
    %471 = vector.load %arg20[%c1_373, %c0_374, %c0_375] : memref<2x1x32xf32, #tpu.memory_space<vmem>>, vector<1x1x32xf32>
    %472 = vector.shape_cast %471 : vector<1x1x32xf32> to vector<1x32xf32>
    %cst_376 = arith.constant dense<0.000000e+00> : vector<16xf32>
    %473 = vector.multi_reduction <add>, %468, %cst_376 [1] : vector<16x32xf32> to vector<16xf32>
    %474 = vector.shape_cast %473 : vector<16xf32> to vector<16x1xf32>
    %cst_377 = arith.constant 3.200000e+01 : f32
    %475 = vector.broadcast %cst_377 : f32 to vector<16x1xf32>
    %476 = arith.divf %474, %475 : vector<16x1xf32>
    %477 = vector.broadcast %476 : vector<16x1xf32> to vector<16x32xf32>
    %478 = arith.subf %468, %477 : vector<16x32xf32>
    %479 = arith.mulf %478, %478 : vector<16x32xf32>
    %cst_378 = arith.constant dense<0.000000e+00> : vector<16xf32>
    %480 = vector.multi_reduction <add>, %479, %cst_378 [1] : vector<16x32xf32> to vector<16xf32>
    %481 = vector.shape_cast %480 : vector<16xf32> to vector<16x1xf32>
    %cst_379 = arith.constant 3.200000e+01 : f32
    %482 = vector.broadcast %cst_379 : f32 to vector<16x1xf32>
    %483 = arith.divf %481, %482 : vector<16x1xf32>
    %cst_380 = arith.constant 9.99999974E-6 : f32
    %484 = vector.broadcast %cst_380 : f32 to vector<16x1xf32>
    %485 = arith.addf %483, %484 : vector<16x1xf32>
    %486 = math.rsqrt %485 : vector<16x1xf32>
    %487 = vector.broadcast %486 : vector<16x1xf32> to vector<16x32xf32>
    %488 = arith.mulf %478, %487 : vector<16x32xf32>
    %489 = vector.broadcast %470 : vector<1x32xf32> to vector<16x32xf32>
    %490 = arith.mulf %488, %489 : vector<16x32xf32>
    %491 = vector.broadcast %472 : vector<1x32xf32> to vector<16x32xf32>
    %492 = arith.addf %490, %491 : vector<16x32xf32>
    %493 = vector.shape_cast %492 : vector<16x32xf32> to vector<2x8x32xf32>
    %494 = vector.extract_strided_slice %493 {offsets = [0, 0, 0], sizes = [2, 1, 32], strides = [1, 1, 1]} : vector<2x8x32xf32> to vector<2x1x32xf32>
    %495 = vector.shape_cast %494 : vector<2x1x32xf32> to vector<2x32xf32>
    %c0_381 = arith.constant 0 : index
    %c0_382 = arith.constant 0 : index
    %496 = vector.load %arg3[%c0_381, %c0_382] : memref<32x4xf32, #tpu.memory_space<vmem>>, vector<32x4xf32>
    %cst_383 = arith.constant dense<0.000000e+00> : vector<2x4xf32>
    %497 = tpu.matmul %495, %496, %cst_383 {dimension_numbers = #tpu.dot_dimension_numbers<[1], [0], [0], [1], [0, 0, 1, 1], [], []>} : vector<2x32xf32>, vector<32x4xf32>, vector<2x4xf32> -> vector<2x4xf32>
    %c0_384 = arith.constant 0 : index
    %c0_385 = arith.constant 0 : index
    %498 = vector.load %arg4[%c0_384, %c0_385] : memref<1x4xf32, #tpu.memory_space<vmem>>, vector<1x4xf32>
    %499 = vector.broadcast %498 : vector<1x4xf32> to vector<2x4xf32>
    %500 = arith.addf %497, %499 : vector<2x4xf32>
    %501 = arith.negf %500 : vector<2x4xf32>
    %502 = math.exp %501 : vector<2x4xf32>
    %cst_386 = arith.constant 1.000000e+00 : f32
    %503 = vector.broadcast %cst_386 : f32 to vector<2x4xf32>
    %504 = arith.addf %503, %502 : vector<2x4xf32>
    %505 = arith.divf %503, %504 : vector<2x4xf32>
    %c0_387 = arith.constant 0 : index
    %c0_388 = arith.constant 0 : index
    %506 = vector.load %arg21[%c0_387, %c0_388] : memref<2x4xf32, #tpu.memory_space<vmem>>, vector<2x4xf32>
    tpu.vector_store %arg21[%c0_387, %c0_388], %505 {strides = array<i32>} : memref<2x4xf32, #tpu.memory_space<vmem>>, vector<2x4xf32>,
    return
  }
}

</mosaic_0001>

<llo_original>
// kernel: transformer_forward.1
$region0: #{transformer_forward.1}
  #allocation0 [shape = 'u32[]', space=smem, size = 0x4, offset = 0x4, fixed_abs, tag = 'smem constant byte address 0x4 - core index']
  #allocation1 [shape = 'u32[72,128]{1,0:T(1,128)}', space=vmem, size = 0x9000, scoped, tag = 'internal scratch']
  %s0 = inlined_call_operand.vmem [shape: f32[2,8,16], index: 0, kind: input, shape index: {}]
  %s1 = inlined_call_operand.vmem [shape: f32[16,32], index: 1, kind: input, shape index: {}]
  %s2 = inlined_call_operand.vmem [shape: f32[1,32], index: 2, kind: input, shape index: {}]
  %s3 = inlined_call_operand.vmem [shape: f32[32,4], index: 3, kind: input, shape index: {}]
  %s4 = inlined_call_operand.vmem [shape: f32[1,4], index: 4, kind: input, shape index: {}]
  %s5 = inlined_call_operand.vmem [shape: f32[2,4,32,8], index: 5, kind: input, shape index: {}]
  %s6 = inlined_call_operand.vmem [shape: f32[2,4,1,8], index: 6, kind: input, shape index: {}]
  %s7 = inlined_call_operand.vmem [shape: f32[2,4,32,8], index: 7, kind: input, shape index: {}]
  %s8 = inlined_call_operand.vmem [shape: f32[2,4,1,8], index: 8, kind: input, shape index: {}]
  %s9 = inlined_call_operand.vmem [shape: f32[2,4,32,8], index: 9, kind: input, shape index: {}]
  %s10 = inlined_call_operand.vmem [shape: f32[2,4,1,8], index: 10, kind: input, shape index: {}]
  %s11 = inlined_call_operand.vmem [shape: f32[2,4,8,32], index: 11, kind: input, shape index: {}]
  %s12 = inlined_call_operand.vmem [shape: f32[2,1,32], index: 12, kind: input, shape index: {}]
  %s13 = inlined_call_operand.vmem [shape: f32[2,32,2048], index: 13, kind: input, shape index: {}]
  %s14 = inlined_call_operand.vmem [shape: f32[2,1,2048], index: 14, kind: input, shape index: {}]
  %s15 = inlined_call_operand.vmem [shape: f32[2,2048,32], index: 15, kind: input, shape index: {}]
  %s16 = inlined_call_operand.vmem [shape: f32[2,1,32], index: 16, kind: input, shape index: {}]
  %s17 = inlined_call_operand.vmem [shape: f32[2,1,32], index: 17, kind: input, shape index: {}]
  %s18 = inlined_call_operand.vmem [shape: f32[2,1,32], index: 18, kind: input, shape index: {}]
  %s19 = inlined_call_operand.vmem [shape: f32[2,1,32], index: 19, kind: input, shape index: {}]
  %s20 = inlined_call_operand.vmem [shape: f32[2,1,32], index: 20, kind: input, shape index: {}]
  %s21 = inlined_call_operand.hbm [shape: f32[2,4], index: 21, kind: output, shape index: {}]
  %s22 = sld [smem:[#allocation0]]
  $region94: #{transformer_forward.1} parent=0
    _
  %s24 = ssub.s32 1, %s22
  %s25 = scalar_select 0, %s24, %s22
  $region1: #{transformer_forward.1} parent=0
    #allocation2 [shape = 'u8[1024]{0}', space=vmem, size = 0x400, scoped, tag = 'output window, operand 0, single buffered']
    #allocation3 [shape = 's32[1]{0}', space=sflag, size = 0x4, scoped, tag = 'scoped memory for transformer_forward.1']
    %26 = vsyncpa [#allocation3], 0
    // Predicated region
    $region2: #{transformer_forward.1} parent=1 // pred_check
      _
    $region3: #{transformer_forward.1} parent=1 // pred_check_branch
      %28 = sbr.rel (0) target = $region5
    $region4: #{transformer_forward.1} parent=1 // pred_region
      _
    $region5: #{transformer_forward.1} parent=1 // pred_fallthru
      _
    // Predicated region
    $region6: #{transformer_forward.1} parent=1 // pred_check
      _
    $region7: #{transformer_forward.1} parent=1 // pred_check_branch
      %30 = sbr.rel (0) target = $region9
    $region8: #{transformer_forward.1} parent=1 // pred_region
      _
    $region9: #{transformer_forward.1} parent=1 // pred_fallthru
      _
    // Predicated region
    $region10: #{transformer_forward.1} parent=1 // pred_check
      _
    $region11: #{transformer_forward.1} parent=1 // pred_check_branch
      %32 = sbr.rel (0) target = $region13
    $region12: #{transformer_forward.1} parent=1 // pred_region
      _
    $region13: #{transformer_forward.1} parent=1 // pred_fallthru
      _
    // Predicated region
    $region14: #{transformer_forward.1} parent=1 // pred_check
      _
    $region15: #{transformer_forward.1} parent=1 // pred_check_branch
      %34 = sbr.rel (0) target = $region17
    $region16: #{transformer_forward.1} parent=1 // pred_region
      _
    $region17: #{transformer_forward.1} parent=1 // pred_fallthru
      _
    // Predicated region
    $region18: #{transformer_forward.1} parent=1 // pred_check
      _
    $region19: #{transformer_forward.1} parent=1 // pred_check_branch
      %36 = sbr.rel (0) target = $region21
    $region20: #{transformer_forward.1} parent=1 // pred_region
      _
    $region21: #{transformer_forward.1} parent=1 // pred_fallthru
      _
    // Predicated region
    $region22: #{transformer_forward.1} parent=1 // pred_check
      _
    $region23: #{transformer_forward.1} parent=1 // pred_check_branch
      %38 = sbr.rel (0) target = $region25
    $region24: #{transformer_forward.1} parent=1 // pred_region
      _
    $region25: #{transformer_forward.1} parent=1 // pred_fallthru
      _
    // Predicated region
    $region26: #{transformer_forward.1} parent=1 // pred_check
      _
    $region27: #{transformer_forward.1} parent=1 // pred_check_branch
      %40 = sbr.rel (0) target = $region29
    $region28: #{transformer_forward.1} parent=1 // pred_region
      _
    $region29: #{transformer_forward.1} parent=1 // pred_fallthru
      _
    // Predicated region
    $region30: #{transformer_forward.1} parent=1 // pred_check
      _
    $region31: #{transformer_forward.1} parent=1 // pred_check_branch
      %42 = sbr.rel (0) target = $region33
    $region32: #{transformer_forward.1} parent=1 // pred_region
      _
    $region33: #{transformer_forward.1} parent=1 // pred_fallthru
      _
    // Predicated region
    $region34: #{transformer_forward.1} parent=1 // pred_check
      _
    $region35: #{transformer_forward.1} parent=1 // pred_check_branch
      %44 = sbr.rel (0) target = $region37
    $region36: #{transformer_forward.1} parent=1 // pred_region
      _
    $region37: #{transformer_forward.1} parent=1 // pred_fallthru
      _
    // Predicated region
    $region38: #{transformer_forward.1} parent=1 // pred_check
      _
    $region39: #{transformer_forward.1} parent=1 // pred_check_branch
      %46 = sbr.rel (0) target = $region41
    $region40: #{transformer_forward.1} parent=1 // pred_region
      _
    $region41: #{transformer_forward.1} parent=1 // pred_fallthru
      _
    // Predicated region
    $region42: #{transformer_forward.1} parent=1 // pred_check
      _
    $region43: #{transformer_forward.1} parent=1 // pred_check_branch
      %48 = sbr.rel (0) target = $region45
    $region44: #{transformer_forward.1} parent=1 // pred_region
      _
    $region45: #{transformer_forward.1} parent=1 // pred_fallthru
      _
    // Predicated region
    $region46: #{transformer_forward.1} parent=1 // pred_check
      _
    $region47: #{transformer_forward.1} parent=1 // pred_check_branch
      %50 = sbr.rel (0) target = $region49
    $region48: #{transformer_forward.1} parent=1 // pred_region
      _
    $region49: #{transformer_forward.1} parent=1 // pred_fallthru
      _
    // Predicated region
    $region50: #{transformer_forward.1} parent=1 // pred_check
      _
    $region51: #{transformer_forward.1} parent=1 // pred_check_branch
      %52 = sbr.rel (0) target = $region53
    $region52: #{transformer_forward.1} parent=1 // pred_region
      _
    $region53: #{transformer_forward.1} parent=1 // pred_fallthru
      _
    // Predicated region
    $region54: #{transformer_forward.1} parent=1 // pred_check
      _
    $region55: #{transformer_forward.1} parent=1 // pred_check_branch
      %54 = sbr.rel (0) target = $region57
    $region56: #{transformer_forward.1} parent=1 // pred_region
      _
    $region57: #{transformer_forward.1} parent=1 // pred_fallthru
      _
    // Predicated region
    $region58: #{transformer_forward.1} parent=1 // pred_check
      _
    $region59: #{transformer_forward.1} parent=1 // pred_check_branch
      %56 = sbr.rel (0) target = $region61
    $region60: #{transformer_forward.1} parent=1 // pred_region
      _
    $region61: #{transformer_forward.1} parent=1 // pred_fallthru
      _
    // Predicated region
    $region62: #{transformer_forward.1} parent=1 // pred_check
      _
    $region63: #{transformer_forward.1} parent=1 // pred_check_branch
      %58 = sbr.rel (0) target = $region65
    $region64: #{transformer_forward.1} parent=1 // pred_region
      _
    $region65: #{transformer_forward.1} parent=1 // pred_fallthru
      _
    // Predicated region
    $region66: #{transformer_forward.1} parent=1 // pred_check
      _
    $region67: #{transformer_forward.1} parent=1 // pred_check_branch
      %60 = sbr.rel (0) target = $region69
    $region68: #{transformer_forward.1} parent=1 // pred_region
      _
    $region69: #{transformer_forward.1} parent=1 // pred_fallthru
      _
    // Predicated region
    $region70: #{transformer_forward.1} parent=1 // pred_check
      _
    $region71: #{transformer_forward.1} parent=1 // pred_check_branch
      %62 = sbr.rel (0) target = $region73
    $region72: #{transformer_forward.1} parent=1 // pred_region
      _
    $region73: #{transformer_forward.1} parent=1 // pred_fallthru
      _
    // Predicated region
    $region74: #{transformer_forward.1} parent=1 // pred_check
      _
    $region75: #{transformer_forward.1} parent=1 // pred_check_branch
      %64 = sbr.rel (0) target = $region77
    $region76: #{transformer_forward.1} parent=1 // pred_region
      _
    $region77: #{transformer_forward.1} parent=1 // pred_fallthru
      _
    // Predicated region
    $region78: #{transformer_forward.1} parent=1 // pred_check
      _
    $region79: #{transformer_forward.1} parent=1 // pred_check_branch
      %66 = sbr.rel (0) target = $region81
    $region80: #{transformer_forward.1} parent=1 // pred_region
      _
    $region81: #{transformer_forward.1} parent=1 // pred_fallthru
      _
    // Predicated region
    $region82: #{transformer_forward.1} parent=1 // pred_check
      _
    $region83: #{transformer_forward.1} parent=1 // pred_check_branch
      %68 = sbr.rel (0) target = $region85
    $region84: #{transformer_forward.1} parent=1 // pred_region
      _
    $region85: #{transformer_forward.1} parent=1 // pred_fallthru
      _
    %v69 = vld [vmem:[%s0] sm:$0xff]
    %v70 = vld [vmem:[%s0 + $0x8] sm:$0xff]
    %v71 = vld [vmem:[%s1] sm:$0xff]
    %v72 = vld [vmem:[%s1 + $0x8] sm:$0xff]
    %v73 = vld [vmem:[%s2] sm:$0x1]
    %v75 = vperm.slane %v73, 0
    %vm77 = vcmask 130048
    %v79 = vsel %vm77, %v69, 0
    %v82 = vsel %vm77, %v70, 0
    %84 = vmatpush.msra.mxu0 0.0
    %85 = vmatpush.msra.mxu0 0.0
    %86 = vmatpush.msra.mxu0 0.0
    %87 = vmatpush.msra.mxu0 0.0
    %88 = vmatpush.msra.mxu0 0.0
    %89 = vmatpush.msra.mxu0 0.0
    %90 = vmatpush.msra.mxu0 0.0
    %91 = vmatpush.msra.mxu0 0.0
    %92 = vmatpush.msra.mxu0 0.0
    %93 = vmatpush.msra.mxu0 0.0
    %94 = vmatpush.msra.mxu0 0.0
    %95 = vmatpush.msra.mxu0 0.0
    %96 = vmatpush.msra.mxu0 0.0
    %97 = vmatpush.msra.mxu0 0.0
    %98 = vmatpush.msra.mxu0 %v72
    %99 = vmatpush.msra.mxu0 %v71
    %100 = vmatmul.f32.gmra.mxu0 %v79
    %v101 = vpop.f32.mrf.mxu0
    %v102 = vadd.f32 %v75, %v101
    %103 = vmatmul.f32.gmra.mxu0 %v82
    %v104 = vpop.f32.mrf.mxu0
    %v105 = vadd.f32 %v75, %v104
    %106 = vdwg.mxu0
    %v107 = vld [vmem:[%s5] sm:$0xff]
    %v108 = vld [vmem:[%s5 + $0x8] sm:$0xff]
    %v109 = vld [vmem:[%s5 + $0x10] sm:$0xff]
    %v110 = vld [vmem:[%s5 + $0x18] sm:$0xff]
    %v111 = vld [vmem:[%s6] sm:$0x1]
    %v113 = vperm.slane %v111, 0
    %vm115 = vcmask 261120
    %v117 = vsel %vm115, %v102, 0
    %v120 = vsel %vm115, %v105, 0
    %122 = vmatpush.msra.mxu0 0.0
    %123 = vmatpush.msra.mxu0 0.0
    %124 = vmatpush.msra.mxu0 0.0
    %125 = vmatpush.msra.mxu0 0.0
    %126 = vmatpush.msra.mxu0 0.0
    %127 = vmatpush.msra.mxu0 0.0
    %128 = vmatpush.msra.mxu0 0.0
    %129 = vmatpush.msra.mxu0 0.0
    %130 = vmatpush.msra.mxu0 0.0
    %131 = vmatpush.msra.mxu0 0.0
    %132 = vmatpush.msra.mxu0 0.0
    %133 = vmatpush.msra.mxu0 0.0
    %134 = vmatpush.msra.mxu0 %v110
    %135 = vmatpush.msra.mxu0 %v109
    %136 = vmatpush.msra.mxu0 %v108
    %137 = vmatpush.msra.mxu0 %v107
    %138 = vmatmul.f32.gmra.mxu0 %v117
    %v139 = vpop.f32.mrf.mxu0
    %v140 = vadd.f32 %v113, %v139
    %141 = vmatmul.f32.gmra.mxu0 %v120
    %v142 = vpop.f32.mrf.mxu0
    %v143 = vadd.f32 %v113, %v142
    %144 = vdwg.mxu0
    %v145 = vld [vmem:[%s7] sm:$0xff]
    %v146 = vld [vmem:[%s7 + $0x8] sm:$0xff]
    %v147 = vld [vmem:[%s7 + $0x10] sm:$0xff]
    %v148 = vld [vmem:[%s7 + $0x18] sm:$0xff]
    %v149 = vld [vmem:[%s8] sm:$0x1]
    %v151 = vperm.slane %v149, 0
    %153 = vmatpush.msra.mxu0 0.0
    %154 = vmatpush.msra.mxu0 0.0
    %155 = vmatpush.msra.mxu0 0.0
    %156 = vmatpush.msra.mxu0 0.0
    %157 = vmatpush.msra.mxu0 0.0
    %158 = vmatpush.msra.mxu0 0.0
    %159 = vmatpush.msra.mxu0 0.0
    %160 = vmatpush.msra.mxu0 0.0
    %161 = vmatpush.msra.mxu0 0.0
    %162 = vmatpush.msra.mxu0 0.0
    %163 = vmatpush.msra.mxu0 0.0
    %164 = vmatpush.msra.mxu0 0.0
    %165 = vmatpush.msra.mxu0 %v148
    %166 = vmatpush.msra.mxu0 %v147
    %167 = vmatpush.msra.mxu0 %v146
    %168 = vmatpush.msra.mxu0 %v145
    %169 = vmatmul.f32.gmra.mxu0 %v117
    %v170 = vpop.f32.mrf.mxu0
    %v171 = vadd.f32 %v151, %v170
    %172 = vmatmul.f32.gmra.mxu0 %v120
    %v173 = vpop.f32.mrf.mxu0
    %v174 = vadd.f32 %v151, %v173
    %175 = vdwg.mxu0
    %v176 = vld [vmem:[%s9] sm:$0xff]
    %v177 = vld [vmem:[%s9 + $0x8] sm:$0xff]
    %v178 = vld [vmem:[%s9 + $0x10] sm:$0xff]
    %v179 = vld [vmem:[%s9 + $0x18] sm:$0xff]
    %v180 = vld [vmem:[%s10] sm:$0x1]
    %v182 = vperm.slane %v180, 0
    %184 = vmatpush.msra.mxu0 0.0
    %185 = vmatpush.msra.mxu0 0.0
    %186 = vmatpush.msra.mxu0 0.0
    %187 = vmatpush.msra.mxu0 0.0
    %188 = vmatpush.msra.mxu0 0.0
    %189 = vmatpush.msra.mxu0 0.0
    %190 = vmatpush.msra.mxu0 0.0
    %191 = vmatpush.msra.mxu0 0.0
    %192 = vmatpush.msra.mxu0 0.0
    %193 = vmatpush.msra.mxu0 0.0
    %194 = vmatpush.msra.mxu0 0.0
    %195 = vmatpush.msra.mxu0 0.0
    %196 = vmatpush.msra.mxu0 %v179
    %197 = vmatpush.msra.mxu0 %v178
    %198 = vmatpush.msra.mxu0 %v177
    %199 = vmatpush.msra.mxu0 %v176
    %200 = vmatmul.f32.gmra.mxu0 %v117
    %v201 = vpop.f32.mrf.mxu0
    %v202 = vadd.f32 %v182, %v201
    %203 = vmatmul.f32.gmra.mxu0 %v120
    %v204 = vpop.f32.mrf.mxu0
    %v205 = vadd.f32 %v182, %v204
    %206 = vdwg.mxu0
    %vm207 = vcmask 64512
    %v209 = vsel %vm207, %v140, 0
    %v212 = vsel %vm207, %v171, 0
    %214 = vmatpush.xpose.msra.mxu0 0.0
    %215 = vmatpush.xpose.msra.mxu0 0.0
    %216 = vmatpush.xpose.msra.mxu0 0.0
    %217 = vmatpush.xpose.msra.mxu0 0.0
    %218 = vmatpush.xpose.msra.mxu0 0.0
    %219 = vmatpush.xpose.msra.mxu0 0.0
    %220 = vmatpush.xpose.msra.mxu0 0.0
    %221 = vmatpush.xpose.msra.mxu0 0.0
    %222 = vmatpush.xpose.msra.mxu0 0.0
    %223 = vmatpush.xpose.msra.mxu0 0.0
    %224 = vmatpush.xpose.msra.mxu0 0.0
    %225 = vmatpush.xpose.msra.mxu0 0.0
    %226 = vmatpush.xpose.msra.mxu0 0.0
    %227 = vmatpush.xpose.msra.mxu0 0.0
    %228 = vmatpush.xpose.msra.mxu0 0.0
    %229 = vmatpush.xpose.msra.mxu0 %v212
    %230 = vmatmul.f32.gmra.mxu0 %v209
    %v231 = vpop.f32.mrf.mxu0
    %v232 = vadd.f32 0.0, %v231
    %233 = vdwg.mxu0
    %v235 = vsel %vm207, %v143, 0
    %v238 = vsel %vm207, %v174, 0
    %240 = vmatpush.xpose.msra.mxu0 0.0
    %241 = vmatpush.xpose.msra.mxu0 0.0
    %242 = vmatpush.xpose.msra.mxu0 0.0
    %243 = vmatpush.xpose.msra.mxu0 0.0
    %244 = vmatpush.xpose.msra.mxu0 0.0
    %245 = vmatpush.xpose.msra.mxu0 0.0
    %246 = vmatpush.xpose.msra.mxu0 0.0
    %247 = vmatpush.xpose.msra.mxu0 0.0
    %248 = vmatpush.xpose.msra.mxu0 0.0
    %249 = vmatpush.xpose.msra.mxu0 0.0
    %250 = vmatpush.xpose.msra.mxu0 0.0
    %251 = vmatpush.xpose.msra.mxu0 0.0
    %252 = vmatpush.xpose.msra.mxu0 0.0
    %253 = vmatpush.xpose.msra.mxu0 0.0
    %254 = vmatpush.xpose.msra.mxu0 0.0
    %255 = vmatpush.xpose.msra.mxu0 %v238
    %256 = vmatmul.f32.gmra.mxu0 %v235
    %v257 = vpop.f32.mrf.mxu0
    %v258 = vadd.f32 0.0, %v257
    %259 = vdwg.mxu0
    %v260 = vmul.f32 %v232, 0.35355338
    %v261 = vmul.f32 %v258, 0.35355338
    %v262 = vsel %vm207, %v260, -inf
    %263 = vmax.xlane.f32.xlu0 %v262
    %v264 = vpop.xlane.xlu0 %263
    %v265 = vsel %vm207, %v261, -inf
    %266 = vmax.xlane.f32.xlu0 %v265
    %v267 = vpop.xlane.xlu0 %266
    %v268 = vsub.f32 %v260, %v264
    %v269 = vsub.f32 %v261, %v267
    %v270 = vmul.f32 %v268, 1.442695
    %v271 = vpow.pop %v270
    %v272 = vmul.f32 %v269, 1.442695
    %v273 = vpow.pop %v272
    %v274 = vsel %vm207, %v271, 0.0
    %275 = vadd.xlane.f32.xlu0 %v274
    %v276 = vpop.xlane.xlu0 %275
    %v277 = vsel %vm207, %v273, 0.0
    %278 = vadd.xlane.f32.xlu0 %v277
    %v279 = vpop.xlane.xlu0 %278
    %v280 = vrcp.pop %v276
    %v281 = vrcp.pop %v279
    %v282 = vmul.f32 %v271, %v280
    %v283 = vmul.f32 %v273, %v281
    %v285 = vsel %vm207, %v282, 0
    %287 = vmatpush.msra.mxu0 0.0
    %288 = vmatpush.msra.mxu0 0.0
    %289 = vmatpush.msra.mxu0 0.0
    %290 = vmatpush.msra.mxu0 0.0
    %291 = vmatpush.msra.mxu0 0.0
    %292 = vmatpush.msra.mxu0 0.0
    %293 = vmatpush.msra.mxu0 0.0
    %294 = vmatpush.msra.mxu0 0.0
    %295 = vmatpush.msra.mxu0 0.0
    %296 = vmatpush.msra.mxu0 0.0
    %297 = vmatpush.msra.mxu0 0.0
    %298 = vmatpush.msra.mxu0 0.0
    %299 = vmatpush.msra.mxu0 0.0
    %300 = vmatpush.msra.mxu0 0.0
    %301 = vmatpush.msra.mxu0 0.0
    %302 = vmatpush.msra.mxu0 %v202
    %303 = vmatmul.f32.gmra.mxu0 %v285
    %v304 = vpop.f32.mrf.mxu0
    %v305 = vadd.f32 0.0, %v304
    %306 = vdwg.mxu0
    %v308 = vsel %vm207, %v283, 0
    %310 = vmatpush.msra.mxu0 0.0
    %311 = vmatpush.msra.mxu0 0.0
    %312 = vmatpush.msra.mxu0 0.0
    %313 = vmatpush.msra.mxu0 0.0
    %314 = vmatpush.msra.mxu0 0.0
    %315 = vmatpush.msra.mxu0 0.0
    %316 = vmatpush.msra.mxu0 0.0
    %317 = vmatpush.msra.mxu0 0.0
    %318 = vmatpush.msra.mxu0 0.0
    %319 = vmatpush.msra.mxu0 0.0
    %320 = vmatpush.msra.mxu0 0.0
    %321 = vmatpush.msra.mxu0 0.0
    %322 = vmatpush.msra.mxu0 0.0
    %323 = vmatpush.msra.mxu0 0.0
    %324 = vmatpush.msra.mxu0 0.0
    %325 = vmatpush.msra.mxu0 %v205
    %326 = vmatmul.f32.gmra.mxu0 %v308
    %v327 = vpop.f32.mrf.mxu0
    %v328 = vadd.f32 0.0, %v327
    %329 = vdwg.mxu0
    %v330 = vld [vmem:[%s11] sm:$0xff]
    %s331 = scalar_lea.vmem %s5, 32
    %v332 = vld [vmem:[%s331] sm:$0xff]
    %v333 = vld [vmem:[%s331 + $0x8] sm:$0xff]
    %v334 = vld [vmem:[%s331 + $0x10] sm:$0xff]
    %v335 = vld [vmem:[%s331 + $0x18] sm:$0xff]
    %s336 = scalar_lea.vmem %s6, 1
    %v337 = vld [vmem:[%s336] sm:$0x1]
    %v339 = vperm.slane %v337, 0
    %341 = vmatpush.msra.mxu0 0.0
    %342 = vmatpush.msra.mxu0 0.0
    %343 = vmatpush.msra.mxu0 0.0
    %344 = vmatpush.msra.mxu0 0.0
    %345 = vmatpush.msra.mxu0 0.0
    %346 = vmatpush.msra.mxu0 0.0
    %347 = vmatpush.msra.mxu0 0.0
    %348 = vmatpush.msra.mxu0 0.0
    %349 = vmatpush.msra.mxu0 0.0
    %350 = vmatpush.msra.mxu0 0.0
    %351 = vmatpush.msra.mxu0 0.0
    %352 = vmatpush.msra.mxu0 0.0
    %353 = vmatpush.msra.mxu0 %v335
    %354 = vmatpush.msra.mxu0 %v334
    %355 = vmatpush.msra.mxu0 %v333
    %356 = vmatpush.msra.mxu0 %v332
    %357 = vmatmul.f32.gmra.mxu0 %v117
    %v358 = vpop.f32.mrf.mxu0
    %v359 = vadd.f32 %v339, %v358
    %360 = vmatmul.f32.gmra.mxu0 %v120
    %v361 = vpop.f32.mrf.mxu0
    %v362 = vadd.f32 %v339, %v361
    %363 = vdwg.mxu0
    %s364 = scalar_lea.vmem %s7, 32
    %v365 = vld [vmem:[%s364] sm:$0xff]
    %v366 = vld [vmem:[%s364 + $0x8] sm:$0xff]
    %v367 = vld [vmem:[%s364 + $0x10] sm:$0xff]
    %v368 = vld [vmem:[%s364 + $0x18] sm:$0xff]
    %s369 = scalar_lea.vmem %s8, 1
    %v370 = vld [vmem:[%s369] sm:$0x1]
    %v372 = vperm.slane %v370, 0
    %374 = vmatpush.msra.mxu0 0.0
    %375 = vmatpush.msra.mxu0 0.0
    %376 = vmatpush.msra.mxu0 0.0
    %377 = vmatpush.msra.mxu0 0.0
    %378 = vmatpush.msra.mxu0 0.0
    %379 = vmatpush.msra.mxu0 0.0
    %380 = vmatpush.msra.mxu0 0.0
    %381 = vmatpush.msra.mxu0 0.0
    %382 = vmatpush.msra.mxu0 0.0
    %383 = vmatpush.msra.mxu0 0.0
    %384 = vmatpush.msra.mxu0 0.0
    %385 = vmatpush.msra.mxu0 0.0
    %386 = vmatpush.msra.mxu0 %v368
    %387 = vmatpush.msra.mxu0 %v367
    %388 = vmatpush.msra.mxu0 %v366
    %389 = vmatpush.msra.mxu0 %v365
    %390 = vmatmul.f32.gmra.mxu0 %v117
    %v391 = vpop.f32.mrf.mxu0
    %v392 = vadd.f32 %v372, %v391
    %393 = vmatmul.f32.gmra.mxu0 %v120
    %v394 = vpop.f32.mrf.mxu0
    %v395 = vadd.f32 %v372, %v394
    %396 = vdwg.mxu0
    %s397 = scalar_lea.vmem %s9, 32
    %v398 = vld [vmem:[%s397] sm:$0xff]
    %v399 = vld [vmem:[%s397 + $0x8] sm:$0xff]
    %v400 = vld [vmem:[%s397 + $0x10] sm:$0xff]
    %v401 = vld [vmem:[%s397 + $0x18] sm:$0xff]
    %s402 = scalar_lea.vmem %s10, 1
    %v403 = vld [vmem:[%s402] sm:$0x1]
    %v405 = vperm.slane %v403, 0
    %407 = vmatpush.msra.mxu0 0.0
    %408 = vmatpush.msra.mxu0 0.0
    %409 = vmatpush.msra.mxu0 0.0
    %410 = vmatpush.msra.mxu0 0.0
    %411 = vmatpush.msra.mxu0 0.0
    %412 = vmatpush.msra.mxu0 0.0
    %413 = vmatpush.msra.mxu0 0.0
    %414 = vmatpush.msra.mxu0 0.0
    %415 = vmatpush.msra.mxu0 0.0
    %416 = vmatpush.msra.mxu0 0.0
    %417 = vmatpush.msra.mxu0 0.0
    %418 = vmatpush.msra.mxu0 0.0
    %419 = vmatpush.msra.mxu0 %v401
    %420 = vmatpush.msra.mxu0 %v400
    %421 = vmatpush.msra.mxu0 %v399
    %422 = vmatpush.msra.mxu0 %v398
    %423 = vmatmul.f32.gmra.mxu0 %v117
    %v424 = vpop.f32.mrf.mxu0
    %v425 = vadd.f32 %v405, %v424
    %426 = vmatmul.f32.gmra.mxu0 %v120
    %v427 = vpop.f32.mrf.mxu0
    %v428 = vadd.f32 %v405, %v427
    %429 = vdwg.mxu0
    %v431 = vsel %vm207, %v359, 0
    %v434 = vsel %vm207, %v392, 0
    %436 = vmatpush.xpose.msra.mxu0 0.0
    %437 = vmatpush.xpose.msra.mxu0 0.0
    %438 = vmatpush.xpose.msra.mxu0 0.0
    %439 = vmatpush.xpose.msra.mxu0 0.0
    %440 = vmatpush.xpose.msra.mxu0 0.0
    %441 = vmatpush.xpose.msra.mxu0 0.0
    %442 = vmatpush.xpose.msra.mxu0 0.0
    %443 = vmatpush.xpose.msra.mxu0 0.0
    %444 = vmatpush.xpose.msra.mxu0 0.0
    %445 = vmatpush.xpose.msra.mxu0 0.0
    %446 = vmatpush.xpose.msra.mxu0 0.0
    %447 = vmatpush.xpose.msra.mxu0 0.0
    %448 = vmatpush.xpose.msra.mxu0 0.0
    %449 = vmatpush.xpose.msra.mxu0 0.0
    %450 = vmatpush.xpose.msra.mxu0 0.0
    %451 = vmatpush.xpose.msra.mxu0 %v434
    %452 = vmatmul.f32.gmra.mxu0 %v431
    %v453 = vpop.f32.mrf.mxu0
    %v454 = vadd.f32 0.0, %v453
    %455 = vdwg.mxu0
    %v457 = vsel %vm207, %v362, 0
    %v460 = vsel %vm207, %v395, 0
    %462 = vmatpush.xpose.msra.mxu0 0.0
    %463 = vmatpush.xpose.msra.mxu0 0.0
    %464 = vmatpush.xpose.msra.mxu0 0.0
    %465 = vmatpush.xpose.msra.mxu0 0.0
    %466 = vmatpush.xpose.msra.mxu0 0.0
    %467 = vmatpush.xpose.msra.mxu0 0.0
    %468 = vmatpush.xpose.msra.mxu0 0.0
    %469 = vmatpush.xpose.msra.mxu0 0.0
    %470 = vmatpush.xpose.msra.mxu0 0.0
    %471 = vmatpush.xpose.msra.mxu0 0.0
    %472 = vmatpush.xpose.msra.mxu0 0.0
    %473 = vmatpush.xpose.msra.mxu0 0.0
    %474 = vmatpush.xpose.msra.mxu0 0.0
    %475 = vmatpush.xpose.msra.mxu0 0.0
    %476 = vmatpush.xpose.msra.mxu0 0.0
    %477 = vmatpush.xpose.msra.mxu0 %v460
    %478 = vmatmul.f32.gmra.mxu0 %v457
    %v479 = vpop.f32.mrf.mxu0
    %v480 = vadd.f32 0.0, %v479
    %481 = vdwg.mxu0
    %v482 = vmul.f32 %v454, 0.35355338
    %v483 = vmul.f32 %v480, 0.35355338
    %v484 = vsel %vm207, %v482, -inf
    %485 = vmax.xlane.f32.xlu0 %v484
    %v486 = vpop.xlane.xlu0 %485
    %v487 = vsel %vm207, %v483, -inf
    %488 = vmax.xlane.f32.xlu0 %v487
    %v489 = vpop.xlane.xlu0 %488
    %v490 = vsub.f32 %v482, %v486
    %v491 = vsub.f32 %v483, %v489
    %v492 = vmul.f32 %v490, 1.442695
    %v493 = vpow.pop %v492
    %v494 = vmul.f32 %v491, 1.442695
    %v495 = vpow.pop %v494
    %v496 = vsel %vm207, %v493, 0.0
    %497 = vadd.xlane.f32.xlu0 %v496
    %v498 = vpop.xlane.xlu0 %497
    %v499 = vsel %vm207, %v495, 0.0
    %500 = vadd.xlane.f32.xlu0 %v499
    %v501 = vpop.xlane.xlu0 %500
    %v502 = vrcp.pop %v498
    %v503 = vrcp.pop %v501
    %v504 = vmul.f32 %v493, %v502
    %v505 = vmul.f32 %v495, %v503
    %v507 = vsel %vm207, %v504, 0
    %509 = vmatpush.msra.mxu0 0.0
    %510 = vmatpush.msra.mxu0 0.0
    %511 = vmatpush.msra.mxu0 0.0
    %512 = vmatpush.msra.mxu0 0.0
    %513 = vmatpush.msra.mxu0 0.0
    %514 = vmatpush.msra.mxu0 0.0
    %515 = vmatpush.msra.mxu0 0.0
    %516 = vmatpush.msra.mxu0 0.0
    %517 = vmatpush.msra.mxu0 0.0
    %518 = vmatpush.msra.mxu0 0.0
    %519 = vmatpush.msra.mxu0 0.0
    %520 = vmatpush.msra.mxu0 0.0
    %521 = vmatpush.msra.mxu0 0.0
    %522 = vmatpush.msra.mxu0 0.0
    %523 = vmatpush.msra.mxu0 0.0
    %524 = vmatpush.msra.mxu0 %v425
    %525 = vmatmul.f32.gmra.mxu0 %v507
    %v526 = vpop.f32.mrf.mxu0
    %v527 = vadd.f32 0.0, %v526
    %528 = vdwg.mxu0
    %v530 = vsel %vm207, %v505, 0
    %532 = vmatpush.msra.mxu0 0.0
    %533 = vmatpush.msra.mxu0 0.0
    %534 = vmatpush.msra.mxu0 0.0
    %535 = vmatpush.msra.mxu0 0.0
    %536 = vmatpush.msra.mxu0 0.0
    %537 = vmatpush.msra.mxu0 0.0
    %538 = vmatpush.msra.mxu0 0.0
    %539 = vmatpush.msra.mxu0 0.0
    %540 = vmatpush.msra.mxu0 0.0
    %541 = vmatpush.msra.mxu0 0.0
    %542 = vmatpush.msra.mxu0 0.0
    %543 = vmatpush.msra.mxu0 0.0
    %544 = vmatpush.msra.mxu0 0.0
    %545 = vmatpush.msra.mxu0 0.0
    %546 = vmatpush.msra.mxu0 0.0
    %547 = vmatpush.msra.mxu0 %v428
    %548 = vmatmul.f32.gmra.mxu0 %v530
    %v549 = vpop.f32.mrf.mxu0
    %v550 = vadd.f32 0.0, %v549
    %551 = vdwg.mxu0
    %s552 = scalar_lea.vmem %s11, 8
    %v553 = vld [vmem:[%s552] sm:$0xff]
    %v555 = vsel %vm207, %v527, 0
    %v558 = vsel %vm207, %v550, 0
    %560 = vmatpush.msra.mxu0 0.0
    %561 = vmatpush.msra.mxu0 0.0
    %562 = vmatpush.msra.mxu0 0.0
    %563 = vmatpush.msra.mxu0 0.0
    %564 = vmatpush.msra.mxu0 0.0
    %565 = vmatpush.msra.mxu0 0.0
    %566 = vmatpush.msra.mxu0 0.0
    %567 = vmatpush.msra.mxu0 0.0
    %568 = vmatpush.msra.mxu0 0.0
    %569 = vmatpush.msra.mxu0 0.0
    %570 = vmatpush.msra.mxu0 0.0
    %571 = vmatpush.msra.mxu0 0.0
    %572 = vmatpush.msra.mxu0 0.0
    %573 = vmatpush.msra.mxu0 0.0
    %574 = vmatpush.msra.mxu0 0.0
    %575 = vmatpush.msra.mxu0 %v553
    %576 = vmatmul.f32.gmra.mxu0 %v555
    %v577 = vpop.f32.mrf.mxu0
    %v578 = vadd.f32 0.0, %v577
    %579 = vmatmul.f32.gmra.mxu0 %v558
    %v580 = vpop.f32.mrf.mxu0
    %v581 = vadd.f32 0.0, %v580
    %582 = vdwg.mxu0
    %v584 = vsel %vm207, %v305, 0
    %v587 = vsel %vm207, %v328, 0
    %589 = vmatpush.msra.mxu0 0.0
    %590 = vmatpush.msra.mxu0 0.0
    %591 = vmatpush.msra.mxu0 0.0
    %592 = vmatpush.msra.mxu0 0.0
    %593 = vmatpush.msra.mxu0 0.0
    %594 = vmatpush.msra.mxu0 0.0
    %595 = vmatpush.msra.mxu0 0.0
    %596 = vmatpush.msra.mxu0 0.0
    %597 = vmatpush.msra.mxu0 0.0
    %598 = vmatpush.msra.mxu0 0.0
    %599 = vmatpush.msra.mxu0 0.0
    %600 = vmatpush.msra.mxu0 0.0
    %601 = vmatpush.msra.mxu0 0.0
    %602 = vmatpush.msra.mxu0 0.0
    %603 = vmatpush.msra.mxu0 0.0
    %604 = vmatpush.msra.mxu0 %v330
    %605 = vmatmul.f32.gmra.mxu0 %v584
    %v606 = vpop.f32.mrf.mxu0
    %v607 = vadd.f32 %v578, %v606
    %608 = vmatmul.f32.gmra.mxu0 %v587
    %v609 = vpop.f32.mrf.mxu0
    %v610 = vadd.f32 %v581, %v609
    %611 = vdwg.mxu0
    %s612 = scalar_lea.vmem %s5, 64
    %v613 = vld [vmem:[%s612] sm:$0xff]
    %v614 = vld [vmem:[%s612 + $0x8] sm:$0xff]
    %v615 = vld [vmem:[%s612 + $0x10] sm:$0xff]
    %v616 = vld [vmem:[%s612 + $0x18] sm:$0xff]
    %s617 = scalar_lea.vmem %s6, 2
    %v618 = vld [vmem:[%s617] sm:$0x1]
    %v620 = vperm.slane %v618, 0
    %622 = vmatpush.msra.mxu0 0.0
    %623 = vmatpush.msra.mxu0 0.0
    %624 = vmatpush.msra.mxu0 0.0
    %625 = vmatpush.msra.mxu0 0.0
    %626 = vmatpush.msra.mxu0 0.0
    %627 = vmatpush.msra.mxu0 0.0
    %628 = vmatpush.msra.mxu0 0.0
    %629 = vmatpush.msra.mxu0 0.0
    %630 = vmatpush.msra.mxu0 0.0
    %631 = vmatpush.msra.mxu0 0.0
    %632 = vmatpush.msra.mxu0 0.0
    %633 = vmatpush.msra.mxu0 0.0
    %634 = vmatpush.msra.mxu0 %v616
    %635 = vmatpush.msra.mxu0 %v615
    %636 = vmatpush.msra.mxu0 %v614
    %637 = vmatpush.msra.mxu0 %v613
    %638 = vmatmul.f32.gmra.mxu0 %v117
    %v639 = vpop.f32.mrf.mxu0
    %v640 = vadd.f32 %v620, %v639
    %641 = vmatmul.f32.gmra.mxu0 %v120
    %v642 = vpop.f32.mrf.mxu0
    %v643 = vadd.f32 %v620, %v642
    %644 = vdwg.mxu0
    %s645 = scalar_lea.vmem %s7, 64
    %v646 = vld [vmem:[%s645] sm:$0xff]
    %v647 = vld [vmem:[%s645 + $0x8] sm:$0xff]
    %v648 = vld [vmem:[%s645 + $0x10] sm:$0xff]
    %v649 = vld [vmem:[%s645 + $0x18] sm:$0xff]
    %s650 = scalar_lea.vmem %s8, 2
    %v651 = vld [vmem:[%s650] sm:$0x1]
    %v653 = vperm.slane %v651, 0
    %655 = vmatpush.msra.mxu0 0.0
    %656 = vmatpush.msra.mxu0 0.0
    %657 = vmatpush.msra.mxu0 0.0
    %658 = vmatpush.msra.mxu0 0.0
    %659 = vmatpush.msra.mxu0 0.0
    %660 = vmatpush.msra.mxu0 0.0
    %661 = vmatpush.msra.mxu0 0.0
    %662 = vmatpush.msra.mxu0 0.0
    %663 = vmatpush.msra.mxu0 0.0
    %664 = vmatpush.msra.mxu0 0.0
    %665 = vmatpush.msra.mxu0 0.0
    %666 = vmatpush.msra.mxu0 0.0
    %667 = vmatpush.msra.mxu0 %v649
    %668 = vmatpush.msra.mxu0 %v648
    %669 = vmatpush.msra.mxu0 %v647
    %670 = vmatpush.msra.mxu0 %v646
    %671 = vmatmul.f32.gmra.mxu0 %v117
    %v672 = vpop.f32.mrf.mxu0
    %v673 = vadd.f32 %v653, %v672
    %674 = vmatmul.f32.gmra.mxu0 %v120
    %v675 = vpop.f32.mrf.mxu0
    %v676 = vadd.f32 %v653, %v675
    %677 = vdwg.mxu0
    %s678 = scalar_lea.vmem %s9, 64
    %v679 = vld [vmem:[%s678] sm:$0xff]
    %v680 = vld [vmem:[%s678 + $0x8] sm:$0xff]
    %v681 = vld [vmem:[%s678 + $0x10] sm:$0xff]
    %v682 = vld [vmem:[%s678 + $0x18] sm:$0xff]
    %s683 = scalar_lea.vmem %s10, 2
    %v684 = vld [vmem:[%s683] sm:$0x1]
    %v686 = vperm.slane %v684, 0
    %688 = vmatpush.msra.mxu0 0.0
    %689 = vmatpush.msra.mxu0 0.0
    %690 = vmatpush.msra.mxu0 0.0
    %691 = vmatpush.msra.mxu0 0.0
    %692 = vmatpush.msra.mxu0 0.0
    %693 = vmatpush.msra.mxu0 0.0
    %694 = vmatpush.msra.mxu0 0.0
    %695 = vmatpush.msra.mxu0 0.0
    %696 = vmatpush.msra.mxu0 0.0
    %697 = vmatpush.msra.mxu0 0.0
    %698 = vmatpush.msra.mxu0 0.0
    %699 = vmatpush.msra.mxu0 0.0
    %700 = vmatpush.msra.mxu0 %v682
    %701 = vmatpush.msra.mxu0 %v681
    %702 = vmatpush.msra.mxu0 %v680
    %703 = vmatpush.msra.mxu0 %v679
    %704 = vmatmul.f32.gmra.mxu0 %v117
    %v705 = vpop.f32.mrf.mxu0
    %v706 = vadd.f32 %v686, %v705
    %707 = vmatmul.f32.gmra.mxu0 %v120
    %v708 = vpop.f32.mrf.mxu0
    %v709 = vadd.f32 %v686, %v708
    %710 = vdwg.mxu0
    %v712 = vsel %vm207, %v640, 0
    %v715 = vsel %vm207, %v673, 0
    %717 = vmatpush.xpose.msra.mxu0 0.0
    %718 = vmatpush.xpose.msra.mxu0 0.0
    %719 = vmatpush.xpose.msra.mxu0 0.0
    %720 = vmatpush.xpose.msra.mxu0 0.0
    %721 = vmatpush.xpose.msra.mxu0 0.0
    %722 = vmatpush.xpose.msra.mxu0 0.0
    %723 = vmatpush.xpose.msra.mxu0 0.0
    %724 = vmatpush.xpose.msra.mxu0 0.0
    %725 = vmatpush.xpose.msra.mxu0 0.0
    %726 = vmatpush.xpose.msra.mxu0 0.0
    %727 = vmatpush.xpose.msra.mxu0 0.0
    %728 = vmatpush.xpose.msra.mxu0 0.0
    %729 = vmatpush.xpose.msra.mxu0 0.0
    %730 = vmatpush.xpose.msra.mxu0 0.0
    %731 = vmatpush.xpose.msra.mxu0 0.0
    %732 = vmatpush.xpose.msra.mxu0 %v715
    %733 = vmatmul.f32.gmra.mxu0 %v712
    %v734 = vpop.f32.mrf.mxu0
    %v735 = vadd.f32 0.0, %v734
    %736 = vdwg.mxu0
    %v738 = vsel %vm207, %v643, 0
    %v741 = vsel %vm207, %v676, 0
    %743 = vmatpush.xpose.msra.mxu0 0.0
    %744 = vmatpush.xpose.msra.mxu0 0.0
    %745 = vmatpush.xpose.msra.mxu0 0.0
    %746 = vmatpush.xpose.msra.mxu0 0.0
    %747 = vmatpush.xpose.msra.mxu0 0.0
    %748 = vmatpush.xpose.msra.mxu0 0.0
    %749 = vmatpush.xpose.msra.mxu0 0.0
    %750 = vmatpush.xpose.msra.mxu0 0.0
    %751 = vmatpush.xpose.msra.mxu0 0.0
    %752 = vmatpush.xpose.msra.mxu0 0.0
    %753 = vmatpush.xpose.msra.mxu0 0.0
    %754 = vmatpush.xpose.msra.mxu0 0.0
    %755 = vmatpush.xpose.msra.mxu0 0.0
    %756 = vmatpush.xpose.msra.mxu0 0.0
    %757 = vmatpush.xpose.msra.mxu0 0.0
    %758 = vmatpush.xpose.msra.mxu0 %v741
    %759 = vmatmul.f32.gmra.mxu0 %v738
    %v760 = vpop.f32.mrf.mxu0
    %v761 = vadd.f32 0.0, %v760
    %762 = vdwg.mxu0
    %v763 = vmul.f32 %v735, 0.35355338
    %v764 = vmul.f32 %v761, 0.35355338
    %v765 = vsel %vm207, %v763, -inf
    %766 = vmax.xlane.f32.xlu0 %v765
    %v767 = vpop.xlane.xlu0 %766
    %v768 = vsel %vm207, %v764, -inf
    %769 = vmax.xlane.f32.xlu0 %v768
    %v770 = vpop.xlane.xlu0 %769
    %v771 = vsub.f32 %v763, %v767
    %v772 = vsub.f32 %v764, %v770
    %v773 = vmul.f32 %v771, 1.442695
    %v774 = vpow.pop %v773
    %v775 = vmul.f32 %v772, 1.442695
    %v776 = vpow.pop %v775
    %v777 = vsel %vm207, %v774, 0.0
    %778 = vadd.xlane.f32.xlu0 %v777
    %v779 = vpop.xlane.xlu0 %778
    %v780 = vsel %vm207, %v776, 0.0
    %781 = vadd.xlane.f32.xlu0 %v780
    %v782 = vpop.xlane.xlu0 %781
    %v783 = vrcp.pop %v779
    %v784 = vrcp.pop %v782
    %v785 = vmul.f32 %v774, %v783
    %v786 = vmul.f32 %v776, %v784
    %v788 = vsel %vm207, %v785, 0
    %790 = vmatpush.msra.mxu0 0.0
    %791 = vmatpush.msra.mxu0 0.0
    %792 = vmatpush.msra.mxu0 0.0
    %793 = vmatpush.msra.mxu0 0.0
    %794 = vmatpush.msra.mxu0 0.0
    %795 = vmatpush.msra.mxu0 0.0
    %796 = vmatpush.msra.mxu0 0.0
    %797 = vmatpush.msra.mxu0 0.0
    %798 = vmatpush.msra.mxu0 0.0
    %799 = vmatpush.msra.mxu0 0.0
    %800 = vmatpush.msra.mxu0 0.0
    %801 = vmatpush.msra.mxu0 0.0
    %802 = vmatpush.msra.mxu0 0.0
    %803 = vmatpush.msra.mxu0 0.0
    %804 = vmatpush.msra.mxu0 0.0
    %805 = vmatpush.msra.mxu0 %v706
    %806 = vmatmul.f32.gmra.mxu0 %v788
    %v807 = vpop.f32.mrf.mxu0
    %v808 = vadd.f32 0.0, %v807
    %809 = vdwg.mxu0
    %v811 = vsel %vm207, %v786, 0
    %813 = vmatpush.msra.mxu0 0.0
    %814 = vmatpush.msra.mxu0 0.0
    %815 = vmatpush.msra.mxu0 0.0
    %816 = vmatpush.msra.mxu0 0.0
    %817 = vmatpush.msra.mxu0 0.0
    %818 = vmatpush.msra.mxu0 0.0
    %819 = vmatpush.msra.mxu0 0.0
    %820 = vmatpush.msra.mxu0 0.0
    %821 = vmatpush.msra.mxu0 0.0
    %822 = vmatpush.msra.mxu0 0.0
    %823 = vmatpush.msra.mxu0 0.0
    %824 = vmatpush.msra.mxu0 0.0
    %825 = vmatpush.msra.mxu0 0.0
    %826 = vmatpush.msra.mxu0 0.0
    %827 = vmatpush.msra.mxu0 0.0
    %828 = vmatpush.msra.mxu0 %v709
    %829 = vmatmul.f32.gmra.mxu0 %v811
    %v830 = vpop.f32.mrf.mxu0
    %v831 = vadd.f32 0.0, %v830
    %832 = vdwg.mxu0
    %s833 = scalar_lea.vmem %s11, 16
    %v834 = vld [vmem:[%s833] sm:$0xff]
    %v836 = vsel %vm207, %v808, 0
    %v839 = vsel %vm207, %v831, 0
    %841 = vmatpush.msra.mxu0 0.0
    %842 = vmatpush.msra.mxu0 0.0
    %843 = vmatpush.msra.mxu0 0.0
    %844 = vmatpush.msra.mxu0 0.0
    %845 = vmatpush.msra.mxu0 0.0
    %846 = vmatpush.msra.mxu0 0.0
    %847 = vmatpush.msra.mxu0 0.0
    %848 = vmatpush.msra.mxu0 0.0
    %849 = vmatpush.msra.mxu0 0.0
    %850 = vmatpush.msra.mxu0 0.0
    %851 = vmatpush.msra.mxu0 0.0
    %852 = vmatpush.msra.mxu0 0.0
    %853 = vmatpush.msra.mxu0 0.0
    %854 = vmatpush.msra.mxu0 0.0
    %855 = vmatpush.msra.mxu0 0.0
    %856 = vmatpush.msra.mxu0 %v834
    %857 = vmatmul.f32.gmra.mxu0 %v836
    %v858 = vpop.f32.mrf.mxu0
    %v859 = vadd.f32 0.0, %v858
    %860 = vmatmul.f32.gmra.mxu0 %v839
    %v861 = vpop.f32.mrf.mxu0
    %v862 = vadd.f32 0.0, %v861
    %863 = vdwg.mxu0
    %v864 = vadd.f32 %v607, %v859
    %v865 = vadd.f32 %v610, %v862
    %s866 = scalar_lea.vmem %s5, 96
    %v867 = vld [vmem:[%s866] sm:$0xff]
    %v868 = vld [vmem:[%s866 + $0x8] sm:$0xff]
    %v869 = vld [vmem:[%s866 + $0x10] sm:$0xff]
    %v870 = vld [vmem:[%s866 + $0x18] sm:$0xff]
    %s871 = scalar_lea.vmem %s6, 3
    %v872 = vld [vmem:[%s871] sm:$0x1]
    %v874 = vperm.slane %v872, 0
    %876 = vmatpush.msra.mxu0 0.0
    %877 = vmatpush.msra.mxu0 0.0
    %878 = vmatpush.msra.mxu0 0.0
    %879 = vmatpush.msra.mxu0 0.0
    %880 = vmatpush.msra.mxu0 0.0
    %881 = vmatpush.msra.mxu0 0.0
    %882 = vmatpush.msra.mxu0 0.0
    %883 = vmatpush.msra.mxu0 0.0
    %884 = vmatpush.msra.mxu0 0.0
    %885 = vmatpush.msra.mxu0 0.0
    %886 = vmatpush.msra.mxu0 0.0
    %887 = vmatpush.msra.mxu0 0.0
    %888 = vmatpush.msra.mxu0 %v870
    %889 = vmatpush.msra.mxu0 %v869
    %890 = vmatpush.msra.mxu0 %v868
    %891 = vmatpush.msra.mxu0 %v867
    %892 = vmatmul.f32.gmra.mxu0 %v117
    %v893 = vpop.f32.mrf.mxu0
    %v894 = vadd.f32 %v874, %v893
    %895 = vmatmul.f32.gmra.mxu0 %v120
    %v896 = vpop.f32.mrf.mxu0
    %v897 = vadd.f32 %v874, %v896
    %898 = vdwg.mxu0
    %s899 = scalar_lea.vmem %s7, 96
    %v900 = vld [vmem:[%s899] sm:$0xff]
    %v901 = vld [vmem:[%s899 + $0x8] sm:$0xff]
    %v902 = vld [vmem:[%s899 + $0x10] sm:$0xff]
    %v903 = vld [vmem:[%s899 + $0x18] sm:$0xff]
    %s904 = scalar_lea.vmem %s8, 3
    %v905 = vld [vmem:[%s904] sm:$0x1]
    %v907 = vperm.slane %v905, 0
    %909 = vmatpush.msra.mxu0 0.0
    %910 = vmatpush.msra.mxu0 0.0
    %911 = vmatpush.msra.mxu0 0.0
    %912 = vmatpush.msra.mxu0 0.0
    %913 = vmatpush.msra.mxu0 0.0
    %914 = vmatpush.msra.mxu0 0.0
    %915 = vmatpush.msra.mxu0 0.0
    %916 = vmatpush.msra.mxu0 0.0
    %917 = vmatpush.msra.mxu0 0.0
    %918 = vmatpush.msra.mxu0 0.0
    %919 = vmatpush.msra.mxu0 0.0
    %920 = vmatpush.msra.mxu0 0.0
    %921 = vmatpush.msra.mxu0 %v903
    %922 = vmatpush.msra.mxu0 %v902
    %923 = vmatpush.msra.mxu0 %v901
    %924 = vmatpush.msra.mxu0 %v900
    %925 = vmatmul.f32.gmra.mxu0 %v117
    %v926 = vpop.f32.mrf.mxu0
    %v927 = vadd.f32 %v907, %v926
    %928 = vmatmul.f32.gmra.mxu0 %v120
    %v929 = vpop.f32.mrf.mxu0
    %v930 = vadd.f32 %v907, %v929
    %931 = vdwg.mxu0
    %s932 = scalar_lea.vmem %s9, 96
    %v933 = vld [vmem:[%s932] sm:$0xff]
    %v934 = vld [vmem:[%s932 + $0x8] sm:$0xff]
    %v935 = vld [vmem:[%s932 + $0x10] sm:$0xff]
    %v936 = vld [vmem:[%s932 + $0x18] sm:$0xff]
    %s937 = scalar_lea.vmem %s10, 3
    %v938 = vld [vmem:[%s937] sm:$0x1]
    %v940 = vperm.slane %v938, 0
    %942 = vmatpush.msra.mxu0 0.0
    %943 = vmatpush.msra.mxu0 0.0
    %944 = vmatpush.msra.mxu0 0.0
    %945 = vmatpush.msra.mxu0 0.0
    %946 = vmatpush.msra.mxu0 0.0
    %947 = vmatpush.msra.mxu0 0.0
    %948 = vmatpush.msra.mxu0 0.0
    %949 = vmatpush.msra.mxu0 0.0
    %950 = vmatpush.msra.mxu0 0.0
    %951 = vmatpush.msra.mxu0 0.0
    %952 = vmatpush.msra.mxu0 0.0
    %953 = vmatpush.msra.mxu0 0.0
    %954 = vmatpush.msra.mxu0 %v936
    %955 = vmatpush.msra.mxu0 %v935
    %956 = vmatpush.msra.mxu0 %v934
    %957 = vmatpush.msra.mxu0 %v933
    %958 = vmatmul.f32.gmra.mxu0 %v117
    %v959 = vpop.f32.mrf.mxu0
    %v960 = vadd.f32 %v940, %v959
    %961 = vmatmul.f32.gmra.mxu0 %v120
    %v962 = vpop.f32.mrf.mxu0
    %v963 = vadd.f32 %v940, %v962
    %964 = vdwg.mxu0
    %v966 = vsel %vm207, %v894, 0
    %v969 = vsel %vm207, %v927, 0
    %971 = vmatpush.xpose.msra.mxu0 0.0
    %972 = vmatpush.xpose.msra.mxu0 0.0
    %973 = vmatpush.xpose.msra.mxu0 0.0
    %974 = vmatpush.xpose.msra.mxu0 0.0
    %975 = vmatpush.xpose.msra.mxu0 0.0
    %976 = vmatpush.xpose.msra.mxu0 0.0
    %977 = vmatpush.xpose.msra.mxu0 0.0
    %978 = vmatpush.xpose.msra.mxu0 0.0
    %979 = vmatpush.xpose.msra.mxu0 0.0
    %980 = vmatpush.xpose.msra.mxu0 0.0
    %981 = vmatpush.xpose.msra.mxu0 0.0
    %982 = vmatpush.xpose.msra.mxu0 0.0
    %983 = vmatpush.xpose.msra.mxu0 0.0
    %984 = vmatpush.xpose.msra.mxu0 0.0
    %985 = vmatpush.xpose.msra.mxu0 0.0
    %986 = vmatpush.xpose.msra.mxu0 %v969
    %987 = vmatmul.f32.gmra.mxu0 %v966
    %v988 = vpop.f32.mrf.mxu0
    %v989 = vadd.f32 0.0, %v988
    %990 = vdwg.mxu0
    %v992 = vsel %vm207, %v897, 0
    %v995 = vsel %vm207, %v930, 0
    %997 = vmatpush.xpose.msra.mxu0 0.0
    %998 = vmatpush.xpose.msra.mxu0 0.0
    %999 = vmatpush.xpose.msra.mxu0 0.0
    %1000 = vmatpush.xpose.msra.mxu0 0.0
    %1001 = vmatpush.xpose.msra.mxu0 0.0
    %1002 = vmatpush.xpose.msra.mxu0 0.0
    %1003 = vmatpush.xpose.msra.mxu0 0.0
    %1004 = vmatpush.xpose.msra.mxu0 0.0
    %1005 = vmatpush.xpose.msra.mxu0 0.0
    %1006 = vmatpush.xpose.msra.mxu0 0.0
    %1007 = vmatpush.xpose.msra.mxu0 0.0
    %1008 = vmatpush.xpose.msra.mxu0 0.0
    %1009 = vmatpush.xpose.msra.mxu0 0.0
    %1010 = vmatpush.xpose.msra.mxu0 0.0
    %1011 = vmatpush.xpose.msra.mxu0 0.0
    %1012 = vmatpush.xpose.msra.mxu0 %v995
    %1013 = vmatmul.f32.gmra.mxu0 %v992
    %v1014 = vpop.f32.mrf.mxu0
    %v1015 = vadd.f32 0.0, %v1014
    %1016 = vdwg.mxu0
    %v1017 = vmul.f32 %v989, 0.35355338
    %v1018 = vmul.f32 %v1015, 0.35355338
    %v1019 = vsel %vm207, %v1017, -inf
    %1020 = vmax.xlane.f32.xlu0 %v1019
    %v1021 = vpop.xlane.xlu0 %1020
    %v1022 = vsel %vm207, %v1018, -inf
    %1023 = vmax.xlane.f32.xlu0 %v1022
    %v1024 = vpop.xlane.xlu0 %1023
    %v1025 = vsub.f32 %v1017, %v1021
    %v1026 = vsub.f32 %v1018, %v1024
    %v1027 = vmul.f32 %v1025, 1.442695
    %v1028 = vpow.pop %v1027
    %v1029 = vmul.f32 %v1026, 1.442695
    %v1030 = vpow.pop %v1029
    %v1031 = vsel %vm207, %v1028, 0.0
    %1032 = vadd.xlane.f32.xlu0 %v1031
    %v1033 = vpop.xlane.xlu0 %1032
    %v1034 = vsel %vm207, %v1030, 0.0
    %1035 = vadd.xlane.f32.xlu0 %v1034
    %v1036 = vpop.xlane.xlu0 %1035
    %v1037 = vrcp.pop %v1033
    %v1038 = vrcp.pop %v1036
    %v1039 = vmul.f32 %v1028, %v1037
    %v1040 = vmul.f32 %v1030, %v1038
    %v1042 = vsel %vm207, %v1039, 0
    %1044 = vmatpush.msra.mxu0 0.0
    %1045 = vmatpush.msra.mxu0 0.0
    %1046 = vmatpush.msra.mxu0 0.0
    %1047 = vmatpush.msra.mxu0 0.0
    %1048 = vmatpush.msra.mxu0 0.0
    %1049 = vmatpush.msra.mxu0 0.0
    %1050 = vmatpush.msra.mxu0 0.0
    %1051 = vmatpush.msra.mxu0 0.0
    %1052 = vmatpush.msra.mxu0 0.0
    %1053 = vmatpush.msra.mxu0 0.0
    %1054 = vmatpush.msra.mxu0 0.0
    %1055 = vmatpush.msra.mxu0 0.0
    %1056 = vmatpush.msra.mxu0 0.0
    %1057 = vmatpush.msra.mxu0 0.0
    %1058 = vmatpush.msra.mxu0 0.0
    %1059 = vmatpush.msra.mxu0 %v960
    %1060 = vmatmul.f32.gmra.mxu0 %v1042
    %v1061 = vpop.f32.mrf.mxu0
    %v1062 = vadd.f32 0.0, %v1061
    %1063 = vdwg.mxu0
    %v1065 = vsel %vm207, %v1040, 0
    %1067 = vmatpush.msra.mxu0 0.0
    %1068 = vmatpush.msra.mxu0 0.0
    %1069 = vmatpush.msra.mxu0 0.0
    %1070 = vmatpush.msra.mxu0 0.0
    %1071 = vmatpush.msra.mxu0 0.0
    %1072 = vmatpush.msra.mxu0 0.0
    %1073 = vmatpush.msra.mxu0 0.0
    %1074 = vmatpush.msra.mxu0 0.0
    %1075 = vmatpush.msra.mxu0 0.0
    %1076 = vmatpush.msra.mxu0 0.0
    %1077 = vmatpush.msra.mxu0 0.0
    %1078 = vmatpush.msra.mxu0 0.0
    %1079 = vmatpush.msra.mxu0 0.0
    %1080 = vmatpush.msra.mxu0 0.0
    %1081 = vmatpush.msra.mxu0 0.0
    %1082 = vmatpush.msra.mxu0 %v963
    %1083 = vmatmul.f32.gmra.mxu0 %v1065
    %v1084 = vpop.f32.mrf.mxu0
    %v1085 = vadd.f32 0.0, %v1084
    %1086 = vdwg.mxu0
    %s1087 = scalar_lea.vmem %s11, 24
    %v1088 = vld [vmem:[%s1087] sm:$0xff]
    %v1090 = vsel %vm207, %v1062, 0
    %v1093 = vsel %vm207, %v1085, 0
    %1095 = vmatpush.msra.mxu0 0.0
    %1096 = vmatpush.msra.mxu0 0.0
    %1097 = vmatpush.msra.mxu0 0.0
    %1098 = vmatpush.msra.mxu0 0.0
    %1099 = vmatpush.msra.mxu0 0.0
    %1100 = vmatpush.msra.mxu0 0.0
    %1101 = vmatpush.msra.mxu0 0.0
    %1102 = vmatpush.msra.mxu0 0.0
    %1103 = vmatpush.msra.mxu0 0.0
    %1104 = vmatpush.msra.mxu0 0.0
    %1105 = vmatpush.msra.mxu0 0.0
    %1106 = vmatpush.msra.mxu0 0.0
    %1107 = vmatpush.msra.mxu0 0.0
    %1108 = vmatpush.msra.mxu0 0.0
    %1109 = vmatpush.msra.mxu0 0.0
    %1110 = vmatpush.msra.mxu0 %v1088
    %1111 = vmatmul.f32.gmra.mxu0 %v1090
    %v1112 = vpop.f32.mrf.mxu0
    %v1113 = vadd.f32 0.0, %v1112
    %1114 = vmatmul.f32.gmra.mxu0 %v1093
    %v1115 = vpop.f32.mrf.mxu0
    %v1116 = vadd.f32 0.0, %v1115
    %1117 = vdwg.mxu0
    %v1118 = vadd.f32 %v864, %v1113
    %v1119 = vadd.f32 %v865, %v1116
    %v1120 = vld [vmem:[%s12] sm:$0x1]
    %v1122 = vperm.slane %v1120, 0
    %v1124 = vadd.f32 %v1118, %v1122
    %v1125 = vadd.f32 %v1119, %v1122
    %v1126 = vadd.f32 %v102, %v1124
    %v1127 = vadd.f32 %v105, %v1125
    %v1128 = vld [vmem:[%s17] sm:$0x1]
    %v1129 = vld [vmem:[%s18] sm:$0x1]
    %v1130 = vsel %vm115, %v1126, 0.0
    %1131 = vadd.xlane.f32.xlu0 %v1130
    %v1132 = vpop.xlane.xlu0 %1131
    %v1133 = vsel %vm115, %v1127, 0.0
    %1134 = vadd.xlane.f32.xlu0 %v1133
    %v1135 = vpop.xlane.xlu0 %1134
    %v1136 = vrcp.pop 32.0
    %v1137 = vmul.f32 32.0, %v1136
    %v1138 = vsub.f32 1.0, %v1137
    %v1139 = vmul.f32 %v1136, %v1138
    %v1140 = vadd.f32 %v1136, %v1139
    %vm1141 = vweird.f32 %v1136
    %v1142 = vsel %vm1141, %v1136, %v1140
    %v1143 = vmul.f32 %v1132, %v1142
    %v1144 = vmul.f32 %v1135, %v1142
    %v1145 = vsub.f32 %v1126, %v1143
    %v1146 = vsub.f32 %v1127, %v1144
    %v1147 = vmul.f32 %v1145, %v1145
    %v1148 = vmul.f32 %v1146, %v1146
    %v1149 = vsel %vm115, %v1147, 0.0
    %1150 = vadd.xlane.f32.xlu0 %v1149
    %v1151 = vpop.xlane.xlu0 %1150
    %v1152 = vsel %vm115, %v1148, 0.0
    %1153 = vadd.xlane.f32.xlu0 %v1152
    %v1154 = vpop.xlane.xlu0 %1153
    %v1155 = vmul.f32 %v1151, %v1142
    %v1156 = vmul.f32 %v1154, %v1142
    %v1157 = vadd.f32 %v1155, 1e-05
    %v1158 = vadd.f32 %v1156, 1e-05
    %v1159 = vrsqrt.pop %v1157
    %v1160 = vmul.f32 %v1159, %v1157
    %v1161 = vmul.f32 %v1160, %v1159
    %v1162 = vmul.f32 0.5, %v1161
    %v1163 = vsub.f32 1.5, %v1162
    %v1164 = vmul.f32 %v1159, %v1163
    %vm1165 = vweird.f32 %v1157
    %vm1166 = vweird.f32 %v1159
    %vm1167 = vmor %vm1165, %vm1166
    %v1168 = vsel %vm1167, %v1159, %v1164
    %v1169 = vrsqrt.pop %v1158
    %v1170 = vmul.f32 %v1169, %v1158
    %v1171 = vmul.f32 %v1170, %v1169
    %v1172 = vmul.f32 0.5, %v1171
    %v1173 = vsub.f32 1.5, %v1172
    %v1174 = vmul.f32 %v1169, %v1173
    %vm1175 = vweird.f32 %v1158
    %vm1176 = vweird.f32 %v1169
    %vm1177 = vmor %vm1175, %vm1176
    %v1178 = vsel %vm1177, %v1169, %v1174
    %v1179 = vmul.f32 %v1145, %v1168
    %v1180 = vmul.f32 %v1146, %v1178
    %v1182 = vperm.slane %v1128, 0
    %v1184 = vmul.f32 %v1179, %v1182
    %v1185 = vmul.f32 %v1180, %v1182
    %v1187 = vperm.slane %v1129, 0
    %v1189 = vadd.f32 %v1184, %v1187
    %v1190 = vadd.f32 %v1185, %v1187
    %v1191 = vld [vmem:[%s13] sm:$0xff]
    %v1192 = vld [vmem:[%s13 + $0x8] sm:$0xff]
    %v1193 = vld [vmem:[%s13 + $0x10] sm:$0xff]
    %v1194 = vld [vmem:[%s13 + $0x18] sm:$0xff]
    %v1195 = vld [vmem:[%s13 + $0x20] sm:$0xff]
    %v1196 = vld [vmem:[%s13 + $0x28] sm:$0xff]
    %v1197 = vld [vmem:[%s13 + $0x30] sm:$0xff]
    %v1198 = vld [vmem:[%s13 + $0x38] sm:$0xff]
    %v1199 = vld [vmem:[%s13 + $0x40] sm:$0xff]
    %v1200 = vld [vmem:[%s13 + $0x48] sm:$0xff]
    %v1201 = vld [vmem:[%s13 + $0x50] sm:$0xff]
    %v1202 = vld [vmem:[%s13 + $0x58] sm:$0xff]
    %v1203 = vld [vmem:[%s13 + $0x60] sm:$0xff]
    %v1204 = vld [vmem:[%s13 + $0x68] sm:$0xff]
    %v1205 = vld [vmem:[%s13 + $0x70] sm:$0xff]
    %v1206 = vld [vmem:[%s13 + $0x78] sm:$0xff]
    %v1207 = vld [vmem:[%s13 + $0x80] sm:$0xff]
    %v1208 = vld [vmem:[%s13 + $0x88] sm:$0xff]
    %v1209 = vld [vmem:[%s13 + $0x90] sm:$0xff]
    %v1210 = vld [vmem:[%s13 + $0x98] sm:$0xff]
    %v1211 = vld [vmem:[%s13 + $0xa0] sm:$0xff]
    %v1212 = vld [vmem:[%s13 + $0xa8] sm:$0xff]
    %v1213 = vld [vmem:[%s13 + $0xb0] sm:$0xff]
    %v1214 = vld [vmem:[%s13 + $0xb8] sm:$0xff]
    %v1215 = vld [vmem:[%s13 + $0xc0] sm:$0xff]
    %v1216 = vld [vmem:[%s13 + $0xc8] sm:$0xff]
    %v1217 = vld [vmem:[%s13 + $0xd0] sm:$0xff]
    %v1218 = vld [vmem:[%s13 + $0xd8] sm:$0xff]
    %v1219 = vld [vmem:[%s13 + $0xe0] sm:$0xff]
    %v1220 = vld [vmem:[%s13 + $0xe8] sm:$0xff]
    %v1221 = vld [vmem:[%s13 + $0xf0] sm:$0xff]
    %v1222 = vld [vmem:[%s13 + $0xf8] sm:$0xff]
    %v1223 = vld [vmem:[%s13 + $0x100] sm:$0xff]
    %v1224 = vld [vmem:[%s13 + $0x108] sm:$0xff]
    %v1225 = vld [vmem:[%s13 + $0x110] sm:$0xff]
    %v1226 = vld [vmem:[%s13 + $0x118] sm:$0xff]
    %v1227 = vld [vmem:[%s13 + $0x120] sm:$0xff]
    %v1228 = vld [vmem:[%s13 + $0x128] sm:$0xff]
    %v1229 = vld [vmem:[%s13 + $0x130] sm:$0xff]
    %v1230 = vld [vmem:[%s13 + $0x138] sm:$0xff]
    %v1231 = vld [vmem:[%s13 + $0x140] sm:$0xff]
    %v1232 = vld [vmem:[%s13 + $0x148] sm:$0xff]
    %v1233 = vld [vmem:[%s13 + $0x150] sm:$0xff]
    %v1234 = vld [vmem:[%s13 + $0x158] sm:$0xff]
    %v1235 = vld [vmem:[%s13 + $0x160] sm:$0xff]
    %v1236 = vld [vmem:[%s13 + $0x168] sm:$0xff]
    %v1237 = vld [vmem:[%s13 + $0x170] sm:$0xff]
    %v1238 = vld [vmem:[%s13 + $0x178] sm:$0xff]
    %v1239 = vld [vmem:[%s13 + $0x180] sm:$0xff]
    %v1240 = vld [vmem:[%s13 + $0x188] sm:$0xff]
    %v1241 = vld [vmem:[%s13 + $0x190] sm:$0xff]
    %v1242 = vld [vmem:[%s13 + $0x198] sm:$0xff]
    %v1243 = vld [vmem:[%s13 + $0x1a0] sm:$0xff]
    %v1244 = vld [vmem:[%s13 + $0x1a8] sm:$0xff]
    %v1245 = vld [vmem:[%s13 + $0x1b0] sm:$0xff]
    %v1246 = vld [vmem:[%s13 + $0x1b8] sm:$0xff]
    %v1247 = vld [vmem:[%s13 + $0x1c0] sm:$0xff]
    %v1248 = vld [vmem:[%s13 + $0x1c8] sm:$0xff]
    %v1249 = vld [vmem:[%s13 + $0x1d0] sm:$0xff]
    %v1250 = vld [vmem:[%s13 + $0x1d8] sm:$0xff]
    %v1251 = vld [vmem:[%s13 + $0x1e0] sm:$0xff]
    %v1252 = vld [vmem:[%s13 + $0x1e8] sm:$0xff]
    %v1253 = vld [vmem:[%s13 + $0x1f0] sm:$0xff]
    %v1254 = vld [vmem:[%s13 + $0x1f8] sm:$0xff]
    %v1255 = vld [vmem:[%s14] sm:$0xff]
    %v1256 = vld [vmem:[%s14 + $0x8] sm:$0xff]
    %v1259 = vperm.slane %v1255, 0
    %v1260 = vperm.slane %v1255, 1
    %v1261 = vperm.slane %v1255, 2
    %v1262 = vperm.slane %v1255, 3
    %v1263 = vperm.slane %v1255, 4
    %v1264 = vperm.slane %v1255, 5
    %v1265 = vperm.slane %v1255, 6
    %v1266 = vperm.slane %v1255, 7
    %v1267 = vperm.slane %v1256, 0
    %v1268 = vperm.slane %v1256, 1
    %v1269 = vperm.slane %v1256, 2
    %v1270 = vperm.slane %v1256, 3
    %v1271 = vperm.slane %v1256, 4
    %v1272 = vperm.slane %v1256, 5
    %v1273 = vperm.slane %v1256, 6
    %v1274 = vperm.slane %v1256, 7
    %v1292 = vsel %vm115, %v1189, 0
    %v1295 = vsel %vm115, %v1190, 0
    %1297 = vmatpush.msra.mxu0 0.0
    %1298 = vmatpush.msra.mxu0 0.0
    %1299 = vmatpush.msra.mxu0 0.0
    %1300 = vmatpush.msra.mxu0 0.0
    %1301 = vmatpush.msra.mxu0 0.0
    %1302 = vmatpush.msra.mxu0 0.0
    %1303 = vmatpush.msra.mxu0 0.0
    %1304 = vmatpush.msra.mxu0 0.0
    %1305 = vmatpush.msra.mxu0 0.0
    %1306 = vmatpush.msra.mxu0 0.0
    %1307 = vmatpush.msra.mxu0 0.0
    %1308 = vmatpush.msra.mxu0 0.0
    %1309 = vmatpush.msra.mxu0 %v1239
    %1310 = vmatpush.msra.mxu0 %v1223
    %1311 = vmatpush.msra.mxu0 %v1207
    %1312 = vmatpush.msra.mxu0 %v1191
    %1313 = vmatmul.f32.gmra.mxu0 %v1292
    %v1314 = vpop.f32.mrf.mxu0
    %v1315 = vadd.f32 %v1259, %v1314
    %1316 = vmatmul.f32.gmra.mxu0 %v1295
    %v1317 = vpop.f32.mrf.mxu0
    %v1318 = vadd.f32 %v1259, %v1317
    %1319 = vdwg.mxu0
    %1320 = vmatpush.msra.mxu0 0.0
    %1321 = vmatpush.msra.mxu0 0.0
    %1322 = vmatpush.msra.mxu0 0.0
    %1323 = vmatpush.msra.mxu0 0.0
    %1324 = vmatpush.msra.mxu0 0.0
    %1325 = vmatpush.msra.mxu0 0.0
    %1326 = vmatpush.msra.mxu0 0.0
    %1327 = vmatpush.msra.mxu0 0.0
    %1328 = vmatpush.msra.mxu0 0.0
    %1329 = vmatpush.msra.mxu0 0.0
    %1330 = vmatpush.msra.mxu0 0.0
    %1331 = vmatpush.msra.mxu0 0.0
    %1332 = vmatpush.msra.mxu0 %v1240
    %1333 = vmatpush.msra.mxu0 %v1224
    %1334 = vmatpush.msra.mxu0 %v1208
    %1335 = vmatpush.msra.mxu0 %v1192
    %1336 = vmatmul.f32.gmra.mxu0 %v1292
    %v1337 = vpop.f32.mrf.mxu0
    %v1338 = vadd.f32 %v1260, %v1337
    %1339 = vmatmul.f32.gmra.mxu0 %v1295
    %v1340 = vpop.f32.mrf.mxu0
    %v1341 = vadd.f32 %v1260, %v1340
    %1342 = vdwg.mxu0
    %1343 = vmatpush.msra.mxu0 0.0
    %1344 = vmatpush.msra.mxu0 0.0
    %1345 = vmatpush.msra.mxu0 0.0
    %1346 = vmatpush.msra.mxu0 0.0
    %1347 = vmatpush.msra.mxu0 0.0
    %1348 = vmatpush.msra.mxu0 0.0
    %1349 = vmatpush.msra.mxu0 0.0
    %1350 = vmatpush.msra.mxu0 0.0
    %1351 = vmatpush.msra.mxu0 0.0
    %1352 = vmatpush.msra.mxu0 0.0
    %1353 = vmatpush.msra.mxu0 0.0
    %1354 = vmatpush.msra.mxu0 0.0
    %1355 = vmatpush.msra.mxu0 %v1241
    %1356 = vmatpush.msra.mxu0 %v1225
    %1357 = vmatpush.msra.mxu0 %v1209
    %1358 = vmatpush.msra.mxu0 %v1193
    %1359 = vmatmul.f32.gmra.mxu0 %v1292
    %v1360 = vpop.f32.mrf.mxu0
    %v1361 = vadd.f32 %v1261, %v1360
    %1362 = vmatmul.f32.gmra.mxu0 %v1295
    %v1363 = vpop.f32.mrf.mxu0
    %v1364 = vadd.f32 %v1261, %v1363
    %1365 = vdwg.mxu0
    %1366 = vmatpush.msra.mxu0 0.0
    %1367 = vmatpush.msra.mxu0 0.0
    %1368 = vmatpush.msra.mxu0 0.0
    %1369 = vmatpush.msra.mxu0 0.0
    %1370 = vmatpush.msra.mxu0 0.0
    %1371 = vmatpush.msra.mxu0 0.0
    %1372 = vmatpush.msra.mxu0 0.0
    %1373 = vmatpush.msra.mxu0 0.0
    %1374 = vmatpush.msra.mxu0 0.0
    %1375 = vmatpush.msra.mxu0 0.0
    %1376 = vmatpush.msra.mxu0 0.0
    %1377 = vmatpush.msra.mxu0 0.0
    %1378 = vmatpush.msra.mxu0 %v1242
    %1379 = vmatpush.msra.mxu0 %v1226
    %1380 = vmatpush.msra.mxu0 %v1210
    %1381 = vmatpush.msra.mxu0 %v1194
    %1382 = vmatmul.f32.gmra.mxu0 %v1292
    %v1383 = vpop.f32.mrf.mxu0
    %v1384 = vadd.f32 %v1262, %v1383
    %1385 = vmatmul.f32.gmra.mxu0 %v1295
    %v1386 = vpop.f32.mrf.mxu0
    %v1387 = vadd.f32 %v1262, %v1386
    %1388 = vdwg.mxu0
    %1389 = vmatpush.msra.mxu0 0.0
    %1390 = vmatpush.msra.mxu0 0.0
    %1391 = vmatpush.msra.mxu0 0.0
    %1392 = vmatpush.msra.mxu0 0.0
    %1393 = vmatpush.msra.mxu0 0.0
    %1394 = vmatpush.msra.mxu0 0.0
    %1395 = vmatpush.msra.mxu0 0.0
    %1396 = vmatpush.msra.mxu0 0.0
    %1397 = vmatpush.msra.mxu0 0.0
    %1398 = vmatpush.msra.mxu0 0.0
    %1399 = vmatpush.msra.mxu0 0.0
    %1400 = vmatpush.msra.mxu0 0.0
    %1401 = vmatpush.msra.mxu0 %v1243
    %1402 = vmatpush.msra.mxu0 %v1227
    %1403 = vmatpush.msra.mxu0 %v1211
    %1404 = vmatpush.msra.mxu0 %v1195
    %1405 = vmatmul.f32.gmra.mxu0 %v1292
    %v1406 = vpop.f32.mrf.mxu0
    %v1407 = vadd.f32 %v1263, %v1406
    %1408 = vmatmul.f32.gmra.mxu0 %v1295
    %v1409 = vpop.f32.mrf.mxu0
    %v1410 = vadd.f32 %v1263, %v1409
    %1411 = vdwg.mxu0
    %1412 = vmatpush.msra.mxu0 0.0
    %1413 = vmatpush.msra.mxu0 0.0
    %1414 = vmatpush.msra.mxu0 0.0
    %1415 = vmatpush.msra.mxu0 0.0
    %1416 = vmatpush.msra.mxu0 0.0
    %1417 = vmatpush.msra.mxu0 0.0
    %1418 = vmatpush.msra.mxu0 0.0
    %1419 = vmatpush.msra.mxu0 0.0
    %1420 = vmatpush.msra.mxu0 0.0
    %1421 = vmatpush.msra.mxu0 0.0
    %1422 = vmatpush.msra.mxu0 0.0
    %1423 = vmatpush.msra.mxu0 0.0
    %1424 = vmatpush.msra.mxu0 %v1244
    %1425 = vmatpush.msra.mxu0 %v1228
    %1426 = vmatpush.msra.mxu0 %v1212
    %1427 = vmatpush.msra.mxu0 %v1196
    %1428 = vmatmul.f32.gmra.mxu0 %v1292
    %v1429 = vpop.f32.mrf.mxu0
    %v1430 = vadd.f32 %v1264, %v1429
    %1431 = vmatmul.f32.gmra.mxu0 %v1295
    %v1432 = vpop.f32.mrf.mxu0
    %v1433 = vadd.f32 %v1264, %v1432
    %1434 = vdwg.mxu0
    %1435 = vmatpush.msra.mxu0 0.0
    %1436 = vmatpush.msra.mxu0 0.0
    %1437 = vmatpush.msra.mxu0 0.0
    %1438 = vmatpush.msra.mxu0 0.0
    %1439 = vmatpush.msra.mxu0 0.0
    %1440 = vmatpush.msra.mxu0 0.0
    %1441 = vmatpush.msra.mxu0 0.0
    %1442 = vmatpush.msra.mxu0 0.0
    %1443 = vmatpush.msra.mxu0 0.0
    %1444 = vmatpush.msra.mxu0 0.0
    %1445 = vmatpush.msra.mxu0 0.0
    %1446 = vmatpush.msra.mxu0 0.0
    %1447 = vmatpush.msra.mxu0 %v1245
    %1448 = vmatpush.msra.mxu0 %v1229
    %1449 = vmatpush.msra.mxu0 %v1213
    %1450 = vmatpush.msra.mxu0 %v1197
    %1451 = vmatmul.f32.gmra.mxu0 %v1292
    %v1452 = vpop.f32.mrf.mxu0
    %v1453 = vadd.f32 %v1265, %v1452
    %1454 = vmatmul.f32.gmra.mxu0 %v1295
    %v1455 = vpop.f32.mrf.mxu0
    %v1456 = vadd.f32 %v1265, %v1455
    %1457 = vdwg.mxu0
    %1458 = vmatpush.msra.mxu0 0.0
    %1459 = vmatpush.msra.mxu0 0.0
    %1460 = vmatpush.msra.mxu0 0.0
    %1461 = vmatpush.msra.mxu0 0.0
    %1462 = vmatpush.msra.mxu0 0.0
    %1463 = vmatpush.msra.mxu0 0.0
    %1464 = vmatpush.msra.mxu0 0.0
    %1465 = vmatpush.msra.mxu0 0.0
    %1466 = vmatpush.msra.mxu0 0.0
    %1467 = vmatpush.msra.mxu0 0.0
    %1468 = vmatpush.msra.mxu0 0.0
    %1469 = vmatpush.msra.mxu0 0.0
    %1470 = vmatpush.msra.mxu0 %v1246
    %1471 = vmatpush.msra.mxu0 %v1230
    %1472 = vmatpush.msra.mxu0 %v1214
    %1473 = vmatpush.msra.mxu0 %v1198
    %1474 = vmatmul.f32.gmra.mxu0 %v1292
    %v1475 = vpop.f32.mrf.mxu0
    %v1476 = vadd.f32 %v1266, %v1475
    %1477 = vmatmul.f32.gmra.mxu0 %v1295
    %v1478 = vpop.f32.mrf.mxu0
    %v1479 = vadd.f32 %v1266, %v1478
    %1480 = vdwg.mxu0
    %1481 = vmatpush.msra.mxu0 0.0
    %1482 = vmatpush.msra.mxu0 0.0
    %1483 = vmatpush.msra.mxu0 0.0
    %1484 = vmatpush.msra.mxu0 0.0
    %1485 = vmatpush.msra.mxu0 0.0
    %1486 = vmatpush.msra.mxu0 0.0
    %1487 = vmatpush.msra.mxu0 0.0
    %1488 = vmatpush.msra.mxu0 0.0
    %1489 = vmatpush.msra.mxu0 0.0
    %1490 = vmatpush.msra.mxu0 0.0
    %1491 = vmatpush.msra.mxu0 0.0
    %1492 = vmatpush.msra.mxu0 0.0
    %1493 = vmatpush.msra.mxu0 %v1247
    %1494 = vmatpush.msra.mxu0 %v1231
    %1495 = vmatpush.msra.mxu0 %v1215
    %1496 = vmatpush.msra.mxu0 %v1199
    %1497 = vmatmul.f32.gmra.mxu0 %v1292
    %v1498 = vpop.f32.mrf.mxu0
    %v1499 = vadd.f32 %v1267, %v1498
    %1500 = vmatmul.f32.gmra.mxu0 %v1295
    %v1501 = vpop.f32.mrf.mxu0
    %v1502 = vadd.f32 %v1267, %v1501
    %1503 = vdwg.mxu0
    %1504 = vmatpush.msra.mxu0 0.0
    %1505 = vmatpush.msra.mxu0 0.0
    %1506 = vmatpush.msra.mxu0 0.0
    %1507 = vmatpush.msra.mxu0 0.0
    %1508 = vmatpush.msra.mxu0 0.0
    %1509 = vmatpush.msra.mxu0 0.0
    %1510 = vmatpush.msra.mxu0 0.0
    %1511 = vmatpush.msra.mxu0 0.0
    %1512 = vmatpush.msra.mxu0 0.0
    %1513 = vmatpush.msra.mxu0 0.0
    %1514 = vmatpush.msra.mxu0 0.0
    %1515 = vmatpush.msra.mxu0 0.0
    %1516 = vmatpush.msra.mxu0 %v1248
    %1517 = vmatpush.msra.mxu0 %v1232
    %1518 = vmatpush.msra.mxu0 %v1216
    %1519 = vmatpush.msra.mxu0 %v1200
    %1520 = vmatmul.f32.gmra.mxu0 %v1292
    %v1521 = vpop.f32.mrf.mxu0
    %v1522 = vadd.f32 %v1268, %v1521
    %1523 = vmatmul.f32.gmra.mxu0 %v1295
    %v1524 = vpop.f32.mrf.mxu0
    %v1525 = vadd.f32 %v1268, %v1524
    %1526 = vdwg.mxu0
    %1527 = vmatpush.msra.mxu0 0.0
    %1528 = vmatpush.msra.mxu0 0.0
    %1529 = vmatpush.msra.mxu0 0.0
    %1530 = vmatpush.msra.mxu0 0.0
    %1531 = vmatpush.msra.mxu0 0.0
    %1532 = vmatpush.msra.mxu0 0.0
    %1533 = vmatpush.msra.mxu0 0.0
    %1534 = vmatpush.msra.mxu0 0.0
    %1535 = vmatpush.msra.mxu0 0.0
    %1536 = vmatpush.msra.mxu0 0.0
    %1537 = vmatpush.msra.mxu0 0.0
    %1538 = vmatpush.msra.mxu0 0.0
    %1539 = vmatpush.msra.mxu0 %v1249
    %1540 = vmatpush.msra.mxu0 %v1233
    %1541 = vmatpush.msra.mxu0 %v1217
    %1542 = vmatpush.msra.mxu0 %v1201
    %1543 = vmatmul.f32.gmra.mxu0 %v1292
    %v1544 = vpop.f32.mrf.mxu0
    %v1545 = vadd.f32 %v1269, %v1544
    %1546 = vmatmul.f32.gmra.mxu0 %v1295
    %v1547 = vpop.f32.mrf.mxu0
    %v1548 = vadd.f32 %v1269, %v1547
    %1549 = vdwg.mxu0
    %1550 = vmatpush.msra.mxu0 0.0
    %1551 = vmatpush.msra.mxu0 0.0
    %1552 = vmatpush.msra.mxu0 0.0
    %1553 = vmatpush.msra.mxu0 0.0
    %1554 = vmatpush.msra.mxu0 0.0
    %1555 = vmatpush.msra.mxu0 0.0
    %1556 = vmatpush.msra.mxu0 0.0
    %1557 = vmatpush.msra.mxu0 0.0
    %1558 = vmatpush.msra.mxu0 0.0
    %1559 = vmatpush.msra.mxu0 0.0
    %1560 = vmatpush.msra.mxu0 0.0
    %1561 = vmatpush.msra.mxu0 0.0
    %1562 = vmatpush.msra.mxu0 %v1250
    %1563 = vmatpush.msra.mxu0 %v1234
    %1564 = vmatpush.msra.mxu0 %v1218
    %1565 = vmatpush.msra.mxu0 %v1202
    %1566 = vmatmul.f32.gmra.mxu0 %v1292
    %v1567 = vpop.f32.mrf.mxu0
    %v1568 = vadd.f32 %v1270, %v1567
    %1569 = vmatmul.f32.gmra.mxu0 %v1295
    %v1570 = vpop.f32.mrf.mxu0
    %v1571 = vadd.f32 %v1270, %v1570
    %1572 = vdwg.mxu0
    %1573 = vmatpush.msra.mxu0 0.0
    %1574 = vmatpush.msra.mxu0 0.0
    %1575 = vmatpush.msra.mxu0 0.0
    %1576 = vmatpush.msra.mxu0 0.0
    %1577 = vmatpush.msra.mxu0 0.0
    %1578 = vmatpush.msra.mxu0 0.0
    %1579 = vmatpush.msra.mxu0 0.0
    %1580 = vmatpush.msra.mxu0 0.0
    %1581 = vmatpush.msra.mxu0 0.0
    %1582 = vmatpush.msra.mxu0 0.0
    %1583 = vmatpush.msra.mxu0 0.0
    %1584 = vmatpush.msra.mxu0 0.0
    %1585 = vmatpush.msra.mxu0 %v1251
    %1586 = vmatpush.msra.mxu0 %v1235
    %1587 = vmatpush.msra.mxu0 %v1219
    %1588 = vmatpush.msra.mxu0 %v1203
    %1589 = vmatmul.f32.gmra.mxu0 %v1292
    %v1590 = vpop.f32.mrf.mxu0
    %v1591 = vadd.f32 %v1271, %v1590
    %1592 = vmatmul.f32.gmra.mxu0 %v1295
    %v1593 = vpop.f32.mrf.mxu0
    %v1594 = vadd.f32 %v1271, %v1593
    %1595 = vdwg.mxu0
    %1596 = vmatpush.msra.mxu0 0.0
    %1597 = vmatpush.msra.mxu0 0.0
    %1598 = vmatpush.msra.mxu0 0.0
    %1599 = vmatpush.msra.mxu0 0.0
    %1600 = vmatpush.msra.mxu0 0.0
    %1601 = vmatpush.msra.mxu0 0.0
    %1602 = vmatpush.msra.mxu0 0.0
    %1603 = vmatpush.msra.mxu0 0.0
    %1604 = vmatpush.msra.mxu0 0.0
    %1605 = vmatpush.msra.mxu0 0.0
    %1606 = vmatpush.msra.mxu0 0.0
    %1607 = vmatpush.msra.mxu0 0.0
    %1608 = vmatpush.msra.mxu0 %v1252
    %1609 = vmatpush.msra.mxu0 %v1236
    %1610 = vmatpush.msra.mxu0 %v1220
    %1611 = vmatpush.msra.mxu0 %v1204
    %1612 = vmatmul.f32.gmra.mxu0 %v1292
    %v1613 = vpop.f32.mrf.mxu0
    %v1614 = vadd.f32 %v1272, %v1613
    %1615 = vmatmul.f32.gmra.mxu0 %v1295
    %v1616 = vpop.f32.mrf.mxu0
    %v1617 = vadd.f32 %v1272, %v1616
    %1618 = vdwg.mxu0
    %1619 = vmatpush.msra.mxu0 0.0
    %1620 = vmatpush.msra.mxu0 0.0
    %1621 = vmatpush.msra.mxu0 0.0
    %1622 = vmatpush.msra.mxu0 0.0
    %1623 = vmatpush.msra.mxu0 0.0
    %1624 = vmatpush.msra.mxu0 0.0
    %1625 = vmatpush.msra.mxu0 0.0
    %1626 = vmatpush.msra.mxu0 0.0
    %1627 = vmatpush.msra.mxu0 0.0
    %1628 = vmatpush.msra.mxu0 0.0
    %1629 = vmatpush.msra.mxu0 0.0
    %1630 = vmatpush.msra.mxu0 0.0
    %1631 = vmatpush.msra.mxu0 %v1253
    %1632 = vmatpush.msra.mxu0 %v1237
    %1633 = vmatpush.msra.mxu0 %v1221
    %1634 = vmatpush.msra.mxu0 %v1205
    %1635 = vmatmul.f32.gmra.mxu0 %v1292
    %v1636 = vpop.f32.mrf.mxu0
    %v1637 = vadd.f32 %v1273, %v1636
    %1638 = vmatmul.f32.gmra.mxu0 %v1295
    %v1639 = vpop.f32.mrf.mxu0
    %v1640 = vadd.f32 %v1273, %v1639
    %1641 = vdwg.mxu0
    %1642 = vmatpush.msra.mxu0 0.0
    %1643 = vmatpush.msra.mxu0 0.0
    %1644 = vmatpush.msra.mxu0 0.0
    %1645 = vmatpush.msra.mxu0 0.0
    %1646 = vmatpush.msra.mxu0 0.0
    %1647 = vmatpush.msra.mxu0 0.0
    %1648 = vmatpush.msra.mxu0 0.0
    %1649 = vmatpush.msra.mxu0 0.0
    %1650 = vmatpush.msra.mxu0 0.0
    %1651 = vmatpush.msra.mxu0 0.0
    %1652 = vmatpush.msra.mxu0 0.0
    %1653 = vmatpush.msra.mxu0 0.0
    %1654 = vmatpush.msra.mxu0 %v1254
    %1655 = vmatpush.msra.mxu0 %v1238
    %1656 = vmatpush.msra.mxu0 %v1222
    %1657 = vmatpush.msra.mxu0 %v1206
    %1658 = vmatmul.f32.gmra.mxu0 %v1292
    %v1659 = vpop.f32.mrf.mxu0
    %v1660 = vadd.f32 %v1274, %v1659
    %1661 = vmatmul.f32.gmra.mxu0 %v1295
    %v1662 = vpop.f32.mrf.mxu0
    %v1663 = vadd.f32 %v1274, %v1662
    %1664 = vdwg.mxu0
    %v1665 = vmax.f32 %v1315, 0.0
    %v1666 = vmax.f32 %v1338, 0.0
    %v1667 = vmax.f32 %v1361, 0.0
    %v1668 = vmax.f32 %v1384, 0.0
    %v1669 = vmax.f32 %v1407, 0.0
    %v1670 = vmax.f32 %v1430, 0.0
    %v1671 = vmax.f32 %v1453, 0.0
    %v1672 = vmax.f32 %v1476, 0.0
    %v1673 = vmax.f32 %v1499, 0.0
    %v1674 = vmax.f32 %v1522, 0.0
    %v1675 = vmax.f32 %v1545, 0.0
    %v1676 = vmax.f32 %v1568, 0.0
    %v1677 = vmax.f32 %v1591, 0.0
    %v1678 = vmax.f32 %v1614, 0.0
    %v1679 = vmax.f32 %v1637, 0.0
    %v1680 = vmax.f32 %v1660, 0.0
    %v1681 = vmax.f32 %v1318, 0.0
    %v1682 = vmax.f32 %v1341, 0.0
    %v1683 = vmax.f32 %v1364, 0.0
    %v1684 = vmax.f32 %v1387, 0.0
    %v1685 = vmax.f32 %v1410, 0.0
    %v1686 = vmax.f32 %v1433, 0.0
    %v1687 = vmax.f32 %v1456, 0.0
    %v1688 = vmax.f32 %v1479, 0.0
    %v1689 = vmax.f32 %v1502, 0.0
    %v1690 = vmax.f32 %v1525, 0.0
    %v1691 = vmax.f32 %v1548, 0.0
    %v1692 = vmax.f32 %v1571, 0.0
    %v1693 = vmax.f32 %v1594, 0.0
    %v1694 = vmax.f32 %v1617, 0.0
    %v1695 = vmax.f32 %v1640, 0.0
    %v1696 = vmax.f32 %v1663, 0.0
    %v1697 = vld [vmem:[%s15] sm:$0xff]
    %v1698 = vld [vmem:[%s15 + $0x8] sm:$0xff]
    %v1699 = vld [vmem:[%s15 + $0x10] sm:$0xff]
    %v1700 = vld [vmem:[%s15 + $0x18] sm:$0xff]
    %v1701 = vld [vmem:[%s15 + $0x20] sm:$0xff]
    %v1702 = vld [vmem:[%s15 + $0x28] sm:$0xff]
    %v1703 = vld [vmem:[%s15 + $0x30] sm:$0xff]
    %v1704 = vld [vmem:[%s15 + $0x38] sm:$0xff]
    %v1705 = vld [vmem:[%s15 + $0x40] sm:$0xff]
    %v1706 = vld [vmem:[%s15 + $0x48] sm:$0xff]
    %v1707 = vld [vmem:[%s15 + $0x50] sm:$0xff]
    %v1708 = vld [vmem:[%s15 + $0x58] sm:$0xff]
    %v1709 = vld [vmem:[%s15 + $0x60] sm:$0xff]
    %v1710 = vld [vmem:[%s15 + $0x68] sm:$0xff]
    %v1711 = vld [vmem:[%s15 + $0x70] sm:$0xff]
    %v1712 = vld [vmem:[%s15 + $0x78] sm:$0xff]
    %v1713 = vld [vmem:[%s15 + $0x80] sm:$0xff]
    %v1714 = vld [vmem:[%s15 + $0x88] sm:$0xff]
    %v1715 = vld [vmem:[%s15 + $0x90] sm:$0xff]
    %v1716 = vld [vmem:[%s15 + $0x98] sm:$0xff]
    %v1717 = vld [vmem:[%s15 + $0xa0] sm:$0xff]
    %v1718 = vld [vmem:[%s15 + $0xa8] sm:$0xff]
    %v1719 = vld [vmem:[%s15 + $0xb0] sm:$0xff]
    %v1720 = vld [vmem:[%s15 + $0xb8] sm:$0xff]
    %v1721 = vld [vmem:[%s15 + $0xc0] sm:$0xff]
    %v1722 = vld [vmem:[%s15 + $0xc8] sm:$0xff]
    %v1723 = vld [vmem:[%s15 + $0xd0] sm:$0xff]
    %v1724 = vld [vmem:[%s15 + $0xd8] sm:$0xff]
    %v1725 = vld [vmem:[%s15 + $0xe0] sm:$0xff]
    %v1726 = vld [vmem:[%s15 + $0xe8] sm:$0xff]
    %v1727 = vld [vmem:[%s15 + $0xf0] sm:$0xff]
    %v1728 = vld [vmem:[%s15 + $0xf8] sm:$0xff]
    %v1729 = vld [vmem:[%s15 + $0x100] sm:$0xff]
    %v1730 = vld [vmem:[%s15 + $0x108] sm:$0xff]
    %v1731 = vld [vmem:[%s15 + $0x110] sm:$0xff]
    %v1732 = vld [vmem:[%s15 + $0x118] sm:$0xff]
    %v1733 = vld [vmem:[%s15 + $0x120] sm:$0xff]
    %v1734 = vld [vmem:[%s15 + $0x128] sm:$0xff]
    %v1735 = vld [vmem:[%s15 + $0x130] sm:$0xff]
    %v1736 = vld [vmem:[%s15 + $0x138] sm:$0xff]
    %v1737 = vld [vmem:[%s15 + $0x140] sm:$0xff]
    %v1738 = vld [vmem:[%s15 + $0x148] sm:$0xff]
    %v1739 = vld [vmem:[%s15 + $0x150] sm:$0xff]
    %v1740 = vld [vmem:[%s15 + $0x158] sm:$0xff]
    %v1741 = vld [vmem:[%s15 + $0x160] sm:$0xff]
    %v1742 = vld [vmem:[%s15 + $0x168] sm:$0xff]
    %v1743 = vld [vmem:[%s15 + $0x170] sm:$0xff]
    %v1744 = vld [vmem:[%s15 + $0x178] sm:$0xff]
    %v1745 = vld [vmem:[%s15 + $0x180] sm:$0xff]
    %v1746 = vld [vmem:[%s15 + $0x188] sm:$0xff]
    %v1747 = vld [vmem:[%s15 + $0x190] sm:$0xff]
    %v1748 = vld [vmem:[%s15 + $0x198] sm:$0xff]
    %v1749 = vld [vmem:[%s15 + $0x1a0] sm:$0xff]
    %v1750 = vld [vmem:[%s15 + $0x1a8] sm:$0xff]
    %v1751 = vld [vmem:[%s15 + $0x1b0] sm:$0xff]
    %v1752 = vld [vmem:[%s15 + $0x1b8] sm:$0xff]
    %v1753 = vld [vmem:[%s15 + $0x1c0] sm:$0xff]
    %v1754 = vld [vmem:[%s15 + $0x1c8] sm:$0xff]
    %v1755 = vld [vmem:[%s15 + $0x1d0] sm:$0xff]
    %v1756 = vld [vmem:[%s15 + $0x1d8] sm:$0xff]
    %v1757 = vld [vmem:[%s15 + $0x1e0] sm:$0xff]
    %v1758 = vld [vmem:[%s15 + $0x1e8] sm:$0xff]
    %v1759 = vld [vmem:[%s15 + $0x1f0] sm:$0xff]
    %v1760 = vld [vmem:[%s15 + $0x1f8] sm:$0xff]
    %v1761 = vld [vmem:[%s15 + $0x200] sm:$0xff]
    %v1762 = vld [vmem:[%s15 + $0x208] sm:$0xff]
    %v1763 = vld [vmem:[%s15 + $0x210] sm:$0xff]
    %v1764 = vld [vmem:[%s15 + $0x218] sm:$0xff]
    %v1765 = vld [vmem:[%s15 + $0x220] sm:$0xff]
    %v1766 = vld [vmem:[%s15 + $0x228] sm:$0xff]
    %v1767 = vld [vmem:[%s15 + $0x230] sm:$0xff]
    %v1768 = vld [vmem:[%s15 + $0x238] sm:$0xff]
    %v1769 = vld [vmem:[%s15 + $0x240] sm:$0xff]
    %v1770 = vld [vmem:[%s15 + $0x248] sm:$0xff]
    %v1771 = vld [vmem:[%s15 + $0x250] sm:$0xff]
    %v1772 = vld [vmem:[%s15 + $0x258] sm:$0xff]
    %v1773 = vld [vmem:[%s15 + $0x260] sm:$0xff]
    %v1774 = vld [vmem:[%s15 + $0x268] sm:$0xff]
    %v1775 = vld [vmem:[%s15 + $0x270] sm:$0xff]
    %v1776 = vld [vmem:[%s15 + $0x278] sm:$0xff]
    %v1777 = vld [vmem:[%s15 + $0x280] sm:$0xff]
    %v1778 = vld [vmem:[%s15 + $0x288] sm:$0xff]
    %v1779 = vld [vmem:[%s15 + $0x290] sm:$0xff]
    %v1780 = vld [vmem:[%s15 + $0x298] sm:$0xff]
    %v1781 = vld [vmem:[%s15 + $0x2a0] sm:$0xff]
    %v1782 = vld [vmem:[%s15 + $0x2a8] sm:$0xff]
    %v1783 = vld [vmem:[%s15 + $0x2b0] sm:$0xff]
    %v1784 = vld [vmem:[%s15 + $0x2b8] sm:$0xff]
    %v1785 = vld [vmem:[%s15 + $0x2c0] sm:$0xff]
    %v1786 = vld [vmem:[%s15 + $0x2c8] sm:$0xff]
    %v1787 = vld [vmem:[%s15 + $0x2d0] sm:$0xff]
    %v1788 = vld [vmem:[%s15 + $0x2d8] sm:$0xff]
    %v1789 = vld [vmem:[%s15 + $0x2e0] sm:$0xff]
    %v1790 = vld [vmem:[%s15 + $0x2e8] sm:$0xff]
    %v1791 = vld [vmem:[%s15 + $0x2f0] sm:$0xff]
    %v1792 = vld [vmem:[%s15 + $0x2f8] sm:$0xff]
    %v1793 = vld [vmem:[%s15 + $0x300] sm:$0xff]
    %v1794 = vld [vmem:[%s15 + $0x308] sm:$0xff]
    %v1795 = vld [vmem:[%s15 + $0x310] sm:$0xff]
    %v1796 = vld [vmem:[%s15 + $0x318] sm:$0xff]
    %v1797 = vld [vmem:[%s15 + $0x320] sm:$0xff]
    %v1798 = vld [vmem:[%s15 + $0x328] sm:$0xff]
    %v1799 = vld [vmem:[%s15 + $0x330] sm:$0xff]
    %v1800 = vld [vmem:[%s15 + $0x338] sm:$0xff]
    %v1801 = vld [vmem:[%s15 + $0x340] sm:$0xff]
    %v1802 = vld [vmem:[%s15 + $0x348] sm:$0xff]
    %v1803 = vld [vmem:[%s15 + $0x350] sm:$0xff]
    %v1804 = vld [vmem:[%s15 + $0x358] sm:$0xff]
    %v1805 = vld [vmem:[%s15 + $0x360] sm:$0xff]
    %v1806 = vld [vmem:[%s15 + $0x368] sm:$0xff]
    %v1807 = vld [vmem:[%s15 + $0x370] sm:$0xff]
    %v1808 = vld [vmem:[%s15 + $0x378] sm:$0xff]
    %v1809 = vld [vmem:[%s15 + $0x380] sm:$0xff]
    %v1810 = vld [vmem:[%s15 + $0x388] sm:$0xff]
    %v1811 = vld [vmem:[%s15 + $0x390] sm:$0xff]
    %v1812 = vld [vmem:[%s15 + $0x398] sm:$0xff]
    %v1813 = vld [vmem:[%s15 + $0x3a0] sm:$0xff]
    %v1814 = vld [vmem:[%s15 + $0x3a8] sm:$0xff]
    %v1815 = vld [vmem:[%s15 + $0x3b0] sm:$0xff]
    %v1816 = vld [vmem:[%s15 + $0x3b8] sm:$0xff]
    %v1817 = vld [vmem:[%s15 + $0x3c0] sm:$0xff]
    %v1818 = vld [vmem:[%s15 + $0x3c8] sm:$0xff]
    %v1819 = vld [vmem:[%s15 + $0x3d0] sm:$0xff]
    %v1820 = vld [vmem:[%s15 + $0x3d8] sm:$0xff]
    %v1821 = vld [vmem:[%s15 + $0x3e0] sm:$0xff]
    %v1822 = vld [vmem:[%s15 + $0x3e8] sm:$0xff]
    %v1823 = vld [vmem:[%s15 + $0x3f0] sm:$0xff]
    %v1824 = vld [vmem:[%s15 + $0x3f8] sm:$0xff]
    %v1825 = vld [vmem:[%s15 + $0x400] sm:$0xff]
    %v1826 = vld [vmem:[%s15 + $0x408] sm:$0xff]
    %v1827 = vld [vmem:[%s15 + $0x410] sm:$0xff]
    %v1828 = vld [vmem:[%s15 + $0x418] sm:$0xff]
    %v1829 = vld [vmem:[%s15 + $0x420] sm:$0xff]
    %v1830 = vld [vmem:[%s15 + $0x428] sm:$0xff]
    %v1831 = vld [vmem:[%s15 + $0x430] sm:$0xff]
    %v1832 = vld [vmem:[%s15 + $0x438] sm:$0xff]
    %v1833 = vld [vmem:[%s15 + $0x440] sm:$0xff]
    %v1834 = vld [vmem:[%s15 + $0x448] sm:$0xff]
    %v1835 = vld [vmem:[%s15 + $0x450] sm:$0xff]
    %v1836 = vld [vmem:[%s15 + $0x458] sm:$0xff]
    %v1837 = vld [vmem:[%s15 + $0x460] sm:$0xff]
    %v1838 = vld [vmem:[%s15 + $0x468] sm:$0xff]
    %v1839 = vld [vmem:[%s15 + $0x470] sm:$0xff]
    %v1840 = vld [vmem:[%s15 + $0x478] sm:$0xff]
    %v1841 = vld [vmem:[%s15 + $0x480] sm:$0xff]
    %v1842 = vld [vmem:[%s15 + $0x488] sm:$0xff]
    %v1843 = vld [vmem:[%s15 + $0x490] sm:$0xff]
    %v1844 = vld [vmem:[%s15 + $0x498] sm:$0xff]
    %v1845 = vld [vmem:[%s15 + $0x4a0] sm:$0xff]
    %v1846 = vld [vmem:[%s15 + $0x4a8] sm:$0xff]
    %v1847 = vld [vmem:[%s15 + $0x4b0] sm:$0xff]
    %v1848 = vld [vmem:[%s15 + $0x4b8] sm:$0xff]
    %v1849 = vld [vmem:[%s15 + $0x4c0] sm:$0xff]
    %v1850 = vld [vmem:[%s15 + $0x4c8] sm:$0xff]
    %v1851 = vld [vmem:[%s15 + $0x4d0] sm:$0xff]
    %v1852 = vld [vmem:[%s15 + $0x4d8] sm:$0xff]
    %v1853 = vld [vmem:[%s15 + $0x4e0] sm:$0xff]
    %v1854 = vld [vmem:[%s15 + $0x4e8] sm:$0xff]
    %v1855 = vld [vmem:[%s15 + $0x4f0] sm:$0xff]
    %v1856 = vld [vmem:[%s15 + $0x4f8] sm:$0xff]
    %v1857 = vld [vmem:[%s15 + $0x500] sm:$0xff]
    %v1858 = vld [vmem:[%s15 + $0x508] sm:$0xff]
    %v1859 = vld [vmem:[%s15 + $0x510] sm:$0xff]
    %v1860 = vld [vmem:[%s15 + $0x518] sm:$0xff]
    %v1861 = vld [vmem:[%s15 + $0x520] sm:$0xff]
    %v1862 = vld [vmem:[%s15 + $0x528] sm:$0xff]
    %v1863 = vld [vmem:[%s15 + $0x530] sm:$0xff]
    %v1864 = vld [vmem:[%s15 + $0x538] sm:$0xff]
    %v1865 = vld [vmem:[%s15 + $0x540] sm:$0xff]
    %v1866 = vld [vmem:[%s15 + $0x548] sm:$0xff]
    %v1867 = vld [vmem:[%s15 + $0x550] sm:$0xff]
    %v1868 = vld [vmem:[%s15 + $0x558] sm:$0xff]
    %v1869 = vld [vmem:[%s15 + $0x560] sm:$0xff]
    %v1870 = vld [vmem:[%s15 + $0x568] sm:$0xff]
    %v1871 = vld [vmem:[%s15 + $0x570] sm:$0xff]
    %v1872 = vld [vmem:[%s15 + $0x578] sm:$0xff]
    %v1873 = vld [vmem:[%s15 + $0x580] sm:$0xff]
    %v1874 = vld [vmem:[%s15 + $0x588] sm:$0xff]
    %v1875 = vld [vmem:[%s15 + $0x590] sm:$0xff]
    %v1876 = vld [vmem:[%s15 + $0x598] sm:$0xff]
    %v1877 = vld [vmem:[%s15 + $0x5a0] sm:$0xff]
    %v1878 = vld [vmem:[%s15 + $0x5a8] sm:$0xff]
    %v1879 = vld [vmem:[%s15 + $0x5b0] sm:$0xff]
    %v1880 = vld [vmem:[%s15 + $0x5b8] sm:$0xff]
    %v1881 = vld [vmem:[%s15 + $0x5c0] sm:$0xff]
    %v1882 = vld [vmem:[%s15 + $0x5c8] sm:$0xff]
    %v1883 = vld [vmem:[%s15 + $0x5d0] sm:$0xff]
    %v1884 = vld [vmem:[%s15 + $0x5d8] sm:$0xff]
    %v1885 = vld [vmem:[%s15 + $0x5e0] sm:$0xff]
    %v1886 = vld [vmem:[%s15 + $0x5e8] sm:$0xff]
    %v1887 = vld [vmem:[%s15 + $0x5f0] sm:$0xff]
    %v1888 = vld [vmem:[%s15 + $0x5f8] sm:$0xff]
    %v1889 = vld [vmem:[%s15 + $0x600] sm:$0xff]
    %v1890 = vld [vmem:[%s15 + $0x608] sm:$0xff]
    %v1891 = vld [vmem:[%s15 + $0x610] sm:$0xff]
    %v1892 = vld [vmem:[%s15 + $0x618] sm:$0xff]
    %v1893 = vld [vmem:[%s15 + $0x620] sm:$0xff]
    %v1894 = vld [vmem:[%s15 + $0x628] sm:$0xff]
    %v1895 = vld [vmem:[%s15 + $0x630] sm:$0xff]
    %v1896 = vld [vmem:[%s15 + $0x638] sm:$0xff]
    %v1897 = vld [vmem:[%s15 + $0x640] sm:$0xff]
    %v1898 = vld [vmem:[%s15 + $0x648] sm:$0xff]
    %v1899 = vld [vmem:[%s15 + $0x650] sm:$0xff]
    %v1900 = vld [vmem:[%s15 + $0x658] sm:$0xff]
    %v1901 = vld [vmem:[%s15 + $0x660] sm:$0xff]
    %v1902 = vld [vmem:[%s15 + $0x668] sm:$0xff]
    %v1903 = vld [vmem:[%s15 + $0x670] sm:$0xff]
    %v1904 = vld [vmem:[%s15 + $0x678] sm:$0xff]
    %v1905 = vld [vmem:[%s15 + $0x680] sm:$0xff]
    %v1906 = vld [vmem:[%s15 + $0x688] sm:$0xff]
    %v1907 = vld [vmem:[%s15 + $0x690] sm:$0xff]
    %v1908 = vld [vmem:[%s15 + $0x698] sm:$0xff]
    %v1909 = vld [vmem:[%s15 + $0x6a0] sm:$0xff]
    %v1910 = vld [vmem:[%s15 + $0x6a8] sm:$0xff]
    %v1911 = vld [vmem:[%s15 + $0x6b0] sm:$0xff]
    %v1912 = vld [vmem:[%s15 + $0x6b8] sm:$0xff]
    %v1913 = vld [vmem:[%s15 + $0x6c0] sm:$0xff]
    %v1914 = vld [vmem:[%s15 + $0x6c8] sm:$0xff]
    %v1915 = vld [vmem:[%s15 + $0x6d0] sm:$0xff]
    %v1916 = vld [vmem:[%s15 + $0x6d8] sm:$0xff]
    %v1917 = vld [vmem:[%s15 + $0x6e0] sm:$0xff]
    %v1918 = vld [vmem:[%s15 + $0x6e8] sm:$0xff]
    %v1919 = vld [vmem:[%s15 + $0x6f0] sm:$0xff]
    %v1920 = vld [vmem:[%s15 + $0x6f8] sm:$0xff]
    %v1921 = vld [vmem:[%s15 + $0x700] sm:$0xff]
    %v1922 = vld [vmem:[%s15 + $0x708] sm:$0xff]
    %v1923 = vld [vmem:[%s15 + $0x710] sm:$0xff]
    %v1924 = vld [vmem:[%s15 + $0x718] sm:$0xff]
    %v1925 = vld [vmem:[%s15 + $0x720] sm:$0xff]
    %v1926 = vld [vmem:[%s15 + $0x728] sm:$0xff]
    %v1927 = vld [vmem:[%s15 + $0x730] sm:$0xff]
    %v1928 = vld [vmem:[%s15 + $0x738] sm:$0xff]
    %v1929 = vld [vmem:[%s15 + $0x740] sm:$0xff]
    %v1930 = vld [vmem:[%s15 + $0x748] sm:$0xff]
    %v1931 = vld [vmem:[%s15 + $0x750] sm:$0xff]
    %v1932 = vld [vmem:[%s15 + $0x758] sm:$0xff]
    %v1933 = vld [vmem:[%s15 + $0x760] sm:$0xff]
    %v1934 = vld [vmem:[%s15 + $0x768] sm:$0xff]
    %v1935 = vld [vmem:[%s15 + $0x770] sm:$0xff]
    %v1936 = vld [vmem:[%s15 + $0x778] sm:$0xff]
    %v1937 = vld [vmem:[%s15 + $0x780] sm:$0xff]
    %v1938 = vld [vmem:[%s15 + $0x788] sm:$0xff]
    %v1939 = vld [vmem:[%s15 + $0x790] sm:$0xff]
    %v1940 = vld [vmem:[%s15 + $0x798] sm:$0xff]
    %v1941 = vld [vmem:[%s15 + $0x7a0] sm:$0xff]
    %v1942 = vld [vmem:[%s15 + $0x7a8] sm:$0xff]
    %v1943 = vld [vmem:[%s15 + $0x7b0] sm:$0xff]
    %v1944 = vld [vmem:[%s15 + $0x7b8] sm:$0xff]
    %v1945 = vld [vmem:[%s15 + $0x7c0] sm:$0xff]
    %v1946 = vld [vmem:[%s15 + $0x7c8] sm:$0xff]
    %v1947 = vld [vmem:[%s15 + $0x7d0] sm:$0xff]
    %v1948 = vld [vmem:[%s15 + $0x7d8] sm:$0xff]
    %v1949 = vld [vmem:[%s15 + $0x7e0] sm:$0xff]
    %v1950 = vld [vmem:[%s15 + $0x7e8] sm:$0xff]
    %v1951 = vld [vmem:[%s15 + $0x7f0] sm:$0xff]
    %v1952 = vld [vmem:[%s15 + $0x7f8] sm:$0xff]
    %v1953 = vld [vmem:[%s16] sm:$0x1]
    %v1955 = vperm.slane %v1953, 0
    %1957 = vmatpush.msra.mxu0 %v1712
    %1958 = vmatpush.msra.mxu0 %v1711
    %1959 = vmatpush.msra.mxu0 %v1710
    %1960 = vmatpush.msra.mxu0 %v1709
    %1961 = vmatpush.msra.mxu0 %v1708
    %1962 = vmatpush.msra.mxu0 %v1707
    %1963 = vmatpush.msra.mxu0 %v1706
    %1964 = vmatpush.msra.mxu0 %v1705
    %1965 = vmatpush.msra.mxu0 %v1704
    %1966 = vmatpush.msra.mxu0 %v1703
    %1967 = vmatpush.msra.mxu0 %v1702
    %1968 = vmatpush.msra.mxu0 %v1701
    %1969 = vmatpush.msra.mxu0 %v1700
    %1970 = vmatpush.msra.mxu0 %v1699
    %1971 = vmatpush.msra.mxu0 %v1698
    %1972 = vmatpush.msra.mxu0 %v1697
    %1973 = vmatmul.f32.gmra.mxu0 %v1665
    %v1974 = vpop.f32.mrf.mxu0
    %v1975 = vadd.f32 %v1955, %v1974
    %1976 = vmatmul.f32.gmra.mxu0 %v1681
    %v1977 = vpop.f32.mrf.mxu0
    %v1978 = vadd.f32 %v1955, %v1977
    %1979 = vdwg.mxu0
    %1980 = vmatpush.msra.mxu0 %v1728
    %1981 = vmatpush.msra.mxu0 %v1727
    %1982 = vmatpush.msra.mxu0 %v1726
    %1983 = vmatpush.msra.mxu0 %v1725
    %1984 = vmatpush.msra.mxu0 %v1724
    %1985 = vmatpush.msra.mxu0 %v1723
    %1986 = vmatpush.msra.mxu0 %v1722
    %1987 = vmatpush.msra.mxu0 %v1721
    %1988 = vmatpush.msra.mxu0 %v1720
    %1989 = vmatpush.msra.mxu0 %v1719
    %1990 = vmatpush.msra.mxu0 %v1718
    %1991 = vmatpush.msra.mxu0 %v1717
    %1992 = vmatpush.msra.mxu0 %v1716
    %1993 = vmatpush.msra.mxu0 %v1715
    %1994 = vmatpush.msra.mxu0 %v1714
    %1995 = vmatpush.msra.mxu0 %v1713
    %1996 = vmatmul.f32.gmra.mxu0 %v1666
    %v1997 = vpop.f32.mrf.mxu0
    %v1998 = vadd.f32 %v1975, %v1997
    %1999 = vmatmul.f32.gmra.mxu0 %v1682
    %v2000 = vpop.f32.mrf.mxu0
    %v2001 = vadd.f32 %v1978, %v2000
    %2002 = vdwg.mxu0
    %2003 = vmatpush.msra.mxu0 %v1744
    %2004 = vmatpush.msra.mxu0 %v1743
    %2005 = vmatpush.msra.mxu0 %v1742
    %2006 = vmatpush.msra.mxu0 %v1741
    %2007 = vmatpush.msra.mxu0 %v1740
    %2008 = vmatpush.msra.mxu0 %v1739
    %2009 = vmatpush.msra.mxu0 %v1738
    %2010 = vmatpush.msra.mxu0 %v1737
    %2011 = vmatpush.msra.mxu0 %v1736
    %2012 = vmatpush.msra.mxu0 %v1735
    %2013 = vmatpush.msra.mxu0 %v1734
    %2014 = vmatpush.msra.mxu0 %v1733
    %2015 = vmatpush.msra.mxu0 %v1732
    %2016 = vmatpush.msra.mxu0 %v1731
    %2017 = vmatpush.msra.mxu0 %v1730
    %2018 = vmatpush.msra.mxu0 %v1729
    %2019 = vmatmul.f32.gmra.mxu0 %v1667
    %v2020 = vpop.f32.mrf.mxu0
    %v2021 = vadd.f32 %v1998, %v2020
    %2022 = vmatmul.f32.gmra.mxu0 %v1683
    %v2023 = vpop.f32.mrf.mxu0
    %v2024 = vadd.f32 %v2001, %v2023
    %2025 = vdwg.mxu0
    %2026 = vmatpush.msra.mxu0 %v1760
    %2027 = vmatpush.msra.mxu0 %v1759
    %2028 = vmatpush.msra.mxu0 %v1758
    %2029 = vmatpush.msra.mxu0 %v1757
    %2030 = vmatpush.msra.mxu0 %v1756
    %2031 = vmatpush.msra.mxu0 %v1755
    %2032 = vmatpush.msra.mxu0 %v1754
    %2033 = vmatpush.msra.mxu0 %v1753
    %2034 = vmatpush.msra.mxu0 %v1752
    %2035 = vmatpush.msra.mxu0 %v1751
    %2036 = vmatpush.msra.mxu0 %v1750
    %2037 = vmatpush.msra.mxu0 %v1749
    %2038 = vmatpush.msra.mxu0 %v1748
    %2039 = vmatpush.msra.mxu0 %v1747
    %2040 = vmatpush.msra.mxu0 %v1746
    %2041 = vmatpush.msra.mxu0 %v1745
    %2042 = vmatmul.f32.gmra.mxu0 %v1668
    %v2043 = vpop.f32.mrf.mxu0
    %v2044 = vadd.f32 %v2021, %v2043
    %2045 = vmatmul.f32.gmra.mxu0 %v1684
    %v2046 = vpop.f32.mrf.mxu0
    %v2047 = vadd.f32 %v2024, %v2046
    %2048 = vdwg.mxu0
    %2049 = vmatpush.msra.mxu0 %v1776
    %2050 = vmatpush.msra.mxu0 %v1775
    %2051 = vmatpush.msra.mxu0 %v1774
    %2052 = vmatpush.msra.mxu0 %v1773
    %2053 = vmatpush.msra.mxu0 %v1772
    %2054 = vmatpush.msra.mxu0 %v1771
    %2055 = vmatpush.msra.mxu0 %v1770
    %2056 = vmatpush.msra.mxu0 %v1769
    %2057 = vmatpush.msra.mxu0 %v1768
    %2058 = vmatpush.msra.mxu0 %v1767
    %2059 = vmatpush.msra.mxu0 %v1766
    %2060 = vmatpush.msra.mxu0 %v1765
    %2061 = vmatpush.msra.mxu0 %v1764
    %2062 = vmatpush.msra.mxu0 %v1763
    %2063 = vmatpush.msra.mxu0 %v1762
    %2064 = vmatpush.msra.mxu0 %v1761
    %2065 = vmatmul.f32.gmra.mxu0 %v1669
    %v2066 = vpop.f32.mrf.mxu0
    %v2067 = vadd.f32 %v2044, %v2066
    %2068 = vmatmul.f32.gmra.mxu0 %v1685
    %v2069 = vpop.f32.mrf.mxu0
    %v2070 = vadd.f32 %v2047, %v2069
    %2071 = vdwg.mxu0
    %2072 = vmatpush.msra.mxu0 %v1792
    %2073 = vmatpush.msra.mxu0 %v1791
    %2074 = vmatpush.msra.mxu0 %v1790
    %2075 = vmatpush.msra.mxu0 %v1789
    %2076 = vmatpush.msra.mxu0 %v1788
    %2077 = vmatpush.msra.mxu0 %v1787
    %2078 = vmatpush.msra.mxu0 %v1786
    %2079 = vmatpush.msra.mxu0 %v1785
    %2080 = vmatpush.msra.mxu0 %v1784
    %2081 = vmatpush.msra.mxu0 %v1783
    %2082 = vmatpush.msra.mxu0 %v1782
    %2083 = vmatpush.msra.mxu0 %v1781
    %2084 = vmatpush.msra.mxu0 %v1780
    %2085 = vmatpush.msra.mxu0 %v1779
    %2086 = vmatpush.msra.mxu0 %v1778
    %2087 = vmatpush.msra.mxu0 %v1777
    %2088 = vmatmul.f32.gmra.mxu0 %v1670
    %v2089 = vpop.f32.mrf.mxu0
    %v2090 = vadd.f32 %v2067, %v2089
    %2091 = vmatmul.f32.gmra.mxu0 %v1686
    %v2092 = vpop.f32.mrf.mxu0
    %v2093 = vadd.f32 %v2070, %v2092
    %2094 = vdwg.mxu0
    %2095 = vmatpush.msra.mxu0 %v1808
    %2096 = vmatpush.msra.mxu0 %v1807
    %2097 = vmatpush.msra.mxu0 %v1806
    %2098 = vmatpush.msra.mxu0 %v1805
    %2099 = vmatpush.msra.mxu0 %v1804
    %2100 = vmatpush.msra.mxu0 %v1803
    %2101 = vmatpush.msra.mxu0 %v1802
    %2102 = vmatpush.msra.mxu0 %v1801
    %2103 = vmatpush.msra.mxu0 %v1800
    %2104 = vmatpush.msra.mxu0 %v1799
    %2105 = vmatpush.msra.mxu0 %v1798
    %2106 = vmatpush.msra.mxu0 %v1797
    %2107 = vmatpush.msra.mxu0 %v1796
    %2108 = vmatpush.msra.mxu0 %v1795
    %2109 = vmatpush.msra.mxu0 %v1794
    %2110 = vmatpush.msra.mxu0 %v1793
    %2111 = vmatmul.f32.gmra.mxu0 %v1671
    %v2112 = vpop.f32.mrf.mxu0
    %v2113 = vadd.f32 %v2090, %v2112
    %2114 = vmatmul.f32.gmra.mxu0 %v1687
    %v2115 = vpop.f32.mrf.mxu0
    %v2116 = vadd.f32 %v2093, %v2115
    %2117 = vdwg.mxu0
    %2118 = vmatpush.msra.mxu0 %v1824
    %2119 = vmatpush.msra.mxu0 %v1823
    %2120 = vmatpush.msra.mxu0 %v1822
    %2121 = vmatpush.msra.mxu0 %v1821
    %2122 = vmatpush.msra.mxu0 %v1820
    %2123 = vmatpush.msra.mxu0 %v1819
    %2124 = vmatpush.msra.mxu0 %v1818
    %2125 = vmatpush.msra.mxu0 %v1817
    %2126 = vmatpush.msra.mxu0 %v1816
    %2127 = vmatpush.msra.mxu0 %v1815
    %2128 = vmatpush.msra.mxu0 %v1814
    %2129 = vmatpush.msra.mxu0 %v1813
    %2130 = vmatpush.msra.mxu0 %v1812
    %2131 = vmatpush.msra.mxu0 %v1811
    %2132 = vmatpush.msra.mxu0 %v1810
    %2133 = vmatpush.msra.mxu0 %v1809
    %2134 = vmatmul.f32.gmra.mxu0 %v1672
    %v2135 = vpop.f32.mrf.mxu0
    %v2136 = vadd.f32 %v2113, %v2135
    %2137 = vmatmul.f32.gmra.mxu0 %v1688
    %v2138 = vpop.f32.mrf.mxu0
    %v2139 = vadd.f32 %v2116, %v2138
    %2140 = vdwg.mxu0
    %2141 = vmatpush.msra.mxu0 %v1840
    %2142 = vmatpush.msra.mxu0 %v1839
    %2143 = vmatpush.msra.mxu0 %v1838
    %2144 = vmatpush.msra.mxu0 %v1837
    %2145 = vmatpush.msra.mxu0 %v1836
    %2146 = vmatpush.msra.mxu0 %v1835
    %2147 = vmatpush.msra.mxu0 %v1834
    %2148 = vmatpush.msra.mxu0 %v1833
    %2149 = vmatpush.msra.mxu0 %v1832
    %2150 = vmatpush.msra.mxu0 %v1831
    %2151 = vmatpush.msra.mxu0 %v1830
    %2152 = vmatpush.msra.mxu0 %v1829
    %2153 = vmatpush.msra.mxu0 %v1828
    %2154 = vmatpush.msra.mxu0 %v1827
    %2155 = vmatpush.msra.mxu0 %v1826
    %2156 = vmatpush.msra.mxu0 %v1825
    %2157 = vmatmul.f32.gmra.mxu0 %v1673
    %v2158 = vpop.f32.mrf.mxu0
    %v2159 = vadd.f32 %v2136, %v2158
    %2160 = vmatmul.f32.gmra.mxu0 %v1689
    %v2161 = vpop.f32.mrf.mxu0
    %v2162 = vadd.f32 %v2139, %v2161
    %2163 = vdwg.mxu0
    %2164 = vmatpush.msra.mxu0 %v1856
    %2165 = vmatpush.msra.mxu0 %v1855
    %2166 = vmatpush.msra.mxu0 %v1854
    %2167 = vmatpush.msra.mxu0 %v1853
    %2168 = vmatpush.msra.mxu0 %v1852
    %2169 = vmatpush.msra.mxu0 %v1851
    %2170 = vmatpush.msra.mxu0 %v1850
    %2171 = vmatpush.msra.mxu0 %v1849
    %2172 = vmatpush.msra.mxu0 %v1848
    %2173 = vmatpush.msra.mxu0 %v1847
    %2174 = vmatpush.msra.mxu0 %v1846
    %2175 = vmatpush.msra.mxu0 %v1845
    %2176 = vmatpush.msra.mxu0 %v1844
    %2177 = vmatpush.msra.mxu0 %v1843
    %2178 = vmatpush.msra.mxu0 %v1842
    %2179 = vmatpush.msra.mxu0 %v1841
    %2180 = vmatmul.f32.gmra.mxu0 %v1674
    %v2181 = vpop.f32.mrf.mxu0
    %v2182 = vadd.f32 %v2159, %v2181
    %2183 = vmatmul.f32.gmra.mxu0 %v1690
    %v2184 = vpop.f32.mrf.mxu0
    %v2185 = vadd.f32 %v2162, %v2184
    %2186 = vdwg.mxu0
    %2187 = vmatpush.msra.mxu0 %v1872
    %2188 = vmatpush.msra.mxu0 %v1871
    %2189 = vmatpush.msra.mxu0 %v1870
    %2190 = vmatpush.msra.mxu0 %v1869
    %2191 = vmatpush.msra.mxu0 %v1868
    %2192 = vmatpush.msra.mxu0 %v1867
    %2193 = vmatpush.msra.mxu0 %v1866
    %2194 = vmatpush.msra.mxu0 %v1865
    %2195 = vmatpush.msra.mxu0 %v1864
    %2196 = vmatpush.msra.mxu0 %v1863
    %2197 = vmatpush.msra.mxu0 %v1862
    %2198 = vmatpush.msra.mxu0 %v1861
    %2199 = vmatpush.msra.mxu0 %v1860
    %2200 = vmatpush.msra.mxu0 %v1859
    %2201 = vmatpush.msra.mxu0 %v1858
    %2202 = vmatpush.msra.mxu0 %v1857
    %2203 = vmatmul.f32.gmra.mxu0 %v1675
    %v2204 = vpop.f32.mrf.mxu0
    %v2205 = vadd.f32 %v2182, %v2204
    %2206 = vmatmul.f32.gmra.mxu0 %v1691
    %v2207 = vpop.f32.mrf.mxu0
    %v2208 = vadd.f32 %v2185, %v2207
    %2209 = vdwg.mxu0
    %2210 = vmatpush.msra.mxu0 %v1888
    %2211 = vmatpush.msra.mxu0 %v1887
    %2212 = vmatpush.msra.mxu0 %v1886
    %2213 = vmatpush.msra.mxu0 %v1885
    %2214 = vmatpush.msra.mxu0 %v1884
    %2215 = vmatpush.msra.mxu0 %v1883
    %2216 = vmatpush.msra.mxu0 %v1882
    %2217 = vmatpush.msra.mxu0 %v1881
    %2218 = vmatpush.msra.mxu0 %v1880
    %2219 = vmatpush.msra.mxu0 %v1879
    %2220 = vmatpush.msra.mxu0 %v1878
    %2221 = vmatpush.msra.mxu0 %v1877
    %2222 = vmatpush.msra.mxu0 %v1876
    %2223 = vmatpush.msra.mxu0 %v1875
    %2224 = vmatpush.msra.mxu0 %v1874
    %2225 = vmatpush.msra.mxu0 %v1873
    %2226 = vmatmul.f32.gmra.mxu0 %v1676
    %v2227 = vpop.f32.mrf.mxu0
    %v2228 = vadd.f32 %v2205, %v2227
    %2229 = vmatmul.f32.gmra.mxu0 %v1692
    %v2230 = vpop.f32.mrf.mxu0
    %v2231 = vadd.f32 %v2208, %v2230
    %2232 = vdwg.mxu0
    %2233 = vmatpush.msra.mxu0 %v1904
    %2234 = vmatpush.msra.mxu0 %v1903
    %2235 = vmatpush.msra.mxu0 %v1902
    %2236 = vmatpush.msra.mxu0 %v1901
    %2237 = vmatpush.msra.mxu0 %v1900
    %2238 = vmatpush.msra.mxu0 %v1899
    %2239 = vmatpush.msra.mxu0 %v1898
    %2240 = vmatpush.msra.mxu0 %v1897
    %2241 = vmatpush.msra.mxu0 %v1896
    %2242 = vmatpush.msra.mxu0 %v1895
    %2243 = vmatpush.msra.mxu0 %v1894
    %2244 = vmatpush.msra.mxu0 %v1893
    %2245 = vmatpush.msra.mxu0 %v1892
    %2246 = vmatpush.msra.mxu0 %v1891
    %2247 = vmatpush.msra.mxu0 %v1890
    %2248 = vmatpush.msra.mxu0 %v1889
    %2249 = vmatmul.f32.gmra.mxu0 %v1677
    %v2250 = vpop.f32.mrf.mxu0
    %v2251 = vadd.f32 %v2228, %v2250
    %2252 = vmatmul.f32.gmra.mxu0 %v1693
    %v2253 = vpop.f32.mrf.mxu0
    %v2254 = vadd.f32 %v2231, %v2253
    %2255 = vdwg.mxu0
    %2256 = vmatpush.msra.mxu0 %v1920
    %2257 = vmatpush.msra.mxu0 %v1919
    %2258 = vmatpush.msra.mxu0 %v1918
    %2259 = vmatpush.msra.mxu0 %v1917
    %2260 = vmatpush.msra.mxu0 %v1916
    %2261 = vmatpush.msra.mxu0 %v1915
    %2262 = vmatpush.msra.mxu0 %v1914
    %2263 = vmatpush.msra.mxu0 %v1913
    %2264 = vmatpush.msra.mxu0 %v1912
    %2265 = vmatpush.msra.mxu0 %v1911
    %2266 = vmatpush.msra.mxu0 %v1910
    %2267 = vmatpush.msra.mxu0 %v1909
    %2268 = vmatpush.msra.mxu0 %v1908
    %2269 = vmatpush.msra.mxu0 %v1907
    %2270 = vmatpush.msra.mxu0 %v1906
    %2271 = vmatpush.msra.mxu0 %v1905
    %2272 = vmatmul.f32.gmra.mxu0 %v1678
    %v2273 = vpop.f32.mrf.mxu0
    %v2274 = vadd.f32 %v2251, %v2273
    %2275 = vmatmul.f32.gmra.mxu0 %v1694
    %v2276 = vpop.f32.mrf.mxu0
    %v2277 = vadd.f32 %v2254, %v2276
    %2278 = vdwg.mxu0
    %2279 = vmatpush.msra.mxu0 %v1936
    %2280 = vmatpush.msra.mxu0 %v1935
    %2281 = vmatpush.msra.mxu0 %v1934
    %2282 = vmatpush.msra.mxu0 %v1933
    %2283 = vmatpush.msra.mxu0 %v1932
    %2284 = vmatpush.msra.mxu0 %v1931
    %2285 = vmatpush.msra.mxu0 %v1930
    %2286 = vmatpush.msra.mxu0 %v1929
    %2287 = vmatpush.msra.mxu0 %v1928
    %2288 = vmatpush.msra.mxu0 %v1927
    %2289 = vmatpush.msra.mxu0 %v1926
    %2290 = vmatpush.msra.mxu0 %v1925
    %2291 = vmatpush.msra.mxu0 %v1924
    %2292 = vmatpush.msra.mxu0 %v1923
    %2293 = vmatpush.msra.mxu0 %v1922
    %2294 = vmatpush.msra.mxu0 %v1921
    %2295 = vmatmul.f32.gmra.mxu0 %v1679
    %v2296 = vpop.f32.mrf.mxu0
    %v2297 = vadd.f32 %v2274, %v2296
    %2298 = vmatmul.f32.gmra.mxu0 %v1695
    %v2299 = vpop.f32.mrf.mxu0
    %v2300 = vadd.f32 %v2277, %v2299
    %2301 = vdwg.mxu0
    %2302 = vmatpush.msra.mxu0 %v1952
    %2303 = vmatpush.msra.mxu0 %v1951
    %2304 = vmatpush.msra.mxu0 %v1950
    %2305 = vmatpush.msra.mxu0 %v1949
    %2306 = vmatpush.msra.mxu0 %v1948
    %2307 = vmatpush.msra.mxu0 %v1947
    %2308 = vmatpush.msra.mxu0 %v1946
    %2309 = vmatpush.msra.mxu0 %v1945
    %2310 = vmatpush.msra.mxu0 %v1944
    %2311 = vmatpush.msra.mxu0 %v1943
    %2312 = vmatpush.msra.mxu0 %v1942
    %2313 = vmatpush.msra.mxu0 %v1941
    %2314 = vmatpush.msra.mxu0 %v1940
    %2315 = vmatpush.msra.mxu0 %v1939
    %2316 = vmatpush.msra.mxu0 %v1938
    %2317 = vmatpush.msra.mxu0 %v1937
    %2318 = vmatmul.f32.gmra.mxu0 %v1680
    %v2319 = vpop.f32.mrf.mxu0
    %v2320 = vadd.f32 %v2297, %v2319
    %2321 = vmatmul.f32.gmra.mxu0 %v1696
    %v2322 = vpop.f32.mrf.mxu0
    %v2323 = vadd.f32 %v2300, %v2322
    %2324 = vdwg.mxu0
    %v2325 = vadd.f32 %v1189, %v2320
    %v2326 = vadd.f32 %v1190, %v2323
    %v2327 = vld [vmem:[%s19] sm:$0x1]
    %v2328 = vld [vmem:[%s20] sm:$0x1]
    %v2329 = vsel %vm115, %v2325, 0.0
    %2330 = vadd.xlane.f32.xlu0 %v2329
    %v2331 = vpop.xlane.xlu0 %2330
    %v2332 = vsel %vm115, %v2326, 0.0
    %2333 = vadd.xlane.f32.xlu0 %v2332
    %v2334 = vpop.xlane.xlu0 %2333
    %v2335 = vmul.f32 %v2331, %v1142
    %v2336 = vmul.f32 %v2334, %v1142
    %v2337 = vsub.f32 %v2325, %v2335
    %v2338 = vsub.f32 %v2326, %v2336
    %v2339 = vmul.f32 %v2337, %v2337
    %v2340 = vmul.f32 %v2338, %v2338
    %v2341 = vsel %vm115, %v2339, 0.0
    %2342 = vadd.xlane.f32.xlu0 %v2341
    %v2343 = vpop.xlane.xlu0 %2342
    %v2344 = vsel %vm115, %v2340, 0.0
    %2345 = vadd.xlane.f32.xlu0 %v2344
    %v2346 = vpop.xlane.xlu0 %2345
    %v2347 = vmul.f32 %v2343, %v1142
    %v2348 = vmul.f32 %v2346, %v1142
    %v2349 = vadd.f32 %v2347, 1e-05
    %v2350 = vadd.f32 %v2348, 1e-05
    %v2351 = vrsqrt.pop %v2349
    %v2352 = vmul.f32 %v2351, %v2349
    %v2353 = vmul.f32 %v2352, %v2351
    %v2354 = vmul.f32 0.5, %v2353
    %v2355 = vsub.f32 1.5, %v2354
    %v2356 = vmul.f32 %v2351, %v2355
    %vm2357 = vweird.f32 %v2349
    %vm2358 = vweird.f32 %v2351
    %vm2359 = vmor %vm2357, %vm2358
    %v2360 = vsel %vm2359, %v2351, %v2356
    %v2361 = vrsqrt.pop %v2350
    %v2362 = vmul.f32 %v2361, %v2350
    %v2363 = vmul.f32 %v2362, %v2361
    %v2364 = vmul.f32 0.5, %v2363
    %v2365 = vsub.f32 1.5, %v2364
    %v2366 = vmul.f32 %v2361, %v2365
    %vm2367 = vweird.f32 %v2350
    %vm2368 = vweird.f32 %v2361
    %vm2369 = vmor %vm2367, %vm2368
    %v2370 = vsel %vm2369, %v2361, %v2366
    %v2371 = vmul.f32 %v2337, %v2360
    %v2372 = vmul.f32 %v2338, %v2370
    %v2374 = vperm.slane %v2327, 0
    %v2376 = vmul.f32 %v2371, %v2374
    %v2377 = vmul.f32 %v2372, %v2374
    %v2379 = vperm.slane %v2328, 0
    %v2381 = vadd.f32 %v2376, %v2379
    %v2382 = vadd.f32 %v2377, %v2379
    %s2383 = scalar_lea.vmem %s5, 128
    %v2384 = vld [vmem:[%s2383] sm:$0xff]
    %v2385 = vld [vmem:[%s2383 + $0x8] sm:$0xff]
    %v2386 = vld [vmem:[%s2383 + $0x10] sm:$0xff]
    %v2387 = vld [vmem:[%s2383 + $0x18] sm:$0xff]
    %s2388 = scalar_lea.vmem %s6, 4
    %v2389 = vld [vmem:[%s2388] sm:$0x1]
    %v2391 = vperm.slane %v2389, 0
    %v2394 = vsel %vm115, %v2381, 0
    %v2397 = vsel %vm115, %v2382, 0
    %2399 = vmatpush.msra.mxu0 0.0
    %2400 = vmatpush.msra.mxu0 0.0
    %2401 = vmatpush.msra.mxu0 0.0
    %2402 = vmatpush.msra.mxu0 0.0
    %2403 = vmatpush.msra.mxu0 0.0
    %2404 = vmatpush.msra.mxu0 0.0
    %2405 = vmatpush.msra.mxu0 0.0
    %2406 = vmatpush.msra.mxu0 0.0
    %2407 = vmatpush.msra.mxu0 0.0
    %2408 = vmatpush.msra.mxu0 0.0
    %2409 = vmatpush.msra.mxu0 0.0
    %2410 = vmatpush.msra.mxu0 0.0
    %2411 = vmatpush.msra.mxu0 %v2387
    %2412 = vmatpush.msra.mxu0 %v2386
    %2413 = vmatpush.msra.mxu0 %v2385
    %2414 = vmatpush.msra.mxu0 %v2384
    %2415 = vmatmul.f32.gmra.mxu0 %v2394
    %v2416 = vpop.f32.mrf.mxu0
    %v2417 = vadd.f32 %v2391, %v2416
    %2418 = vmatmul.f32.gmra.mxu0 %v2397
    %v2419 = vpop.f32.mrf.mxu0
    %v2420 = vadd.f32 %v2391, %v2419
    %2421 = vdwg.mxu0
    %s2422 = scalar_lea.vmem %s7, 128
    %v2423 = vld [vmem:[%s2422] sm:$0xff]
    %v2424 = vld [vmem:[%s2422 + $0x8] sm:$0xff]
    %v2425 = vld [vmem:[%s2422 + $0x10] sm:$0xff]
    %v2426 = vld [vmem:[%s2422 + $0x18] sm:$0xff]
    %s2427 = scalar_lea.vmem %s8, 4
    %v2428 = vld [vmem:[%s2427] sm:$0x1]
    %v2430 = vperm.slane %v2428, 0
    %2432 = vmatpush.msra.mxu0 0.0
    %2433 = vmatpush.msra.mxu0 0.0
    %2434 = vmatpush.msra.mxu0 0.0
    %2435 = vmatpush.msra.mxu0 0.0
    %2436 = vmatpush.msra.mxu0 0.0
    %2437 = vmatpush.msra.mxu0 0.0
    %2438 = vmatpush.msra.mxu0 0.0
    %2439 = vmatpush.msra.mxu0 0.0
    %2440 = vmatpush.msra.mxu0 0.0
    %2441 = vmatpush.msra.mxu0 0.0
    %2442 = vmatpush.msra.mxu0 0.0
    %2443 = vmatpush.msra.mxu0 0.0
    %2444 = vmatpush.msra.mxu0 %v2426
    %2445 = vmatpush.msra.mxu0 %v2425
    %2446 = vmatpush.msra.mxu0 %v2424
    %2447 = vmatpush.msra.mxu0 %v2423
    %2448 = vmatmul.f32.gmra.mxu0 %v2394
    %v2449 = vpop.f32.mrf.mxu0
    %v2450 = vadd.f32 %v2430, %v2449
    %2451 = vmatmul.f32.gmra.mxu0 %v2397
    %v2452 = vpop.f32.mrf.mxu0
    %v2453 = vadd.f32 %v2430, %v2452
    %2454 = vdwg.mxu0
    %s2455 = scalar_lea.vmem %s9, 128
    %v2456 = vld [vmem:[%s2455] sm:$0xff]
    %v2457 = vld [vmem:[%s2455 + $0x8] sm:$0xff]
    %v2458 = vld [vmem:[%s2455 + $0x10] sm:$0xff]
    %v2459 = vld [vmem:[%s2455 + $0x18] sm:$0xff]
    %s2460 = scalar_lea.vmem %s10, 4
    %v2461 = vld [vmem:[%s2460] sm:$0x1]
    %v2463 = vperm.slane %v2461, 0
    %2465 = vmatpush.msra.mxu0 0.0
    %2466 = vmatpush.msra.mxu0 0.0
    %2467 = vmatpush.msra.mxu0 0.0
    %2468 = vmatpush.msra.mxu0 0.0
    %2469 = vmatpush.msra.mxu0 0.0
    %2470 = vmatpush.msra.mxu0 0.0
    %2471 = vmatpush.msra.mxu0 0.0
    %2472 = vmatpush.msra.mxu0 0.0
    %2473 = vmatpush.msra.mxu0 0.0
    %2474 = vmatpush.msra.mxu0 0.0
    %2475 = vmatpush.msra.mxu0 0.0
    %2476 = vmatpush.msra.mxu0 0.0
    %2477 = vmatpush.msra.mxu0 %v2459
    %2478 = vmatpush.msra.mxu0 %v2458
    %2479 = vmatpush.msra.mxu0 %v2457
    %2480 = vmatpush.msra.mxu0 %v2456
    %2481 = vmatmul.f32.gmra.mxu0 %v2394
    %v2482 = vpop.f32.mrf.mxu0
    %v2483 = vadd.f32 %v2463, %v2482
    %2484 = vmatmul.f32.gmra.mxu0 %v2397
    %v2485 = vpop.f32.mrf.mxu0
    %v2486 = vadd.f32 %v2463, %v2485
    %2487 = vdwg.mxu0
    %v2489 = vsel %vm207, %v2417, 0
    %v2492 = vsel %vm207, %v2450, 0
    %2494 = vmatpush.xpose.msra.mxu0 0.0
    %2495 = vmatpush.xpose.msra.mxu0 0.0
    %2496 = vmatpush.xpose.msra.mxu0 0.0
    %2497 = vmatpush.xpose.msra.mxu0 0.0
    %2498 = vmatpush.xpose.msra.mxu0 0.0
    %2499 = vmatpush.xpose.msra.mxu0 0.0
    %2500 = vmatpush.xpose.msra.mxu0 0.0
    %2501 = vmatpush.xpose.msra.mxu0 0.0
    %2502 = vmatpush.xpose.msra.mxu0 0.0
    %2503 = vmatpush.xpose.msra.mxu0 0.0
    %2504 = vmatpush.xpose.msra.mxu0 0.0
    %2505 = vmatpush.xpose.msra.mxu0 0.0
    %2506 = vmatpush.xpose.msra.mxu0 0.0
    %2507 = vmatpush.xpose.msra.mxu0 0.0
    %2508 = vmatpush.xpose.msra.mxu0 0.0
    %2509 = vmatpush.xpose.msra.mxu0 %v2492
    %2510 = vmatmul.f32.gmra.mxu0 %v2489
    %v2511 = vpop.f32.mrf.mxu0
    %v2512 = vadd.f32 0.0, %v2511
    %2513 = vdwg.mxu0
    %v2515 = vsel %vm207, %v2420, 0
    %v2518 = vsel %vm207, %v2453, 0
    %2520 = vmatpush.xpose.msra.mxu0 0.0
    %2521 = vmatpush.xpose.msra.mxu0 0.0
    %2522 = vmatpush.xpose.msra.mxu0 0.0
    %2523 = vmatpush.xpose.msra.mxu0 0.0
    %2524 = vmatpush.xpose.msra.mxu0 0.0
    %2525 = vmatpush.xpose.msra.mxu0 0.0
    %2526 = vmatpush.xpose.msra.mxu0 0.0
    %2527 = vmatpush.xpose.msra.mxu0 0.0
    %2528 = vmatpush.xpose.msra.mxu0 0.0
    %2529 = vmatpush.xpose.msra.mxu0 0.0
    %2530 = vmatpush.xpose.msra.mxu0 0.0
    %2531 = vmatpush.xpose.msra.mxu0 0.0
    %2532 = vmatpush.xpose.msra.mxu0 0.0
    %2533 = vmatpush.xpose.msra.mxu0 0.0
    %2534 = vmatpush.xpose.msra.mxu0 0.0
    %2535 = vmatpush.xpose.msra.mxu0 %v2518
    %2536 = vmatmul.f32.gmra.mxu0 %v2515
    %v2537 = vpop.f32.mrf.mxu0
    %v2538 = vadd.f32 0.0, %v2537
    %2539 = vdwg.mxu0
    %v2540 = vmul.f32 %v2512, 0.35355338
    %v2541 = vmul.f32 %v2538, 0.35355338
    %v2542 = vsel %vm207, %v2540, -inf
    %2543 = vmax.xlane.f32.xlu0 %v2542
    %v2544 = vpop.xlane.xlu0 %2543
    %v2545 = vsel %vm207, %v2541, -inf
    %2546 = vmax.xlane.f32.xlu0 %v2545
    %v2547 = vpop.xlane.xlu0 %2546
    %v2548 = vsub.f32 %v2540, %v2544
    %v2549 = vsub.f32 %v2541, %v2547
    %v2550 = vmul.f32 %v2548, 1.442695
    %v2551 = vpow.pop %v2550
    %v2552 = vmul.f32 %v2549, 1.442695
    %v2553 = vpow.pop %v2552
    %v2554 = vsel %vm207, %v2551, 0.0
    %2555 = vadd.xlane.f32.xlu0 %v2554
    %v2556 = vpop.xlane.xlu0 %2555
    %v2557 = vsel %vm207, %v2553, 0.0
    %2558 = vadd.xlane.f32.xlu0 %v2557
    %v2559 = vpop.xlane.xlu0 %2558
    %v2560 = vrcp.pop %v2556
    %v2561 = vrcp.pop %v2559
    %v2562 = vmul.f32 %v2551, %v2560
    %v2563 = vmul.f32 %v2553, %v2561
    %v2565 = vsel %vm207, %v2562, 0
    %2567 = vmatpush.msra.mxu0 0.0
    %2568 = vmatpush.msra.mxu0 0.0
    %2569 = vmatpush.msra.mxu0 0.0
    %2570 = vmatpush.msra.mxu0 0.0
    %2571 = vmatpush.msra.mxu0 0.0
    %2572 = vmatpush.msra.mxu0 0.0
    %2573 = vmatpush.msra.mxu0 0.0
    %2574 = vmatpush.msra.mxu0 0.0
    %2575 = vmatpush.msra.mxu0 0.0
    %2576 = vmatpush.msra.mxu0 0.0
    %2577 = vmatpush.msra.mxu0 0.0
    %2578 = vmatpush.msra.mxu0 0.0
    %2579 = vmatpush.msra.mxu0 0.0
    %2580 = vmatpush.msra.mxu0 0.0
    %2581 = vmatpush.msra.mxu0 0.0
    %2582 = vmatpush.msra.mxu0 %v2483
    %2583 = vmatmul.f32.gmra.mxu0 %v2565
    %v2584 = vpop.f32.mrf.mxu0
    %v2585 = vadd.f32 0.0, %v2584
    %2586 = vdwg.mxu0
    %v2588 = vsel %vm207, %v2563, 0
    %2590 = vmatpush.msra.mxu0 0.0
    %2591 = vmatpush.msra.mxu0 0.0
    %2592 = vmatpush.msra.mxu0 0.0
    %2593 = vmatpush.msra.mxu0 0.0
    %2594 = vmatpush.msra.mxu0 0.0
    %2595 = vmatpush.msra.mxu0 0.0
    %2596 = vmatpush.msra.mxu0 0.0
    %2597 = vmatpush.msra.mxu0 0.0
    %2598 = vmatpush.msra.mxu0 0.0
    %2599 = vmatpush.msra.mxu0 0.0
    %2600 = vmatpush.msra.mxu0 0.0
    %2601 = vmatpush.msra.mxu0 0.0
    %2602 = vmatpush.msra.mxu0 0.0
    %2603 = vmatpush.msra.mxu0 0.0
    %2604 = vmatpush.msra.mxu0 0.0
    %2605 = vmatpush.msra.mxu0 %v2486
    %2606 = vmatmul.f32.gmra.mxu0 %v2588
    %v2607 = vpop.f32.mrf.mxu0
    %v2608 = vadd.f32 0.0, %v2607
    %2609 = vdwg.mxu0
    %s2610 = scalar_lea.vmem %s11, 32
    %v2611 = vld [vmem:[%s2610] sm:$0xff]
    %s2612 = scalar_lea.vmem %s5, 160
    %v2613 = vld [vmem:[%s2612] sm:$0xff]
    %v2614 = vld [vmem:[%s2612 + $0x8] sm:$0xff]
    %v2615 = vld [vmem:[%s2612 + $0x10] sm:$0xff]
    %v2616 = vld [vmem:[%s2612 + $0x18] sm:$0xff]
    %s2617 = scalar_lea.vmem %s6, 5
    %v2618 = vld [vmem:[%s2617] sm:$0x1]
    %v2620 = vperm.slane %v2618, 0
    %2622 = vmatpush.msra.mxu0 0.0
    %2623 = vmatpush.msra.mxu0 0.0
    %2624 = vmatpush.msra.mxu0 0.0
    %2625 = vmatpush.msra.mxu0 0.0
    %2626 = vmatpush.msra.mxu0 0.0
    %2627 = vmatpush.msra.mxu0 0.0
    %2628 = vmatpush.msra.mxu0 0.0
    %2629 = vmatpush.msra.mxu0 0.0
    %2630 = vmatpush.msra.mxu0 0.0
    %2631 = vmatpush.msra.mxu0 0.0
    %2632 = vmatpush.msra.mxu0 0.0
    %2633 = vmatpush.msra.mxu0 0.0
    %2634 = vmatpush.msra.mxu0 %v2616
    %2635 = vmatpush.msra.mxu0 %v2615
    %2636 = vmatpush.msra.mxu0 %v2614
    %2637 = vmatpush.msra.mxu0 %v2613
    %2638 = vmatmul.f32.gmra.mxu0 %v2394
    %v2639 = vpop.f32.mrf.mxu0
    %v2640 = vadd.f32 %v2620, %v2639
    %2641 = vmatmul.f32.gmra.mxu0 %v2397
    %v2642 = vpop.f32.mrf.mxu0
    %v2643 = vadd.f32 %v2620, %v2642
    %2644 = vdwg.mxu0
    %s2645 = scalar_lea.vmem %s7, 160
    %v2646 = vld [vmem:[%s2645] sm:$0xff]
    %v2647 = vld [vmem:[%s2645 + $0x8] sm:$0xff]
    %v2648 = vld [vmem:[%s2645 + $0x10] sm:$0xff]
    %v2649 = vld [vmem:[%s2645 + $0x18] sm:$0xff]
    %s2650 = scalar_lea.vmem %s8, 5
    %v2651 = vld [vmem:[%s2650] sm:$0x1]
    %v2653 = vperm.slane %v2651, 0
    %2655 = vmatpush.msra.mxu0 0.0
    %2656 = vmatpush.msra.mxu0 0.0
    %2657 = vmatpush.msra.mxu0 0.0
    %2658 = vmatpush.msra.mxu0 0.0
    %2659 = vmatpush.msra.mxu0 0.0
    %2660 = vmatpush.msra.mxu0 0.0
    %2661 = vmatpush.msra.mxu0 0.0
    %2662 = vmatpush.msra.mxu0 0.0
    %2663 = vmatpush.msra.mxu0 0.0
    %2664 = vmatpush.msra.mxu0 0.0
    %2665 = vmatpush.msra.mxu0 0.0
    %2666 = vmatpush.msra.mxu0 0.0
    %2667 = vmatpush.msra.mxu0 %v2649
    %2668 = vmatpush.msra.mxu0 %v2648
    %2669 = vmatpush.msra.mxu0 %v2647
    %2670 = vmatpush.msra.mxu0 %v2646
    %2671 = vmatmul.f32.gmra.mxu0 %v2394
    %v2672 = vpop.f32.mrf.mxu0
    %v2673 = vadd.f32 %v2653, %v2672
    %2674 = vmatmul.f32.gmra.mxu0 %v2397
    %v2675 = vpop.f32.mrf.mxu0
    %v2676 = vadd.f32 %v2653, %v2675
    %2677 = vdwg.mxu0
    %s2678 = scalar_lea.vmem %s9, 160
    %v2679 = vld [vmem:[%s2678] sm:$0xff]
    %v2680 = vld [vmem:[%s2678 + $0x8] sm:$0xff]
    %v2681 = vld [vmem:[%s2678 + $0x10] sm:$0xff]
    %v2682 = vld [vmem:[%s2678 + $0x18] sm:$0xff]
    %s2683 = scalar_lea.vmem %s10, 5
    %v2684 = vld [vmem:[%s2683] sm:$0x1]
    %v2686 = vperm.slane %v2684, 0
    %2688 = vmatpush.msra.mxu0 0.0
    %2689 = vmatpush.msra.mxu0 0.0
    %2690 = vmatpush.msra.mxu0 0.0
    %2691 = vmatpush.msra.mxu0 0.0
    %2692 = vmatpush.msra.mxu0 0.0
    %2693 = vmatpush.msra.mxu0 0.0
    %2694 = vmatpush.msra.mxu0 0.0
    %2695 = vmatpush.msra.mxu0 0.0
    %2696 = vmatpush.msra.mxu0 0.0
    %2697 = vmatpush.msra.mxu0 0.0
    %2698 = vmatpush.msra.mxu0 0.0
    %2699 = vmatpush.msra.mxu0 0.0
    %2700 = vmatpush.msra.mxu0 %v2682
    %2701 = vmatpush.msra.mxu0 %v2681
    %2702 = vmatpush.msra.mxu0 %v2680
    %2703 = vmatpush.msra.mxu0 %v2679
    %2704 = vmatmul.f32.gmra.mxu0 %v2394
    %v2705 = vpop.f32.mrf.mxu0
    %v2706 = vadd.f32 %v2686, %v2705
    %2707 = vmatmul.f32.gmra.mxu0 %v2397
    %v2708 = vpop.f32.mrf.mxu0
    %v2709 = vadd.f32 %v2686, %v2708
    %2710 = vdwg.mxu0
    %v2712 = vsel %vm207, %v2640, 0
    %v2715 = vsel %vm207, %v2673, 0
    %2717 = vmatpush.xpose.msra.mxu0 0.0
    %2718 = vmatpush.xpose.msra.mxu0 0.0
    %2719 = vmatpush.xpose.msra.mxu0 0.0
    %2720 = vmatpush.xpose.msra.mxu0 0.0
    %2721 = vmatpush.xpose.msra.mxu0 0.0
    %2722 = vmatpush.xpose.msra.mxu0 0.0
    %2723 = vmatpush.xpose.msra.mxu0 0.0
    %2724 = vmatpush.xpose.msra.mxu0 0.0
    %2725 = vmatpush.xpose.msra.mxu0 0.0
    %2726 = vmatpush.xpose.msra.mxu0 0.0
    %2727 = vmatpush.xpose.msra.mxu0 0.0
    %2728 = vmatpush.xpose.msra.mxu0 0.0
    %2729 = vmatpush.xpose.msra.mxu0 0.0
    %2730 = vmatpush.xpose.msra.mxu0 0.0
    %2731 = vmatpush.xpose.msra.mxu0 0.0
    %2732 = vmatpush.xpose.msra.mxu0 %v2715
    %2733 = vmatmul.f32.gmra.mxu0 %v2712
    %v2734 = vpop.f32.mrf.mxu0
    %v2735 = vadd.f32 0.0, %v2734
    %2736 = vdwg.mxu0
    %v2738 = vsel %vm207, %v2643, 0
    %v2741 = vsel %vm207, %v2676, 0
    %2743 = vmatpush.xpose.msra.mxu0 0.0
    %2744 = vmatpush.xpose.msra.mxu0 0.0
    %2745 = vmatpush.xpose.msra.mxu0 0.0
    %2746 = vmatpush.xpose.msra.mxu0 0.0
    %2747 = vmatpush.xpose.msra.mxu0 0.0
    %2748 = vmatpush.xpose.msra.mxu0 0.0
    %2749 = vmatpush.xpose.msra.mxu0 0.0
    %2750 = vmatpush.xpose.msra.mxu0 0.0
    %2751 = vmatpush.xpose.msra.mxu0 0.0
    %2752 = vmatpush.xpose.msra.mxu0 0.0
    %2753 = vmatpush.xpose.msra.mxu0 0.0
    %2754 = vmatpush.xpose.msra.mxu0 0.0
    %2755 = vmatpush.xpose.msra.mxu0 0.0
    %2756 = vmatpush.xpose.msra.mxu0 0.0
    %2757 = vmatpush.xpose.msra.mxu0 0.0
    %2758 = vmatpush.xpose.msra.mxu0 %v2741
    %2759 = vmatmul.f32.gmra.mxu0 %v2738
    %v2760 = vpop.f32.mrf.mxu0
    %v2761 = vadd.f32 0.0, %v2760
    %2762 = vdwg.mxu0
    %v2763 = vmul.f32 %v2735, 0.35355338
    %v2764 = vmul.f32 %v2761, 0.35355338
    %v2765 = vsel %vm207, %v2763, -inf
    %2766 = vmax.xlane.f32.xlu0 %v2765
    %v2767 = vpop.xlane.xlu0 %2766
    %v2768 = vsel %vm207, %v2764, -inf
    %2769 = vmax.xlane.f32.xlu0 %v2768
    %v2770 = vpop.xlane.xlu0 %2769
    %v2771 = vsub.f32 %v2763, %v2767
    %v2772 = vsub.f32 %v2764, %v2770
    %v2773 = vmul.f32 %v2771, 1.442695
    %v2774 = vpow.pop %v2773
    %v2775 = vmul.f32 %v2772, 1.442695
    %v2776 = vpow.pop %v2775
    %v2777 = vsel %vm207, %v2774, 0.0
    %2778 = vadd.xlane.f32.xlu0 %v2777
    %v2779 = vpop.xlane.xlu0 %2778
    %v2780 = vsel %vm207, %v2776, 0.0
    %2781 = vadd.xlane.f32.xlu0 %v2780
    %v2782 = vpop.xlane.xlu0 %2781
    %v2783 = vrcp.pop %v2779
    %v2784 = vrcp.pop %v2782
    %v2785 = vmul.f32 %v2774, %v2783
    %v2786 = vmul.f32 %v2776, %v2784
    %v2788 = vsel %vm207, %v2785, 0
    %2790 = vmatpush.msra.mxu0 0.0
    %2791 = vmatpush.msra.mxu0 0.0
    %2792 = vmatpush.msra.mxu0 0.0
    %2793 = vmatpush.msra.mxu0 0.0
    %2794 = vmatpush.msra.mxu0 0.0
    %2795 = vmatpush.msra.mxu0 0.0
    %2796 = vmatpush.msra.mxu0 0.0
    %2797 = vmatpush.msra.mxu0 0.0
    %2798 = vmatpush.msra.mxu0 0.0
    %2799 = vmatpush.msra.mxu0 0.0
    %2800 = vmatpush.msra.mxu0 0.0
    %2801 = vmatpush.msra.mxu0 0.0
    %2802 = vmatpush.msra.mxu0 0.0
    %2803 = vmatpush.msra.mxu0 0.0
    %2804 = vmatpush.msra.mxu0 0.0
    %2805 = vmatpush.msra.mxu0 %v2706
    %2806 = vmatmul.f32.gmra.mxu0 %v2788
    %v2807 = vpop.f32.mrf.mxu0
    %v2808 = vadd.f32 0.0, %v2807
    %2809 = vdwg.mxu0
    %v2811 = vsel %vm207, %v2786, 0
    %2813 = vmatpush.msra.mxu0 0.0
    %2814 = vmatpush.msra.mxu0 0.0
    %2815 = vmatpush.msra.mxu0 0.0
    %2816 = vmatpush.msra.mxu0 0.0
    %2817 = vmatpush.msra.mxu0 0.0
    %2818 = vmatpush.msra.mxu0 0.0
    %2819 = vmatpush.msra.mxu0 0.0
    %2820 = vmatpush.msra.mxu0 0.0
    %2821 = vmatpush.msra.mxu0 0.0
    %2822 = vmatpush.msra.mxu0 0.0
    %2823 = vmatpush.msra.mxu0 0.0
    %2824 = vmatpush.msra.mxu0 0.0
    %2825 = vmatpush.msra.mxu0 0.0
    %2826 = vmatpush.msra.mxu0 0.0
    %2827 = vmatpush.msra.mxu0 0.0
    %2828 = vmatpush.msra.mxu0 %v2709
    %2829 = vmatmul.f32.gmra.mxu0 %v2811
    %v2830 = vpop.f32.mrf.mxu0
    %v2831 = vadd.f32 0.0, %v2830
    %2832 = vdwg.mxu0
    %s2833 = scalar_lea.vmem %s11, 40
    %v2834 = vld [vmem:[%s2833] sm:$0xff]
    %v2836 = vsel %vm207, %v2808, 0
    %v2839 = vsel %vm207, %v2831, 0
    %2841 = vmatpush.msra.mxu0 0.0
    %2842 = vmatpush.msra.mxu0 0.0
    %2843 = vmatpush.msra.mxu0 0.0
    %2844 = vmatpush.msra.mxu0 0.0
    %2845 = vmatpush.msra.mxu0 0.0
    %2846 = vmatpush.msra.mxu0 0.0
    %2847 = vmatpush.msra.mxu0 0.0
    %2848 = vmatpush.msra.mxu0 0.0
    %2849 = vmatpush.msra.mxu0 0.0
    %2850 = vmatpush.msra.mxu0 0.0
    %2851 = vmatpush.msra.mxu0 0.0
    %2852 = vmatpush.msra.mxu0 0.0
    %2853 = vmatpush.msra.mxu0 0.0
    %2854 = vmatpush.msra.mxu0 0.0
    %2855 = vmatpush.msra.mxu0 0.0
    %2856 = vmatpush.msra.mxu0 %v2834
    %2857 = vmatmul.f32.gmra.mxu0 %v2836
    %v2858 = vpop.f32.mrf.mxu0
    %v2859 = vadd.f32 0.0, %v2858
    %2860 = vmatmul.f32.gmra.mxu0 %v2839
    %v2861 = vpop.f32.mrf.mxu0
    %v2862 = vadd.f32 0.0, %v2861
    %2863 = vdwg.mxu0
    %v2865 = vsel %vm207, %v2585, 0
    %v2868 = vsel %vm207, %v2608, 0
    %2870 = vmatpush.msra.mxu0 0.0
    %2871 = vmatpush.msra.mxu0 0.0
    %2872 = vmatpush.msra.mxu0 0.0
    %2873 = vmatpush.msra.mxu0 0.0
    %2874 = vmatpush.msra.mxu0 0.0
    %2875 = vmatpush.msra.mxu0 0.0
    %2876 = vmatpush.msra.mxu0 0.0
    %2877 = vmatpush.msra.mxu0 0.0
    %2878 = vmatpush.msra.mxu0 0.0
    %2879 = vmatpush.msra.mxu0 0.0
    %2880 = vmatpush.msra.mxu0 0.0
    %2881 = vmatpush.msra.mxu0 0.0
    %2882 = vmatpush.msra.mxu0 0.0
    %2883 = vmatpush.msra.mxu0 0.0
    %2884 = vmatpush.msra.mxu0 0.0
    %2885 = vmatpush.msra.mxu0 %v2611
    %2886 = vmatmul.f32.gmra.mxu0 %v2865
    %v2887 = vpop.f32.mrf.mxu0
    %v2888 = vadd.f32 %v2859, %v2887
    %2889 = vmatmul.f32.gmra.mxu0 %v2868
    %v2890 = vpop.f32.mrf.mxu0
    %v2891 = vadd.f32 %v2862, %v2890
    %2892 = vdwg.mxu0
    %s2893 = scalar_lea.vmem %s5, 192
    %v2894 = vld [vmem:[%s2893] sm:$0xff]
    %v2895 = vld [vmem:[%s2893 + $0x8] sm:$0xff]
    %v2896 = vld [vmem:[%s2893 + $0x10] sm:$0xff]
    %v2897 = vld [vmem:[%s2893 + $0x18] sm:$0xff]
    %s2898 = scalar_lea.vmem %s6, 6
    %v2899 = vld [vmem:[%s2898] sm:$0x1]
    %v2901 = vperm.slane %v2899, 0
    %2903 = vmatpush.msra.mxu0 0.0
    %2904 = vmatpush.msra.mxu0 0.0
    %2905 = vmatpush.msra.mxu0 0.0
    %2906 = vmatpush.msra.mxu0 0.0
    %2907 = vmatpush.msra.mxu0 0.0
    %2908 = vmatpush.msra.mxu0 0.0
    %2909 = vmatpush.msra.mxu0 0.0
    %2910 = vmatpush.msra.mxu0 0.0
    %2911 = vmatpush.msra.mxu0 0.0
    %2912 = vmatpush.msra.mxu0 0.0
    %2913 = vmatpush.msra.mxu0 0.0
    %2914 = vmatpush.msra.mxu0 0.0
    %2915 = vmatpush.msra.mxu0 %v2897
    %2916 = vmatpush.msra.mxu0 %v2896
    %2917 = vmatpush.msra.mxu0 %v2895
    %2918 = vmatpush.msra.mxu0 %v2894
    %2919 = vmatmul.f32.gmra.mxu0 %v2394
    %v2920 = vpop.f32.mrf.mxu0
    %v2921 = vadd.f32 %v2901, %v2920
    %2922 = vmatmul.f32.gmra.mxu0 %v2397
    %v2923 = vpop.f32.mrf.mxu0
    %v2924 = vadd.f32 %v2901, %v2923
    %2925 = vdwg.mxu0
    %s2926 = scalar_lea.vmem %s7, 192
    %v2927 = vld [vmem:[%s2926] sm:$0xff]
    %v2928 = vld [vmem:[%s2926 + $0x8] sm:$0xff]
    %v2929 = vld [vmem:[%s2926 + $0x10] sm:$0xff]
    %v2930 = vld [vmem:[%s2926 + $0x18] sm:$0xff]
    %s2931 = scalar_lea.vmem %s8, 6
    %v2932 = vld [vmem:[%s2931] sm:$0x1]
    %v2934 = vperm.slane %v2932, 0
    %2936 = vmatpush.msra.mxu0 0.0
    %2937 = vmatpush.msra.mxu0 0.0
    %2938 = vmatpush.msra.mxu0 0.0
    %2939 = vmatpush.msra.mxu0 0.0
    %2940 = vmatpush.msra.mxu0 0.0
    %2941 = vmatpush.msra.mxu0 0.0
    %2942 = vmatpush.msra.mxu0 0.0
    %2943 = vmatpush.msra.mxu0 0.0
    %2944 = vmatpush.msra.mxu0 0.0
    %2945 = vmatpush.msra.mxu0 0.0
    %2946 = vmatpush.msra.mxu0 0.0
    %2947 = vmatpush.msra.mxu0 0.0
    %2948 = vmatpush.msra.mxu0 %v2930
    %2949 = vmatpush.msra.mxu0 %v2929
    %2950 = vmatpush.msra.mxu0 %v2928
    %2951 = vmatpush.msra.mxu0 %v2927
    %2952 = vmatmul.f32.gmra.mxu0 %v2394
    %v2953 = vpop.f32.mrf.mxu0
    %v2954 = vadd.f32 %v2934, %v2953
    %2955 = vmatmul.f32.gmra.mxu0 %v2397
    %v2956 = vpop.f32.mrf.mxu0
    %v2957 = vadd.f32 %v2934, %v2956
    %2958 = vdwg.mxu0
    %s2959 = scalar_lea.vmem %s9, 192
    %v2960 = vld [vmem:[%s2959] sm:$0xff]
    %v2961 = vld [vmem:[%s2959 + $0x8] sm:$0xff]
    %v2962 = vld [vmem:[%s2959 + $0x10] sm:$0xff]
    %v2963 = vld [vmem:[%s2959 + $0x18] sm:$0xff]
    %s2964 = scalar_lea.vmem %s10, 6
    %v2965 = vld [vmem:[%s2964] sm:$0x1]
    %v2967 = vperm.slane %v2965, 0
    %2969 = vmatpush.msra.mxu0 0.0
    %2970 = vmatpush.msra.mxu0 0.0
    %2971 = vmatpush.msra.mxu0 0.0
    %2972 = vmatpush.msra.mxu0 0.0
    %2973 = vmatpush.msra.mxu0 0.0
    %2974 = vmatpush.msra.mxu0 0.0
    %2975 = vmatpush.msra.mxu0 0.0
    %2976 = vmatpush.msra.mxu0 0.0
    %2977 = vmatpush.msra.mxu0 0.0
    %2978 = vmatpush.msra.mxu0 0.0
    %2979 = vmatpush.msra.mxu0 0.0
    %2980 = vmatpush.msra.mxu0 0.0
    %2981 = vmatpush.msra.mxu0 %v2963
    %2982 = vmatpush.msra.mxu0 %v2962
    %2983 = vmatpush.msra.mxu0 %v2961
    %2984 = vmatpush.msra.mxu0 %v2960
    %2985 = vmatmul.f32.gmra.mxu0 %v2394
    %v2986 = vpop.f32.mrf.mxu0
    %v2987 = vadd.f32 %v2967, %v2986
    %2988 = vmatmul.f32.gmra.mxu0 %v2397
    %v2989 = vpop.f32.mrf.mxu0
    %v2990 = vadd.f32 %v2967, %v2989
    %2991 = vdwg.mxu0
    %v2993 = vsel %vm207, %v2921, 0
    %v2996 = vsel %vm207, %v2954, 0
    %2998 = vmatpush.xpose.msra.mxu0 0.0
    %2999 = vmatpush.xpose.msra.mxu0 0.0
    %3000 = vmatpush.xpose.msra.mxu0 0.0
    %3001 = vmatpush.xpose.msra.mxu0 0.0
    %3002 = vmatpush.xpose.msra.mxu0 0.0
    %3003 = vmatpush.xpose.msra.mxu0 0.0
    %3004 = vmatpush.xpose.msra.mxu0 0.0
    %3005 = vmatpush.xpose.msra.mxu0 0.0
    %3006 = vmatpush.xpose.msra.mxu0 0.0
    %3007 = vmatpush.xpose.msra.mxu0 0.0
    %3008 = vmatpush.xpose.msra.mxu0 0.0
    %3009 = vmatpush.xpose.msra.mxu0 0.0
    %3010 = vmatpush.xpose.msra.mxu0 0.0
    %3011 = vmatpush.xpose.msra.mxu0 0.0
    %3012 = vmatpush.xpose.msra.mxu0 0.0
    %3013 = vmatpush.xpose.msra.mxu0 %v2996
    %3014 = vmatmul.f32.gmra.mxu0 %v2993
    %v3015 = vpop.f32.mrf.mxu0
    %v3016 = vadd.f32 0.0, %v3015
    %3017 = vdwg.mxu0
    %v3019 = vsel %vm207, %v2924, 0
    %v3022 = vsel %vm207, %v2957, 0
    %3024 = vmatpush.xpose.msra.mxu0 0.0
    %3025 = vmatpush.xpose.msra.mxu0 0.0
    %3026 = vmatpush.xpose.msra.mxu0 0.0
    %3027 = vmatpush.xpose.msra.mxu0 0.0
    %3028 = vmatpush.xpose.msra.mxu0 0.0
    %3029 = vmatpush.xpose.msra.mxu0 0.0
    %3030 = vmatpush.xpose.msra.mxu0 0.0
    %3031 = vmatpush.xpose.msra.mxu0 0.0
    %3032 = vmatpush.xpose.msra.mxu0 0.0
    %3033 = vmatpush.xpose.msra.mxu0 0.0
    %3034 = vmatpush.xpose.msra.mxu0 0.0
    %3035 = vmatpush.xpose.msra.mxu0 0.0
    %3036 = vmatpush.xpose.msra.mxu0 0.0
    %3037 = vmatpush.xpose.msra.mxu0 0.0
    %3038 = vmatpush.xpose.msra.mxu0 0.0
    %3039 = vmatpush.xpose.msra.mxu0 %v3022
    %3040 = vmatmul.f32.gmra.mxu0 %v3019
    %v3041 = vpop.f32.mrf.mxu0
    %v3042 = vadd.f32 0.0, %v3041
    %3043 = vdwg.mxu0
    %v3044 = vmul.f32 %v3016, 0.35355338
    %v3045 = vmul.f32 %v3042, 0.35355338
    %v3046 = vsel %vm207, %v3044, -inf
    %3047 = vmax.xlane.f32.xlu0 %v3046
    %v3048 = vpop.xlane.xlu0 %3047
    %v3049 = vsel %vm207, %v3045, -inf
    %3050 = vmax.xlane.f32.xlu0 %v3049
    %v3051 = vpop.xlane.xlu0 %3050
    %v3052 = vsub.f32 %v3044, %v3048
    %v3053 = vsub.f32 %v3045, %v3051
    %v3054 = vmul.f32 %v3052, 1.442695
    %v3055 = vpow.pop %v3054
    %v3056 = vmul.f32 %v3053, 1.442695
    %v3057 = vpow.pop %v3056
    %v3058 = vsel %vm207, %v3055, 0.0
    %3059 = vadd.xlane.f32.xlu0 %v3058
    %v3060 = vpop.xlane.xlu0 %3059
    %v3061 = vsel %vm207, %v3057, 0.0
    %3062 = vadd.xlane.f32.xlu0 %v3061
    %v3063 = vpop.xlane.xlu0 %3062
    %v3064 = vrcp.pop %v3060
    %v3065 = vrcp.pop %v3063
    %v3066 = vmul.f32 %v3055, %v3064
    %v3067 = vmul.f32 %v3057, %v3065
    %v3069 = vsel %vm207, %v3066, 0
    %3071 = vmatpush.msra.mxu0 0.0
    %3072 = vmatpush.msra.mxu0 0.0
    %3073 = vmatpush.msra.mxu0 0.0
    %3074 = vmatpush.msra.mxu0 0.0
    %3075 = vmatpush.msra.mxu0 0.0
    %3076 = vmatpush.msra.mxu0 0.0
    %3077 = vmatpush.msra.mxu0 0.0
    %3078 = vmatpush.msra.mxu0 0.0
    %3079 = vmatpush.msra.mxu0 0.0
    %3080 = vmatpush.msra.mxu0 0.0
    %3081 = vmatpush.msra.mxu0 0.0
    %3082 = vmatpush.msra.mxu0 0.0
    %3083 = vmatpush.msra.mxu0 0.0
    %3084 = vmatpush.msra.mxu0 0.0
    %3085 = vmatpush.msra.mxu0 0.0
    %3086 = vmatpush.msra.mxu0 %v2987
    %3087 = vmatmul.f32.gmra.mxu0 %v3069
    %v3088 = vpop.f32.mrf.mxu0
    %v3089 = vadd.f32 0.0, %v3088
    %3090 = vdwg.mxu0
    %v3092 = vsel %vm207, %v3067, 0
    %3094 = vmatpush.msra.mxu0 0.0
    %3095 = vmatpush.msra.mxu0 0.0
    %3096 = vmatpush.msra.mxu0 0.0
    %3097 = vmatpush.msra.mxu0 0.0
    %3098 = vmatpush.msra.mxu0 0.0
    %3099 = vmatpush.msra.mxu0 0.0
    %3100 = vmatpush.msra.mxu0 0.0
    %3101 = vmatpush.msra.mxu0 0.0
    %3102 = vmatpush.msra.mxu0 0.0
    %3103 = vmatpush.msra.mxu0 0.0
    %3104 = vmatpush.msra.mxu0 0.0
    %3105 = vmatpush.msra.mxu0 0.0
    %3106 = vmatpush.msra.mxu0 0.0
    %3107 = vmatpush.msra.mxu0 0.0
    %3108 = vmatpush.msra.mxu0 0.0
    %3109 = vmatpush.msra.mxu0 %v2990
    %3110 = vmatmul.f32.gmra.mxu0 %v3092
    %v3111 = vpop.f32.mrf.mxu0
    %v3112 = vadd.f32 0.0, %v3111
    %3113 = vdwg.mxu0
    %s3114 = scalar_lea.vmem %s11, 48
    %v3115 = vld [vmem:[%s3114] sm:$0xff]
    %v3117 = vsel %vm207, %v3089, 0
    %v3120 = vsel %vm207, %v3112, 0
    %3122 = vmatpush.msra.mxu0 0.0
    %3123 = vmatpush.msra.mxu0 0.0
    %3124 = vmatpush.msra.mxu0 0.0
    %3125 = vmatpush.msra.mxu0 0.0
    %3126 = vmatpush.msra.mxu0 0.0
    %3127 = vmatpush.msra.mxu0 0.0
    %3128 = vmatpush.msra.mxu0 0.0
    %3129 = vmatpush.msra.mxu0 0.0
    %3130 = vmatpush.msra.mxu0 0.0
    %3131 = vmatpush.msra.mxu0 0.0
    %3132 = vmatpush.msra.mxu0 0.0
    %3133 = vmatpush.msra.mxu0 0.0
    %3134 = vmatpush.msra.mxu0 0.0
    %3135 = vmatpush.msra.mxu0 0.0
    %3136 = vmatpush.msra.mxu0 0.0
    %3137 = vmatpush.msra.mxu0 %v3115
    %3138 = vmatmul.f32.gmra.mxu0 %v3117
    %v3139 = vpop.f32.mrf.mxu0
    %v3140 = vadd.f32 0.0, %v3139
    %3141 = vmatmul.f32.gmra.mxu0 %v3120
    %v3142 = vpop.f32.mrf.mxu0
    %v3143 = vadd.f32 0.0, %v3142
    %3144 = vdwg.mxu0
    %v3145 = vadd.f32 %v2888, %v3140
    %v3146 = vadd.f32 %v2891, %v3143
    %s3147 = scalar_lea.vmem %s5, 224
    %v3148 = vld [vmem:[%s3147] sm:$0xff]
    %v3149 = vld [vmem:[%s3147 + $0x8] sm:$0xff]
    %v3150 = vld [vmem:[%s3147 + $0x10] sm:$0xff]
    %v3151 = vld [vmem:[%s3147 + $0x18] sm:$0xff]
    %s3152 = scalar_lea.vmem %s6, 7
    %v3153 = vld [vmem:[%s3152] sm:$0x1]
    %v3155 = vperm.slane %v3153, 0
    %3157 = vmatpush.msra.mxu0 0.0
    %3158 = vmatpush.msra.mxu0 0.0
    %3159 = vmatpush.msra.mxu0 0.0
    %3160 = vmatpush.msra.mxu0 0.0
    %3161 = vmatpush.msra.mxu0 0.0
    %3162 = vmatpush.msra.mxu0 0.0
    %3163 = vmatpush.msra.mxu0 0.0
    %3164 = vmatpush.msra.mxu0 0.0
    %3165 = vmatpush.msra.mxu0 0.0
    %3166 = vmatpush.msra.mxu0 0.0
    %3167 = vmatpush.msra.mxu0 0.0
    %3168 = vmatpush.msra.mxu0 0.0
    %3169 = vmatpush.msra.mxu0 %v3151
    %3170 = vmatpush.msra.mxu0 %v3150
    %3171 = vmatpush.msra.mxu0 %v3149
    %3172 = vmatpush.msra.mxu0 %v3148
    %3173 = vmatmul.f32.gmra.mxu0 %v2394
    %v3174 = vpop.f32.mrf.mxu0
    %v3175 = vadd.f32 %v3155, %v3174
    %3176 = vmatmul.f32.gmra.mxu0 %v2397
    %v3177 = vpop.f32.mrf.mxu0
    %v3178 = vadd.f32 %v3155, %v3177
    %3179 = vdwg.mxu0
    %s3180 = scalar_lea.vmem %s7, 224
    %v3181 = vld [vmem:[%s3180] sm:$0xff]
    %v3182 = vld [vmem:[%s3180 + $0x8] sm:$0xff]
    %v3183 = vld [vmem:[%s3180 + $0x10] sm:$0xff]
    %v3184 = vld [vmem:[%s3180 + $0x18] sm:$0xff]
    %s3185 = scalar_lea.vmem %s8, 7
    %v3186 = vld [vmem:[%s3185] sm:$0x1]
    %v3188 = vperm.slane %v3186, 0
    %3190 = vmatpush.msra.mxu0 0.0
    %3191 = vmatpush.msra.mxu0 0.0
    %3192 = vmatpush.msra.mxu0 0.0
    %3193 = vmatpush.msra.mxu0 0.0
    %3194 = vmatpush.msra.mxu0 0.0
    %3195 = vmatpush.msra.mxu0 0.0
    %3196 = vmatpush.msra.mxu0 0.0
    %3197 = vmatpush.msra.mxu0 0.0
    %3198 = vmatpush.msra.mxu0 0.0
    %3199 = vmatpush.msra.mxu0 0.0
    %3200 = vmatpush.msra.mxu0 0.0
    %3201 = vmatpush.msra.mxu0 0.0
    %3202 = vmatpush.msra.mxu0 %v3184
    %3203 = vmatpush.msra.mxu0 %v3183
    %3204 = vmatpush.msra.mxu0 %v3182
    %3205 = vmatpush.msra.mxu0 %v3181
    %3206 = vmatmul.f32.gmra.mxu0 %v2394
    %v3207 = vpop.f32.mrf.mxu0
    %v3208 = vadd.f32 %v3188, %v3207
    %3209 = vmatmul.f32.gmra.mxu0 %v2397
    %v3210 = vpop.f32.mrf.mxu0
    %v3211 = vadd.f32 %v3188, %v3210
    %3212 = vdwg.mxu0
    %s3213 = scalar_lea.vmem %s9, 224
    %v3214 = vld [vmem:[%s3213] sm:$0xff]
    %v3215 = vld [vmem:[%s3213 + $0x8] sm:$0xff]
    %v3216 = vld [vmem:[%s3213 + $0x10] sm:$0xff]
    %v3217 = vld [vmem:[%s3213 + $0x18] sm:$0xff]
    %s3218 = scalar_lea.vmem %s10, 7
    %v3219 = vld [vmem:[%s3218] sm:$0x1]
    %v3221 = vperm.slane %v3219, 0
    %3223 = vmatpush.msra.mxu0 0.0
    %3224 = vmatpush.msra.mxu0 0.0
    %3225 = vmatpush.msra.mxu0 0.0
    %3226 = vmatpush.msra.mxu0 0.0
    %3227 = vmatpush.msra.mxu0 0.0
    %3228 = vmatpush.msra.mxu0 0.0
    %3229 = vmatpush.msra.mxu0 0.0
    %3230 = vmatpush.msra.mxu0 0.0
    %3231 = vmatpush.msra.mxu0 0.0
    %3232 = vmatpush.msra.mxu0 0.0
    %3233 = vmatpush.msra.mxu0 0.0
    %3234 = vmatpush.msra.mxu0 0.0
    %3235 = vmatpush.msra.mxu0 %v3217
    %3236 = vmatpush.msra.mxu0 %v3216
    %3237 = vmatpush.msra.mxu0 %v3215
    %3238 = vmatpush.msra.mxu0 %v3214
    %3239 = vmatmul.f32.gmra.mxu0 %v2394
    %v3240 = vpop.f32.mrf.mxu0
    %v3241 = vadd.f32 %v3221, %v3240
    %3242 = vmatmul.f32.gmra.mxu0 %v2397
    %v3243 = vpop.f32.mrf.mxu0
    %v3244 = vadd.f32 %v3221, %v3243
    %3245 = vdwg.mxu0
    %v3247 = vsel %vm207, %v3175, 0
    %v3250 = vsel %vm207, %v3208, 0
    %3252 = vmatpush.xpose.msra.mxu0 0.0
    %3253 = vmatpush.xpose.msra.mxu0 0.0
    %3254 = vmatpush.xpose.msra.mxu0 0.0
    %3255 = vmatpush.xpose.msra.mxu0 0.0
    %3256 = vmatpush.xpose.msra.mxu0 0.0
    %3257 = vmatpush.xpose.msra.mxu0 0.0
    %3258 = vmatpush.xpose.msra.mxu0 0.0
    %3259 = vmatpush.xpose.msra.mxu0 0.0
    %3260 = vmatpush.xpose.msra.mxu0 0.0
    %3261 = vmatpush.xpose.msra.mxu0 0.0
    %3262 = vmatpush.xpose.msra.mxu0 0.0
    %3263 = vmatpush.xpose.msra.mxu0 0.0
    %3264 = vmatpush.xpose.msra.mxu0 0.0
    %3265 = vmatpush.xpose.msra.mxu0 0.0
    %3266 = vmatpush.xpose.msra.mxu0 0.0
    %3267 = vmatpush.xpose.msra.mxu0 %v3250
    %3268 = vmatmul.f32.gmra.mxu0 %v3247
    %v3269 = vpop.f32.mrf.mxu0
    %v3270 = vadd.f32 0.0, %v3269
    %3271 = vdwg.mxu0
    %v3273 = vsel %vm207, %v3178, 0
    %v3276 = vsel %vm207, %v3211, 0
    %3278 = vmatpush.xpose.msra.mxu0 0.0
    %3279 = vmatpush.xpose.msra.mxu0 0.0
    %3280 = vmatpush.xpose.msra.mxu0 0.0
    %3281 = vmatpush.xpose.msra.mxu0 0.0
    %3282 = vmatpush.xpose.msra.mxu0 0.0
    %3283 = vmatpush.xpose.msra.mxu0 0.0
    %3284 = vmatpush.xpose.msra.mxu0 0.0
    %3285 = vmatpush.xpose.msra.mxu0 0.0
    %3286 = vmatpush.xpose.msra.mxu0 0.0
    %3287 = vmatpush.xpose.msra.mxu0 0.0
    %3288 = vmatpush.xpose.msra.mxu0 0.0
    %3289 = vmatpush.xpose.msra.mxu0 0.0
    %3290 = vmatpush.xpose.msra.mxu0 0.0
    %3291 = vmatpush.xpose.msra.mxu0 0.0
    %3292 = vmatpush.xpose.msra.mxu0 0.0
    %3293 = vmatpush.xpose.msra.mxu0 %v3276
    %3294 = vmatmul.f32.gmra.mxu0 %v3273
    %v3295 = vpop.f32.mrf.mxu0
    %v3296 = vadd.f32 0.0, %v3295
    %3297 = vdwg.mxu0
    %v3298 = vmul.f32 %v3270, 0.35355338
    %v3299 = vmul.f32 %v3296, 0.35355338
    %v3300 = vsel %vm207, %v3298, -inf
    %3301 = vmax.xlane.f32.xlu0 %v3300
    %v3302 = vpop.xlane.xlu0 %3301
    %v3303 = vsel %vm207, %v3299, -inf
    %3304 = vmax.xlane.f32.xlu0 %v3303
    %v3305 = vpop.xlane.xlu0 %3304
    %v3306 = vsub.f32 %v3298, %v3302
    %v3307 = vsub.f32 %v3299, %v3305
    %v3308 = vmul.f32 %v3306, 1.442695
    %v3309 = vpow.pop %v3308
    %v3310 = vmul.f32 %v3307, 1.442695
    %v3311 = vpow.pop %v3310
    %v3312 = vsel %vm207, %v3309, 0.0
    %3313 = vadd.xlane.f32.xlu0 %v3312
    %v3314 = vpop.xlane.xlu0 %3313
    %v3315 = vsel %vm207, %v3311, 0.0
    %3316 = vadd.xlane.f32.xlu0 %v3315
    %v3317 = vpop.xlane.xlu0 %3316
    %v3318 = vrcp.pop %v3314
    %v3319 = vrcp.pop %v3317
    %v3320 = vmul.f32 %v3309, %v3318
    %v3321 = vmul.f32 %v3311, %v3319
    %v3323 = vsel %vm207, %v3320, 0
    %3325 = vmatpush.msra.mxu0 0.0
    %3326 = vmatpush.msra.mxu0 0.0
    %3327 = vmatpush.msra.mxu0 0.0
    %3328 = vmatpush.msra.mxu0 0.0
    %3329 = vmatpush.msra.mxu0 0.0
    %3330 = vmatpush.msra.mxu0 0.0
    %3331 = vmatpush.msra.mxu0 0.0
    %3332 = vmatpush.msra.mxu0 0.0
    %3333 = vmatpush.msra.mxu0 0.0
    %3334 = vmatpush.msra.mxu0 0.0
    %3335 = vmatpush.msra.mxu0 0.0
    %3336 = vmatpush.msra.mxu0 0.0
    %3337 = vmatpush.msra.mxu0 0.0
    %3338 = vmatpush.msra.mxu0 0.0
    %3339 = vmatpush.msra.mxu0 0.0
    %3340 = vmatpush.msra.mxu0 %v3241
    %3341 = vmatmul.f32.gmra.mxu0 %v3323
    %v3342 = vpop.f32.mrf.mxu0
    %v3343 = vadd.f32 0.0, %v3342
    %3344 = vdwg.mxu0
    %v3346 = vsel %vm207, %v3321, 0
    %3348 = vmatpush.msra.mxu0 0.0
    %3349 = vmatpush.msra.mxu0 0.0
    %3350 = vmatpush.msra.mxu0 0.0
    %3351 = vmatpush.msra.mxu0 0.0
    %3352 = vmatpush.msra.mxu0 0.0
    %3353 = vmatpush.msra.mxu0 0.0
    %3354 = vmatpush.msra.mxu0 0.0
    %3355 = vmatpush.msra.mxu0 0.0
    %3356 = vmatpush.msra.mxu0 0.0
    %3357 = vmatpush.msra.mxu0 0.0
    %3358 = vmatpush.msra.mxu0 0.0
    %3359 = vmatpush.msra.mxu0 0.0
    %3360 = vmatpush.msra.mxu0 0.0
    %3361 = vmatpush.msra.mxu0 0.0
    %3362 = vmatpush.msra.mxu0 0.0
    %3363 = vmatpush.msra.mxu0 %v3244
    %3364 = vmatmul.f32.gmra.mxu0 %v3346
    %v3365 = vpop.f32.mrf.mxu0
    %v3366 = vadd.f32 0.0, %v3365
    %3367 = vdwg.mxu0
    %s3368 = scalar_lea.vmem %s11, 56
    %v3369 = vld [vmem:[%s3368] sm:$0xff]
    %v3371 = vsel %vm207, %v3343, 0
    %v3374 = vsel %vm207, %v3366, 0
    %3376 = vmatpush.msra.mxu0 0.0
    %3377 = vmatpush.msra.mxu0 0.0
    %3378 = vmatpush.msra.mxu0 0.0
    %3379 = vmatpush.msra.mxu0 0.0
    %3380 = vmatpush.msra.mxu0 0.0
    %3381 = vmatpush.msra.mxu0 0.0
    %3382 = vmatpush.msra.mxu0 0.0
    %3383 = vmatpush.msra.mxu0 0.0
    %3384 = vmatpush.msra.mxu0 0.0
    %3385 = vmatpush.msra.mxu0 0.0
    %3386 = vmatpush.msra.mxu0 0.0
    %3387 = vmatpush.msra.mxu0 0.0
    %3388 = vmatpush.msra.mxu0 0.0
    %3389 = vmatpush.msra.mxu0 0.0
    %3390 = vmatpush.msra.mxu0 0.0
    %3391 = vmatpush.msra.mxu0 %v3369
    %3392 = vmatmul.f32.gmra.mxu0 %v3371
    %v3393 = vpop.f32.mrf.mxu0
    %v3394 = vadd.f32 0.0, %v3393
    %3395 = vmatmul.f32.gmra.mxu0 %v3374
    %v3396 = vpop.f32.mrf.mxu0
    %v3397 = vadd.f32 0.0, %v3396
    %3398 = vdwg.mxu0
    %v3399 = vadd.f32 %v3145, %v3394
    %v3400 = vadd.f32 %v3146, %v3397
    %s3401 = scalar_lea.vmem %s12, 1
    %v3402 = vld [vmem:[%s3401] sm:$0x1]
    %v3404 = vperm.slane %v3402, 0
    %v3406 = vadd.f32 %v3399, %v3404
    %v3407 = vadd.f32 %v3400, %v3404
    %v3408 = vadd.f32 %v2381, %v3406
    %v3409 = vadd.f32 %v2382, %v3407
    %s3410 = scalar_lea.vmem %s17, 1
    %v3411 = vld [vmem:[%s3410] sm:$0x1]
    %s3412 = scalar_lea.vmem %s18, 1
    %v3413 = vld [vmem:[%s3412] sm:$0x1]
    %v3414 = vsel %vm115, %v3408, 0.0
    %3415 = vadd.xlane.f32.xlu0 %v3414
    %v3416 = vpop.xlane.xlu0 %3415
    %v3417 = vsel %vm115, %v3409, 0.0
    %3418 = vadd.xlane.f32.xlu0 %v3417
    %v3419 = vpop.xlane.xlu0 %3418
    %v3420 = vmul.f32 %v3416, %v1142
    %v3421 = vmul.f32 %v3419, %v1142
    %v3422 = vsub.f32 %v3408, %v3420
    %v3423 = vsub.f32 %v3409, %v3421
    %v3424 = vmul.f32 %v3422, %v3422
    %v3425 = vmul.f32 %v3423, %v3423
    %v3426 = vsel %vm115, %v3424, 0.0
    %3427 = vadd.xlane.f32.xlu0 %v3426
    %v3428 = vpop.xlane.xlu0 %3427
    %v3429 = vsel %vm115, %v3425, 0.0
    %3430 = vadd.xlane.f32.xlu0 %v3429
    %v3431 = vpop.xlane.xlu0 %3430
    %v3432 = vmul.f32 %v3428, %v1142
    %v3433 = vmul.f32 %v3431, %v1142
    %v3434 = vadd.f32 %v3432, 1e-05
    %v3435 = vadd.f32 %v3433, 1e-05
    %v3436 = vrsqrt.pop %v3434
    %v3437 = vmul.f32 %v3436, %v3434
    %v3438 = vmul.f32 %v3437, %v3436
    %v3439 = vmul.f32 0.5, %v3438
    %v3440 = vsub.f32 1.5, %v3439
    %v3441 = vmul.f32 %v3436, %v3440
    %vm3442 = vweird.f32 %v3434
    %vm3443 = vweird.f32 %v3436
    %vm3444 = vmor %vm3442, %vm3443
    %v3445 = vsel %vm3444, %v3436, %v3441
    %v3446 = vrsqrt.pop %v3435
    %v3447 = vmul.f32 %v3446, %v3435
    %v3448 = vmul.f32 %v3447, %v3446
    %v3449 = vmul.f32 0.5, %v3448
    %v3450 = vsub.f32 1.5, %v3449
    %v3451 = vmul.f32 %v3446, %v3450
    %vm3452 = vweird.f32 %v3435
    %vm3453 = vweird.f32 %v3446
    %vm3454 = vmor %vm3452, %vm3453
    %v3455 = vsel %vm3454, %v3446, %v3451
    %v3456 = vmul.f32 %v3422, %v3445
    %v3457 = vmul.f32 %v3423, %v3455
    %v3459 = vperm.slane %v3411, 0
    %v3461 = vmul.f32 %v3456, %v3459
    %v3462 = vmul.f32 %v3457, %v3459
    %v3464 = vperm.slane %v3413, 0
    %v3466 = vadd.f32 %v3461, %v3464
    %v3467 = vadd.f32 %v3462, %v3464
    %s3468 = scalar_lea.vmem %s13, 512
    %v3469 = vld [vmem:[%s3468] sm:$0xff]
    %v3470 = vld [vmem:[%s3468 + $0x8] sm:$0xff]
    %v3471 = vld [vmem:[%s3468 + $0x10] sm:$0xff]
    %v3472 = vld [vmem:[%s3468 + $0x18] sm:$0xff]
    %v3473 = vld [vmem:[%s3468 + $0x20] sm:$0xff]
    %v3474 = vld [vmem:[%s3468 + $0x28] sm:$0xff]
    %v3475 = vld [vmem:[%s3468 + $0x30] sm:$0xff]
    %v3476 = vld [vmem:[%s3468 + $0x38] sm:$0xff]
    %v3477 = vld [vmem:[%s3468 + $0x40] sm:$0xff]
    %v3478 = vld [vmem:[%s3468 + $0x48] sm:$0xff]
    %v3479 = vld [vmem:[%s3468 + $0x50] sm:$0xff]
    %v3480 = vld [vmem:[%s3468 + $0x58] sm:$0xff]
    %v3481 = vld [vmem:[%s3468 + $0x60] sm:$0xff]
    %v3482 = vld [vmem:[%s3468 + $0x68] sm:$0xff]
    %v3483 = vld [vmem:[%s3468 + $0x70] sm:$0xff]
    %v3484 = vld [vmem:[%s3468 + $0x78] sm:$0xff]
    %v3485 = vld [vmem:[%s3468 + $0x80] sm:$0xff]
    %v3486 = vld [vmem:[%s3468 + $0x88] sm:$0xff]
    %v3487 = vld [vmem:[%s3468 + $0x90] sm:$0xff]
    %v3488 = vld [vmem:[%s3468 + $0x98] sm:$0xff]
    %v3489 = vld [vmem:[%s3468 + $0xa0] sm:$0xff]
    %v3490 = vld [vmem:[%s3468 + $0xa8] sm:$0xff]
    %v3491 = vld [vmem:[%s3468 + $0xb0] sm:$0xff]
    %v3492 = vld [vmem:[%s3468 + $0xb8] sm:$0xff]
    %v3493 = vld [vmem:[%s3468 + $0xc0] sm:$0xff]
    %v3494 = vld [vmem:[%s3468 + $0xc8] sm:$0xff]
    %v3495 = vld [vmem:[%s3468 + $0xd0] sm:$0xff]
    %v3496 = vld [vmem:[%s3468 + $0xd8] sm:$0xff]
    %v3497 = vld [vmem:[%s3468 + $0xe0] sm:$0xff]
    %v3498 = vld [vmem:[%s3468 + $0xe8] sm:$0xff]
    %v3499 = vld [vmem:[%s3468 + $0xf0] sm:$0xff]
    %v3500 = vld [vmem:[%s3468 + $0xf8] sm:$0xff]
    %v3501 = vld [vmem:[%s3468 + $0x100] sm:$0xff]
    %v3502 = vld [vmem:[%s3468 + $0x108] sm:$0xff]
    %v3503 = vld [vmem:[%s3468 + $0x110] sm:$0xff]
    %v3504 = vld [vmem:[%s3468 + $0x118] sm:$0xff]
    %v3505 = vld [vmem:[%s3468 + $0x120] sm:$0xff]
    %v3506 = vld [vmem:[%s3468 + $0x128] sm:$0xff]
    %v3507 = vld [vmem:[%s3468 + $0x130] sm:$0xff]
    %v3508 = vld [vmem:[%s3468 + $0x138] sm:$0xff]
    %v3509 = vld [vmem:[%s3468 + $0x140] sm:$0xff]
    %v3510 = vld [vmem:[%s3468 + $0x148] sm:$0xff]
    %v3511 = vld [vmem:[%s3468 + $0x150] sm:$0xff]
    %v3512 = vld [vmem:[%s3468 + $0x158] sm:$0xff]
    %v3513 = vld [vmem:[%s3468 + $0x160] sm:$0xff]
    %v3514 = vld [vmem:[%s3468 + $0x168] sm:$0xff]
    %v3515 = vld [vmem:[%s3468 + $0x170] sm:$0xff]
    %v3516 = vld [vmem:[%s3468 + $0x178] sm:$0xff]
    %v3517 = vld [vmem:[%s3468 + $0x180] sm:$0xff]
    %v3518 = vld [vmem:[%s3468 + $0x188] sm:$0xff]
    %v3519 = vld [vmem:[%s3468 + $0x190] sm:$0xff]
    %v3520 = vld [vmem:[%s3468 + $0x198] sm:$0xff]
    %v3521 = vld [vmem:[%s3468 + $0x1a0] sm:$0xff]
    %v3522 = vld [vmem:[%s3468 + $0x1a8] sm:$0xff]
    %v3523 = vld [vmem:[%s3468 + $0x1b0] sm:$0xff]
    %v3524 = vld [vmem:[%s3468 + $0x1b8] sm:$0xff]
    %v3525 = vld [vmem:[%s3468 + $0x1c0] sm:$0xff]
    %v3526 = vld [vmem:[%s3468 + $0x1c8] sm:$0xff]
    %v3527 = vld [vmem:[%s3468 + $0x1d0] sm:$0xff]
    %v3528 = vld [vmem:[%s3468 + $0x1d8] sm:$0xff]
    %v3529 = vld [vmem:[%s3468 + $0x1e0] sm:$0xff]
    %v3530 = vld [vmem:[%s3468 + $0x1e8] sm:$0xff]
    %v3531 = vld [vmem:[%s3468 + $0x1f0] sm:$0xff]
    %v3532 = vld [vmem:[%s3468 + $0x1f8] sm:$0xff]
    %s3533 = scalar_lea.vmem %s14, 16
    %v3534 = vld [vmem:[%s3533] sm:$0xff]
    %v3535 = vld [vmem:[%s3533 + $0x8] sm:$0xff]
    %v3538 = vperm.slane %v3534, 0
    %v3539 = vperm.slane %v3534, 1
    %v3540 = vperm.slane %v3534, 2
    %v3541 = vperm.slane %v3534, 3
    %v3542 = vperm.slane %v3534, 4
    %v3543 = vperm.slane %v3534, 5
    %v3544 = vperm.slane %v3534, 6
    %v3545 = vperm.slane %v3534, 7
    %v3546 = vperm.slane %v3535, 0
    %v3547 = vperm.slane %v3535, 1
    %v3548 = vperm.slane %v3535, 2
    %v3549 = vperm.slane %v3535, 3
    %v3550 = vperm.slane %v3535, 4
    %v3551 = vperm.slane %v3535, 5
    %v3552 = vperm.slane %v3535, 6
    %v3553 = vperm.slane %v3535, 7
    %v3571 = vsel %vm115, %v3466, 0
    %v3574 = vsel %vm115, %v3467, 0
    %3576 = vmatpush.msra.mxu0 0.0
    %3577 = vmatpush.msra.mxu0 0.0
    %3578 = vmatpush.msra.mxu0 0.0
    %3579 = vmatpush.msra.mxu0 0.0
    %3580 = vmatpush.msra.mxu0 0.0
    %3581 = vmatpush.msra.mxu0 0.0
    %3582 = vmatpush.msra.mxu0 0.0
    %3583 = vmatpush.msra.mxu0 0.0
    %3584 = vmatpush.msra.mxu0 0.0
    %3585 = vmatpush.msra.mxu0 0.0
    %3586 = vmatpush.msra.mxu0 0.0
    %3587 = vmatpush.msra.mxu0 0.0
    %3588 = vmatpush.msra.mxu0 %v3517
    %3589 = vmatpush.msra.mxu0 %v3501
    %3590 = vmatpush.msra.mxu0 %v3485
    %3591 = vmatpush.msra.mxu0 %v3469
    %3592 = vmatmul.f32.gmra.mxu0 %v3571
    %v3593 = vpop.f32.mrf.mxu0
    %v3594 = vadd.f32 %v3538, %v3593
    %3595 = vmatmul.f32.gmra.mxu0 %v3574
    %v3596 = vpop.f32.mrf.mxu0
    %v3597 = vadd.f32 %v3538, %v3596
    %3598 = vdwg.mxu0
    %3599 = vmatpush.msra.mxu0 0.0
    %3600 = vmatpush.msra.mxu0 0.0
    %3601 = vmatpush.msra.mxu0 0.0
    %3602 = vmatpush.msra.mxu0 0.0
    %3603 = vmatpush.msra.mxu0 0.0
    %3604 = vmatpush.msra.mxu0 0.0
    %3605 = vmatpush.msra.mxu0 0.0
    %3606 = vmatpush.msra.mxu0 0.0
    %3607 = vmatpush.msra.mxu0 0.0
    %3608 = vmatpush.msra.mxu0 0.0
    %3609 = vmatpush.msra.mxu0 0.0
    %3610 = vmatpush.msra.mxu0 0.0
    %3611 = vmatpush.msra.mxu0 %v3518
    %3612 = vmatpush.msra.mxu0 %v3502
    %3613 = vmatpush.msra.mxu0 %v3486
    %3614 = vmatpush.msra.mxu0 %v3470
    %3615 = vmatmul.f32.gmra.mxu0 %v3571
    %v3616 = vpop.f32.mrf.mxu0
    %v3617 = vadd.f32 %v3539, %v3616
    %3618 = vmatmul.f32.gmra.mxu0 %v3574
    %v3619 = vpop.f32.mrf.mxu0
    %v3620 = vadd.f32 %v3539, %v3619
    %3621 = vdwg.mxu0
    %3622 = vmatpush.msra.mxu0 0.0
    %3623 = vmatpush.msra.mxu0 0.0
    %3624 = vmatpush.msra.mxu0 0.0
    %3625 = vmatpush.msra.mxu0 0.0
    %3626 = vmatpush.msra.mxu0 0.0
    %3627 = vmatpush.msra.mxu0 0.0
    %3628 = vmatpush.msra.mxu0 0.0
    %3629 = vmatpush.msra.mxu0 0.0
    %3630 = vmatpush.msra.mxu0 0.0
    %3631 = vmatpush.msra.mxu0 0.0
    %3632 = vmatpush.msra.mxu0 0.0
    %3633 = vmatpush.msra.mxu0 0.0
    %3634 = vmatpush.msra.mxu0 %v3519
    %3635 = vmatpush.msra.mxu0 %v3503
    %3636 = vmatpush.msra.mxu0 %v3487
    %3637 = vmatpush.msra.mxu0 %v3471
    %3638 = vmatmul.f32.gmra.mxu0 %v3571
    %v3639 = vpop.f32.mrf.mxu0
    %v3640 = vadd.f32 %v3540, %v3639
    %3641 = vmatmul.f32.gmra.mxu0 %v3574
    %v3642 = vpop.f32.mrf.mxu0
    %v3643 = vadd.f32 %v3540, %v3642
    %3644 = vdwg.mxu0
    %3645 = vmatpush.msra.mxu0 0.0
    %3646 = vmatpush.msra.mxu0 0.0
    %3647 = vmatpush.msra.mxu0 0.0
    %3648 = vmatpush.msra.mxu0 0.0
    %3649 = vmatpush.msra.mxu0 0.0
    %3650 = vmatpush.msra.mxu0 0.0
    %3651 = vmatpush.msra.mxu0 0.0
    %3652 = vmatpush.msra.mxu0 0.0
    %3653 = vmatpush.msra.mxu0 0.0
    %3654 = vmatpush.msra.mxu0 0.0
    %3655 = vmatpush.msra.mxu0 0.0
    %3656 = vmatpush.msra.mxu0 0.0
    %3657 = vmatpush.msra.mxu0 %v3520
    %3658 = vmatpush.msra.mxu0 %v3504
    %3659 = vmatpush.msra.mxu0 %v3488
    %3660 = vmatpush.msra.mxu0 %v3472
    %3661 = vmatmul.f32.gmra.mxu0 %v3571
    %v3662 = vpop.f32.mrf.mxu0
    %v3663 = vadd.f32 %v3541, %v3662
    %3664 = vmatmul.f32.gmra.mxu0 %v3574
    %v3665 = vpop.f32.mrf.mxu0
    %v3666 = vadd.f32 %v3541, %v3665
    %3667 = vdwg.mxu0
    %3668 = vmatpush.msra.mxu0 0.0
    %3669 = vmatpush.msra.mxu0 0.0
    %3670 = vmatpush.msra.mxu0 0.0
    %3671 = vmatpush.msra.mxu0 0.0
    %3672 = vmatpush.msra.mxu0 0.0
    %3673 = vmatpush.msra.mxu0 0.0
    %3674 = vmatpush.msra.mxu0 0.0
    %3675 = vmatpush.msra.mxu0 0.0
    %3676 = vmatpush.msra.mxu0 0.0
    %3677 = vmatpush.msra.mxu0 0.0
    %3678 = vmatpush.msra.mxu0 0.0
    %3679 = vmatpush.msra.mxu0 0.0
    %3680 = vmatpush.msra.mxu0 %v3521
    %3681 = vmatpush.msra.mxu0 %v3505
    %3682 = vmatpush.msra.mxu0 %v3489
    %3683 = vmatpush.msra.mxu0 %v3473
    %3684 = vmatmul.f32.gmra.mxu0 %v3571
    %v3685 = vpop.f32.mrf.mxu0
    %v3686 = vadd.f32 %v3542, %v3685
    %3687 = vmatmul.f32.gmra.mxu0 %v3574
    %v3688 = vpop.f32.mrf.mxu0
    %v3689 = vadd.f32 %v3542, %v3688
    %3690 = vdwg.mxu0
    %3691 = vmatpush.msra.mxu0 0.0
    %3692 = vmatpush.msra.mxu0 0.0
    %3693 = vmatpush.msra.mxu0 0.0
    %3694 = vmatpush.msra.mxu0 0.0
    %3695 = vmatpush.msra.mxu0 0.0
    %3696 = vmatpush.msra.mxu0 0.0
    %3697 = vmatpush.msra.mxu0 0.0
    %3698 = vmatpush.msra.mxu0 0.0
    %3699 = vmatpush.msra.mxu0 0.0
    %3700 = vmatpush.msra.mxu0 0.0
    %3701 = vmatpush.msra.mxu0 0.0
    %3702 = vmatpush.msra.mxu0 0.0
    %3703 = vmatpush.msra.mxu0 %v3522
    %3704 = vmatpush.msra.mxu0 %v3506
    %3705 = vmatpush.msra.mxu0 %v3490
    %3706 = vmatpush.msra.mxu0 %v3474
    %3707 = vmatmul.f32.gmra.mxu0 %v3571
    %v3708 = vpop.f32.mrf.mxu0
    %v3709 = vadd.f32 %v3543, %v3708
    %3710 = vmatmul.f32.gmra.mxu0 %v3574
    %v3711 = vpop.f32.mrf.mxu0
    %v3712 = vadd.f32 %v3543, %v3711
    %3713 = vdwg.mxu0
    %3714 = vmatpush.msra.mxu0 0.0
    %3715 = vmatpush.msra.mxu0 0.0
    %3716 = vmatpush.msra.mxu0 0.0
    %3717 = vmatpush.msra.mxu0 0.0
    %3718 = vmatpush.msra.mxu0 0.0
    %3719 = vmatpush.msra.mxu0 0.0
    %3720 = vmatpush.msra.mxu0 0.0
    %3721 = vmatpush.msra.mxu0 0.0
    %3722 = vmatpush.msra.mxu0 0.0
    %3723 = vmatpush.msra.mxu0 0.0
    %3724 = vmatpush.msra.mxu0 0.0
    %3725 = vmatpush.msra.mxu0 0.0
    %3726 = vmatpush.msra.mxu0 %v3523
    %3727 = vmatpush.msra.mxu0 %v3507
    %3728 = vmatpush.msra.mxu0 %v3491
    %3729 = vmatpush.msra.mxu0 %v3475
    %3730 = vmatmul.f32.gmra.mxu0 %v3571
    %v3731 = vpop.f32.mrf.mxu0
    %v3732 = vadd.f32 %v3544, %v3731
    %3733 = vmatmul.f32.gmra.mxu0 %v3574
    %v3734 = vpop.f32.mrf.mxu0
    %v3735 = vadd.f32 %v3544, %v3734
    %3736 = vdwg.mxu0
    %3737 = vmatpush.msra.mxu0 0.0
    %3738 = vmatpush.msra.mxu0 0.0
    %3739 = vmatpush.msra.mxu0 0.0
    %3740 = vmatpush.msra.mxu0 0.0
    %3741 = vmatpush.msra.mxu0 0.0
    %3742 = vmatpush.msra.mxu0 0.0
    %3743 = vmatpush.msra.mxu0 0.0
    %3744 = vmatpush.msra.mxu0 0.0
    %3745 = vmatpush.msra.mxu0 0.0
    %3746 = vmatpush.msra.mxu0 0.0
    %3747 = vmatpush.msra.mxu0 0.0
    %3748 = vmatpush.msra.mxu0 0.0
    %3749 = vmatpush.msra.mxu0 %v3524
    %3750 = vmatpush.msra.mxu0 %v3508
    %3751 = vmatpush.msra.mxu0 %v3492
    %3752 = vmatpush.msra.mxu0 %v3476
    %3753 = vmatmul.f32.gmra.mxu0 %v3571
    %v3754 = vpop.f32.mrf.mxu0
    %v3755 = vadd.f32 %v3545, %v3754
    %3756 = vmatmul.f32.gmra.mxu0 %v3574
    %v3757 = vpop.f32.mrf.mxu0
    %v3758 = vadd.f32 %v3545, %v3757
    %3759 = vdwg.mxu0
    %3760 = vmatpush.msra.mxu0 0.0
    %3761 = vmatpush.msra.mxu0 0.0
    %3762 = vmatpush.msra.mxu0 0.0
    %3763 = vmatpush.msra.mxu0 0.0
    %3764 = vmatpush.msra.mxu0 0.0
    %3765 = vmatpush.msra.mxu0 0.0
    %3766 = vmatpush.msra.mxu0 0.0
    %3767 = vmatpush.msra.mxu0 0.0
    %3768 = vmatpush.msra.mxu0 0.0
    %3769 = vmatpush.msra.mxu0 0.0
    %3770 = vmatpush.msra.mxu0 0.0
    %3771 = vmatpush.msra.mxu0 0.0
    %3772 = vmatpush.msra.mxu0 %v3525
    %3773 = vmatpush.msra.mxu0 %v3509
    %3774 = vmatpush.msra.mxu0 %v3493
    %3775 = vmatpush.msra.mxu0 %v3477
    %3776 = vmatmul.f32.gmra.mxu0 %v3571
    %v3777 = vpop.f32.mrf.mxu0
    %v3778 = vadd.f32 %v3546, %v3777
    %3779 = vmatmul.f32.gmra.mxu0 %v3574
    %v3780 = vpop.f32.mrf.mxu0
    %v3781 = vadd.f32 %v3546, %v3780
    %3782 = vdwg.mxu0
    %3783 = vmatpush.msra.mxu0 0.0
    %3784 = vmatpush.msra.mxu0 0.0
    %3785 = vmatpush.msra.mxu0 0.0
    %3786 = vmatpush.msra.mxu0 0.0
    %3787 = vmatpush.msra.mxu0 0.0
    %3788 = vmatpush.msra.mxu0 0.0
    %3789 = vmatpush.msra.mxu0 0.0
    %3790 = vmatpush.msra.mxu0 0.0
    %3791 = vmatpush.msra.mxu0 0.0
    %3792 = vmatpush.msra.mxu0 0.0
    %3793 = vmatpush.msra.mxu0 0.0
    %3794 = vmatpush.msra.mxu0 0.0
    %3795 = vmatpush.msra.mxu0 %v3526
    %3796 = vmatpush.msra.mxu0 %v3510
    %3797 = vmatpush.msra.mxu0 %v3494
    %3798 = vmatpush.msra.mxu0 %v3478
    %3799 = vmatmul.f32.gmra.mxu0 %v3571
    %v3800 = vpop.f32.mrf.mxu0
    %v3801 = vadd.f32 %v3547, %v3800
    %3802 = vmatmul.f32.gmra.mxu0 %v3574
    %v3803 = vpop.f32.mrf.mxu0
    %v3804 = vadd.f32 %v3547, %v3803
    %3805 = vdwg.mxu0
    %3806 = vmatpush.msra.mxu0 0.0
    %3807 = vmatpush.msra.mxu0 0.0
    %3808 = vmatpush.msra.mxu0 0.0
    %3809 = vmatpush.msra.mxu0 0.0
    %3810 = vmatpush.msra.mxu0 0.0
    %3811 = vmatpush.msra.mxu0 0.0
    %3812 = vmatpush.msra.mxu0 0.0
    %3813 = vmatpush.msra.mxu0 0.0
    %3814 = vmatpush.msra.mxu0 0.0
    %3815 = vmatpush.msra.mxu0 0.0
    %3816 = vmatpush.msra.mxu0 0.0
    %3817 = vmatpush.msra.mxu0 0.0
    %3818 = vmatpush.msra.mxu0 %v3527
    %3819 = vmatpush.msra.mxu0 %v3511
    %3820 = vmatpush.msra.mxu0 %v3495
    %3821 = vmatpush.msra.mxu0 %v3479
    %3822 = vmatmul.f32.gmra.mxu0 %v3571
    %v3823 = vpop.f32.mrf.mxu0
    %v3824 = vadd.f32 %v3548, %v3823
    %3825 = vmatmul.f32.gmra.mxu0 %v3574
    %v3826 = vpop.f32.mrf.mxu0
    %v3827 = vadd.f32 %v3548, %v3826
    %3828 = vdwg.mxu0
    %3829 = vmatpush.msra.mxu0 0.0
    %3830 = vmatpush.msra.mxu0 0.0
    %3831 = vmatpush.msra.mxu0 0.0
    %3832 = vmatpush.msra.mxu0 0.0
    %3833 = vmatpush.msra.mxu0 0.0
    %3834 = vmatpush.msra.mxu0 0.0
    %3835 = vmatpush.msra.mxu0 0.0
    %3836 = vmatpush.msra.mxu0 0.0
    %3837 = vmatpush.msra.mxu0 0.0
    %3838 = vmatpush.msra.mxu0 0.0
    %3839 = vmatpush.msra.mxu0 0.0
    %3840 = vmatpush.msra.mxu0 0.0
    %3841 = vmatpush.msra.mxu0 %v3528
    %3842 = vmatpush.msra.mxu0 %v3512
    %3843 = vmatpush.msra.mxu0 %v3496
    %3844 = vmatpush.msra.mxu0 %v3480
    %3845 = vmatmul.f32.gmra.mxu0 %v3571
    %v3846 = vpop.f32.mrf.mxu0
    %v3847 = vadd.f32 %v3549, %v3846
    %3848 = vmatmul.f32.gmra.mxu0 %v3574
    %v3849 = vpop.f32.mrf.mxu0
    %v3850 = vadd.f32 %v3549, %v3849
    %3851 = vdwg.mxu0
    %3852 = vmatpush.msra.mxu0 0.0
    %3853 = vmatpush.msra.mxu0 0.0
    %3854 = vmatpush.msra.mxu0 0.0
    %3855 = vmatpush.msra.mxu0 0.0
    %3856 = vmatpush.msra.mxu0 0.0
    %3857 = vmatpush.msra.mxu0 0.0
    %3858 = vmatpush.msra.mxu0 0.0
    %3859 = vmatpush.msra.mxu0 0.0
    %3860 = vmatpush.msra.mxu0 0.0
    %3861 = vmatpush.msra.mxu0 0.0
    %3862 = vmatpush.msra.mxu0 0.0
    %3863 = vmatpush.msra.mxu0 0.0
    %3864 = vmatpush.msra.mxu0 %v3529
    %3865 = vmatpush.msra.mxu0 %v3513
    %3866 = vmatpush.msra.mxu0 %v3497
    %3867 = vmatpush.msra.mxu0 %v3481
    %3868 = vmatmul.f32.gmra.mxu0 %v3571
    %v3869 = vpop.f32.mrf.mxu0
    %v3870 = vadd.f32 %v3550, %v3869
    %3871 = vmatmul.f32.gmra.mxu0 %v3574
    %v3872 = vpop.f32.mrf.mxu0
    %v3873 = vadd.f32 %v3550, %v3872
    %3874 = vdwg.mxu0
    %3875 = vmatpush.msra.mxu0 0.0
    %3876 = vmatpush.msra.mxu0 0.0
    %3877 = vmatpush.msra.mxu0 0.0
    %3878 = vmatpush.msra.mxu0 0.0
    %3879 = vmatpush.msra.mxu0 0.0
    %3880 = vmatpush.msra.mxu0 0.0
    %3881 = vmatpush.msra.mxu0 0.0
    %3882 = vmatpush.msra.mxu0 0.0
    %3883 = vmatpush.msra.mxu0 0.0
    %3884 = vmatpush.msra.mxu0 0.0
    %3885 = vmatpush.msra.mxu0 0.0
    %3886 = vmatpush.msra.mxu0 0.0
    %3887 = vmatpush.msra.mxu0 %v3530
    %3888 = vmatpush.msra.mxu0 %v3514
    %3889 = vmatpush.msra.mxu0 %v3498
    %3890 = vmatpush.msra.mxu0 %v3482
    %3891 = vmatmul.f32.gmra.mxu0 %v3571
    %v3892 = vpop.f32.mrf.mxu0
    %v3893 = vadd.f32 %v3551, %v3892
    %3894 = vmatmul.f32.gmra.mxu0 %v3574
    %v3895 = vpop.f32.mrf.mxu0
    %v3896 = vadd.f32 %v3551, %v3895
    %3897 = vdwg.mxu0
    %3898 = vmatpush.msra.mxu0 0.0
    %3899 = vmatpush.msra.mxu0 0.0
    %3900 = vmatpush.msra.mxu0 0.0
    %3901 = vmatpush.msra.mxu0 0.0
    %3902 = vmatpush.msra.mxu0 0.0
    %3903 = vmatpush.msra.mxu0 0.0
    %3904 = vmatpush.msra.mxu0 0.0
    %3905 = vmatpush.msra.mxu0 0.0
    %3906 = vmatpush.msra.mxu0 0.0
    %3907 = vmatpush.msra.mxu0 0.0
    %3908 = vmatpush.msra.mxu0 0.0
    %3909 = vmatpush.msra.mxu0 0.0
    %3910 = vmatpush.msra.mxu0 %v3531
    %3911 = vmatpush.msra.mxu0 %v3515
    %3912 = vmatpush.msra.mxu0 %v3499
    %3913 = vmatpush.msra.mxu0 %v3483
    %3914 = vmatmul.f32.gmra.mxu0 %v3571
    %v3915 = vpop.f32.mrf.mxu0
    %v3916 = vadd.f32 %v3552, %v3915
    %3917 = vmatmul.f32.gmra.mxu0 %v3574
    %v3918 = vpop.f32.mrf.mxu0
    %v3919 = vadd.f32 %v3552, %v3918
    %3920 = vdwg.mxu0
    %3921 = vmatpush.msra.mxu0 0.0
    %3922 = vmatpush.msra.mxu0 0.0
    %3923 = vmatpush.msra.mxu0 0.0
    %3924 = vmatpush.msra.mxu0 0.0
    %3925 = vmatpush.msra.mxu0 0.0
    %3926 = vmatpush.msra.mxu0 0.0
    %3927 = vmatpush.msra.mxu0 0.0
    %3928 = vmatpush.msra.mxu0 0.0
    %3929 = vmatpush.msra.mxu0 0.0
    %3930 = vmatpush.msra.mxu0 0.0
    %3931 = vmatpush.msra.mxu0 0.0
    %3932 = vmatpush.msra.mxu0 0.0
    %3933 = vmatpush.msra.mxu0 %v3532
    %3934 = vmatpush.msra.mxu0 %v3516
    %3935 = vmatpush.msra.mxu0 %v3500
    %3936 = vmatpush.msra.mxu0 %v3484
    %3937 = vmatmul.f32.gmra.mxu0 %v3571
    %v3938 = vpop.f32.mrf.mxu0
    %v3939 = vadd.f32 %v3553, %v3938
    %3940 = vmatmul.f32.gmra.mxu0 %v3574
    %v3941 = vpop.f32.mrf.mxu0
    %v3942 = vadd.f32 %v3553, %v3941
    %3943 = vdwg.mxu0
    %v3944 = vmax.f32 %v3594, 0.0
    %v3945 = vmax.f32 %v3617, 0.0
    %v3946 = vmax.f32 %v3640, 0.0
    %v3947 = vmax.f32 %v3663, 0.0
    %v3948 = vmax.f32 %v3686, 0.0
    %v3949 = vmax.f32 %v3709, 0.0
    %v3950 = vmax.f32 %v3732, 0.0
    %v3951 = vmax.f32 %v3755, 0.0
    %v3952 = vmax.f32 %v3778, 0.0
    %v3953 = vmax.f32 %v3801, 0.0
    %v3954 = vmax.f32 %v3824, 0.0
    %v3955 = vmax.f32 %v3847, 0.0
    %v3956 = vmax.f32 %v3870, 0.0
    %v3957 = vmax.f32 %v3893, 0.0
    %v3958 = vmax.f32 %v3916, 0.0
    %v3959 = vmax.f32 %v3939, 0.0
    %v3960 = vmax.f32 %v3597, 0.0
    %v3961 = vmax.f32 %v3620, 0.0
    %v3962 = vmax.f32 %v3643, 0.0
    %v3963 = vmax.f32 %v3666, 0.0
    %v3964 = vmax.f32 %v3689, 0.0
    %v3965 = vmax.f32 %v3712, 0.0
    %v3966 = vmax.f32 %v3735, 0.0
    %v3967 = vmax.f32 %v3758, 0.0
    %v3968 = vmax.f32 %v3781, 0.0
    %v3969 = vmax.f32 %v3804, 0.0
    %v3970 = vmax.f32 %v3827, 0.0
    %v3971 = vmax.f32 %v3850, 0.0
    %v3972 = vmax.f32 %v3873, 0.0
    %v3973 = vmax.f32 %v3896, 0.0
    %v3974 = vmax.f32 %v3919, 0.0
    %v3975 = vmax.f32 %v3942, 0.0
    %s3976 = scalar_lea.vmem %s15, 2048
    %v3977 = vld [vmem:[%s3976] sm:$0xff]
    %v3978 = vld [vmem:[%s3976 + $0x8] sm:$0xff]
    %v3979 = vld [vmem:[%s3976 + $0x10] sm:$0xff]
    %v3980 = vld [vmem:[%s3976 + $0x18] sm:$0xff]
    %v3981 = vld [vmem:[%s3976 + $0x20] sm:$0xff]
    %v3982 = vld [vmem:[%s3976 + $0x28] sm:$0xff]
    %v3983 = vld [vmem:[%s3976 + $0x30] sm:$0xff]
    %v3984 = vld [vmem:[%s3976 + $0x38] sm:$0xff]
    %v3985 = vld [vmem:[%s3976 + $0x40] sm:$0xff]
    %v3986 = vld [vmem:[%s3976 + $0x48] sm:$0xff]
    %v3987 = vld [vmem:[%s3976 + $0x50] sm:$0xff]
    %v3988 = vld [vmem:[%s3976 + $0x58] sm:$0xff]
    %v3989 = vld [vmem:[%s3976 + $0x60] sm:$0xff]
    %v3990 = vld [vmem:[%s3976 + $0x68] sm:$0xff]
    %v3991 = vld [vmem:[%s3976 + $0x70] sm:$0xff]
    %v3992 = vld [vmem:[%s3976 + $0x78] sm:$0xff]
    %v3993 = vld [vmem:[%s3976 + $0x80] sm:$0xff]
    %v3994 = vld [vmem:[%s3976 + $0x88] sm:$0xff]
    %v3995 = vld [vmem:[%s3976 + $0x90] sm:$0xff]
    %v3996 = vld [vmem:[%s3976 + $0x98] sm:$0xff]
    %v3997 = vld [vmem:[%s3976 + $0xa0] sm:$0xff]
    %v3998 = vld [vmem:[%s3976 + $0xa8] sm:$0xff]
    %v3999 = vld [vmem:[%s3976 + $0xb0] sm:$0xff]
    %v4000 = vld [vmem:[%s3976 + $0xb8] sm:$0xff]
    %v4001 = vld [vmem:[%s3976 + $0xc0] sm:$0xff]
    %v4002 = vld [vmem:[%s3976 + $0xc8] sm:$0xff]
    %v4003 = vld [vmem:[%s3976 + $0xd0] sm:$0xff]
    %v4004 = vld [vmem:[%s3976 + $0xd8] sm:$0xff]
    %v4005 = vld [vmem:[%s3976 + $0xe0] sm:$0xff]
    %v4006 = vld [vmem:[%s3976 + $0xe8] sm:$0xff]
    %v4007 = vld [vmem:[%s3976 + $0xf0] sm:$0xff]
    %v4008 = vld [vmem:[%s3976 + $0xf8] sm:$0xff]
    %v4009 = vld [vmem:[%s3976 + $0x100] sm:$0xff]
    %v4010 = vld [vmem:[%s3976 + $0x108] sm:$0xff]
    %v4011 = vld [vmem:[%s3976 + $0x110] sm:$0xff]
    %v4012 = vld [vmem:[%s3976 + $0x118] sm:$0xff]
    %v4013 = vld [vmem:[%s3976 + $0x120] sm:$0xff]
    %v4014 = vld [vmem:[%s3976 + $0x128] sm:$0xff]
    %v4015 = vld [vmem:[%s3976 + $0x130] sm:$0xff]
    %v4016 = vld [vmem:[%s3976 + $0x138] sm:$0xff]
    %v4017 = vld [vmem:[%s3976 + $0x140] sm:$0xff]
    %v4018 = vld [vmem:[%s3976 + $0x148] sm:$0xff]
    %v4019 = vld [vmem:[%s3976 + $0x150] sm:$0xff]
    %v4020 = vld [vmem:[%s3976 + $0x158] sm:$0xff]
    %v4021 = vld [vmem:[%s3976 + $0x160] sm:$0xff]
    %v4022 = vld [vmem:[%s3976 + $0x168] sm:$0xff]
    %v4023 = vld [vmem:[%s3976 + $0x170] sm:$0xff]
    %v4024 = vld [vmem:[%s3976 + $0x178] sm:$0xff]
    %v4025 = vld [vmem:[%s3976 + $0x180] sm:$0xff]
    %v4026 = vld [vmem:[%s3976 + $0x188] sm:$0xff]
    %v4027 = vld [vmem:[%s3976 + $0x190] sm:$0xff]
    %v4028 = vld [vmem:[%s3976 + $0x198] sm:$0xff]
    %v4029 = vld [vmem:[%s3976 + $0x1a0] sm:$0xff]
    %v4030 = vld [vmem:[%s3976 + $0x1a8] sm:$0xff]
    %v4031 = vld [vmem:[%s3976 + $0x1b0] sm:$0xff]
    %v4032 = vld [vmem:[%s3976 + $0x1b8] sm:$0xff]
    %v4033 = vld [vmem:[%s3976 + $0x1c0] sm:$0xff]
    %v4034 = vld [vmem:[%s3976 + $0x1c8] sm:$0xff]
    %v4035 = vld [vmem:[%s3976 + $0x1d0] sm:$0xff]
    %v4036 = vld [vmem:[%s3976 + $0x1d8] sm:$0xff]
    %v4037 = vld [vmem:[%s3976 + $0x1e0] sm:$0xff]
    %v4038 = vld [vmem:[%s3976 + $0x1e8] sm:$0xff]
    %v4039 = vld [vmem:[%s3976 + $0x1f0] sm:$0xff]
    %v4040 = vld [vmem:[%s3976 + $0x1f8] sm:$0xff]
    %v4041 = vld [vmem:[%s3976 + $0x200] sm:$0xff]
    %v4042 = vld [vmem:[%s3976 + $0x208] sm:$0xff]
    %v4043 = vld [vmem:[%s3976 + $0x210] sm:$0xff]
    %v4044 = vld [vmem:[%s3976 + $0x218] sm:$0xff]
    %v4045 = vld [vmem:[%s3976 + $0x220] sm:$0xff]
    %v4046 = vld [vmem:[%s3976 + $0x228] sm:$0xff]
    %v4047 = vld [vmem:[%s3976 + $0x230] sm:$0xff]
    %v4048 = vld [vmem:[%s3976 + $0x238] sm:$0xff]
    %v4049 = vld [vmem:[%s3976 + $0x240] sm:$0xff]
    %v4050 = vld [vmem:[%s3976 + $0x248] sm:$0xff]
    %v4051 = vld [vmem:[%s3976 + $0x250] sm:$0xff]
    %v4052 = vld [vmem:[%s3976 + $0x258] sm:$0xff]
    %v4053 = vld [vmem:[%s3976 + $0x260] sm:$0xff]
    %v4054 = vld [vmem:[%s3976 + $0x268] sm:$0xff]
    %v4055 = vld [vmem:[%s3976 + $0x270] sm:$0xff]
    %v4056 = vld [vmem:[%s3976 + $0x278] sm:$0xff]
    %v4057 = vld [vmem:[%s3976 + $0x280] sm:$0xff]
    %v4058 = vld [vmem:[%s3976 + $0x288] sm:$0xff]
    %v4059 = vld [vmem:[%s3976 + $0x290] sm:$0xff]
    %v4060 = vld [vmem:[%s3976 + $0x298] sm:$0xff]
    %v4061 = vld [vmem:[%s3976 + $0x2a0] sm:$0xff]
    %v4062 = vld [vmem:[%s3976 + $0x2a8] sm:$0xff]
    %v4063 = vld [vmem:[%s3976 + $0x2b0] sm:$0xff]
    %v4064 = vld [vmem:[%s3976 + $0x2b8] sm:$0xff]
    %v4065 = vld [vmem:[%s3976 + $0x2c0] sm:$0xff]
    %v4066 = vld [vmem:[%s3976 + $0x2c8] sm:$0xff]
    %v4067 = vld [vmem:[%s3976 + $0x2d0] sm:$0xff]
    %v4068 = vld [vmem:[%s3976 + $0x2d8] sm:$0xff]
    %v4069 = vld [vmem:[%s3976 + $0x2e0] sm:$0xff]
    %v4070 = vld [vmem:[%s3976 + $0x2e8] sm:$0xff]
    %v4071 = vld [vmem:[%s3976 + $0x2f0] sm:$0xff]
    %v4072 = vld [vmem:[%s3976 + $0x2f8] sm:$0xff]
    %v4073 = vld [vmem:[%s3976 + $0x300] sm:$0xff]
    %v4074 = vld [vmem:[%s3976 + $0x308] sm:$0xff]
    %v4075 = vld [vmem:[%s3976 + $0x310] sm:$0xff]
    %v4076 = vld [vmem:[%s3976 + $0x318] sm:$0xff]
    %v4077 = vld [vmem:[%s3976 + $0x320] sm:$0xff]
    %v4078 = vld [vmem:[%s3976 + $0x328] sm:$0xff]
    %v4079 = vld [vmem:[%s3976 + $0x330] sm:$0xff]
    %v4080 = vld [vmem:[%s3976 + $0x338] sm:$0xff]
    %v4081 = vld [vmem:[%s3976 + $0x340] sm:$0xff]
    %v4082 = vld [vmem:[%s3976 + $0x348] sm:$0xff]
    %v4083 = vld [vmem:[%s3976 + $0x350] sm:$0xff]
    %v4084 = vld [vmem:[%s3976 + $0x358] sm:$0xff]
    %v4085 = vld [vmem:[%s3976 + $0x360] sm:$0xff]
    %v4086 = vld [vmem:[%s3976 + $0x368] sm:$0xff]
    %v4087 = vld [vmem:[%s3976 + $0x370] sm:$0xff]
    %v4088 = vld [vmem:[%s3976 + $0x378] sm:$0xff]
    %v4089 = vld [vmem:[%s3976 + $0x380] sm:$0xff]
    %v4090 = vld [vmem:[%s3976 + $0x388] sm:$0xff]
    %v4091 = vld [vmem:[%s3976 + $0x390] sm:$0xff]
    %v4092 = vld [vmem:[%s3976 + $0x398] sm:$0xff]
    %v4093 = vld [vmem:[%s3976 + $0x3a0] sm:$0xff]
    %v4094 = vld [vmem:[%s3976 + $0x3a8] sm:$0xff]
    %v4095 = vld [vmem:[%s3976 + $0x3b0] sm:$0xff]
    %v4096 = vld [vmem:[%s3976 + $0x3b8] sm:$0xff]
    %v4097 = vld [vmem:[%s3976 + $0x3c0] sm:$0xff]
    %v4098 = vld [vmem:[%s3976 + $0x3c8] sm:$0xff]
    %v4099 = vld [vmem:[%s3976 + $0x3d0] sm:$0xff]
    %v4100 = vld [vmem:[%s3976 + $0x3d8] sm:$0xff]
    %v4101 = vld [vmem:[%s3976 + $0x3e0] sm:$0xff]
    %v4102 = vld [vmem:[%s3976 + $0x3e8] sm:$0xff]
    %v4103 = vld [vmem:[%s3976 + $0x3f0] sm:$0xff]
    %v4104 = vld [vmem:[%s3976 + $0x3f8] sm:$0xff]
    %v4105 = vld [vmem:[%s3976 + $0x400] sm:$0xff]
    %v4106 = vld [vmem:[%s3976 + $0x408] sm:$0xff]
    %v4107 = vld [vmem:[%s3976 + $0x410] sm:$0xff]
    %v4108 = vld [vmem:[%s3976 + $0x418] sm:$0xff]
    %v4109 = vld [vmem:[%s3976 + $0x420] sm:$0xff]
    %v4110 = vld [vmem:[%s3976 + $0x428] sm:$0xff]
    %v4111 = vld [vmem:[%s3976 + $0x430] sm:$0xff]
    %v4112 = vld [vmem:[%s3976 + $0x438] sm:$0xff]
    %v4113 = vld [vmem:[%s3976 + $0x440] sm:$0xff]
    %v4114 = vld [vmem:[%s3976 + $0x448] sm:$0xff]
    %v4115 = vld [vmem:[%s3976 + $0x450] sm:$0xff]
    %v4116 = vld [vmem:[%s3976 + $0x458] sm:$0xff]
    %v4117 = vld [vmem:[%s3976 + $0x460] sm:$0xff]
    %v4118 = vld [vmem:[%s3976 + $0x468] sm:$0xff]
    %v4119 = vld [vmem:[%s3976 + $0x470] sm:$0xff]
    %v4120 = vld [vmem:[%s3976 + $0x478] sm:$0xff]
    %v4121 = vld [vmem:[%s3976 + $0x480] sm:$0xff]
    %v4122 = vld [vmem:[%s3976 + $0x488] sm:$0xff]
    %v4123 = vld [vmem:[%s3976 + $0x490] sm:$0xff]
    %v4124 = vld [vmem:[%s3976 + $0x498] sm:$0xff]
    %v4125 = vld [vmem:[%s3976 + $0x4a0] sm:$0xff]
    %v4126 = vld [vmem:[%s3976 + $0x4a8] sm:$0xff]
    %v4127 = vld [vmem:[%s3976 + $0x4b0] sm:$0xff]
    %v4128 = vld [vmem:[%s3976 + $0x4b8] sm:$0xff]
    %v4129 = vld [vmem:[%s3976 + $0x4c0] sm:$0xff]
    %v4130 = vld [vmem:[%s3976 + $0x4c8] sm:$0xff]
    %v4131 = vld [vmem:[%s3976 + $0x4d0] sm:$0xff]
    %v4132 = vld [vmem:[%s3976 + $0x4d8] sm:$0xff]
    %v4133 = vld [vmem:[%s3976 + $0x4e0] sm:$0xff]
    %v4134 = vld [vmem:[%s3976 + $0x4e8] sm:$0xff]
    %v4135 = vld [vmem:[%s3976 + $0x4f0] sm:$0xff]
    %v4136 = vld [vmem:[%s3976 + $0x4f8] sm:$0xff]
    %v4137 = vld [vmem:[%s3976 + $0x500] sm:$0xff]
    %v4138 = vld [vmem:[%s3976 + $0x508] sm:$0xff]
    %v4139 = vld [vmem:[%s3976 + $0x510] sm:$0xff]
    %v4140 = vld [vmem:[%s3976 + $0x518] sm:$0xff]
    %v4141 = vld [vmem:[%s3976 + $0x520] sm:$0xff]
    %v4142 = vld [vmem:[%s3976 + $0x528] sm:$0xff]
    %v4143 = vld [vmem:[%s3976 + $0x530] sm:$0xff]
    %v4144 = vld [vmem:[%s3976 + $0x538] sm:$0xff]
    %v4145 = vld [vmem:[%s3976 + $0x540] sm:$0xff]
    %v4146 = vld [vmem:[%s3976 + $0x548] sm:$0xff]
    %v4147 = vld [vmem:[%s3976 + $0x550] sm:$0xff]
    %v4148 = vld [vmem:[%s3976 + $0x558] sm:$0xff]
    %v4149 = vld [vmem:[%s3976 + $0x560] sm:$0xff]
    %v4150 = vld [vmem:[%s3976 + $0x568] sm:$0xff]
    %v4151 = vld [vmem:[%s3976 + $0x570] sm:$0xff]
    %v4152 = vld [vmem:[%s3976 + $0x578] sm:$0xff]
    %v4153 = vld [vmem:[%s3976 + $0x580] sm:$0xff]
    %v4154 = vld [vmem:[%s3976 + $0x588] sm:$0xff]
    %v4155 = vld [vmem:[%s3976 + $0x590] sm:$0xff]
    %v4156 = vld [vmem:[%s3976 + $0x598] sm:$0xff]
    %v4157 = vld [vmem:[%s3976 + $0x5a0] sm:$0xff]
    %v4158 = vld [vmem:[%s3976 + $0x5a8] sm:$0xff]
    %v4159 = vld [vmem:[%s3976 + $0x5b0] sm:$0xff]
    %v4160 = vld [vmem:[%s3976 + $0x5b8] sm:$0xff]
    %v4161 = vld [vmem:[%s3976 + $0x5c0] sm:$0xff]
    %v4162 = vld [vmem:[%s3976 + $0x5c8] sm:$0xff]
    %v4163 = vld [vmem:[%s3976 + $0x5d0] sm:$0xff]
    %v4164 = vld [vmem:[%s3976 + $0x5d8] sm:$0xff]
    %v4165 = vld [vmem:[%s3976 + $0x5e0] sm:$0xff]
    %v4166 = vld [vmem:[%s3976 + $0x5e8] sm:$0xff]
    %v4167 = vld [vmem:[%s3976 + $0x5f0] sm:$0xff]
    %v4168 = vld [vmem:[%s3976 + $0x5f8] sm:$0xff]
    %v4169 = vld [vmem:[%s3976 + $0x600] sm:$0xff]
    %v4170 = vld [vmem:[%s3976 + $0x608] sm:$0xff]
    %v4171 = vld [vmem:[%s3976 + $0x610] sm:$0xff]
    %v4172 = vld [vmem:[%s3976 + $0x618] sm:$0xff]
    %v4173 = vld [vmem:[%s3976 + $0x620] sm:$0xff]
    %v4174 = vld [vmem:[%s3976 + $0x628] sm:$0xff]
    %v4175 = vld [vmem:[%s3976 + $0x630] sm:$0xff]
    %v4176 = vld [vmem:[%s3976 + $0x638] sm:$0xff]
    %v4177 = vld [vmem:[%s3976 + $0x640] sm:$0xff]
    %v4178 = vld [vmem:[%s3976 + $0x648] sm:$0xff]
    %v4179 = vld [vmem:[%s3976 + $0x650] sm:$0xff]
    %v4180 = vld [vmem:[%s3976 + $0x658] sm:$0xff]
    %v4181 = vld [vmem:[%s3976 + $0x660] sm:$0xff]
    %v4182 = vld [vmem:[%s3976 + $0x668] sm:$0xff]
    %v4183 = vld [vmem:[%s3976 + $0x670] sm:$0xff]
    %v4184 = vld [vmem:[%s3976 + $0x678] sm:$0xff]
    %v4185 = vld [vmem:[%s3976 + $0x680] sm:$0xff]
    %v4186 = vld [vmem:[%s3976 + $0x688] sm:$0xff]
    %v4187 = vld [vmem:[%s3976 + $0x690] sm:$0xff]
    %v4188 = vld [vmem:[%s3976 + $0x698] sm:$0xff]
    %v4189 = vld [vmem:[%s3976 + $0x6a0] sm:$0xff]
    %v4190 = vld [vmem:[%s3976 + $0x6a8] sm:$0xff]
    %v4191 = vld [vmem:[%s3976 + $0x6b0] sm:$0xff]
    %v4192 = vld [vmem:[%s3976 + $0x6b8] sm:$0xff]
    %v4193 = vld [vmem:[%s3976 + $0x6c0] sm:$0xff]
    %v4194 = vld [vmem:[%s3976 + $0x6c8] sm:$0xff]
    %v4195 = vld [vmem:[%s3976 + $0x6d0] sm:$0xff]
    %v4196 = vld [vmem:[%s3976 + $0x6d8] sm:$0xff]
    %v4197 = vld [vmem:[%s3976 + $0x6e0] sm:$0xff]
    %v4198 = vld [vmem:[%s3976 + $0x6e8] sm:$0xff]
    %v4199 = vld [vmem:[%s3976 + $0x6f0] sm:$0xff]
    %v4200 = vld [vmem:[%s3976 + $0x6f8] sm:$0xff]
    %v4201 = vld [vmem:[%s3976 + $0x700] sm:$0xff]
    %v4202 = vld [vmem:[%s3976 + $0x708] sm:$0xff]
    %v4203 = vld [vmem:[%s3976 + $0x710] sm:$0xff]
    %v4204 = vld [vmem:[%s3976 + $0x718] sm:$0xff]
    %v4205 = vld [vmem:[%s3976 + $0x720] sm:$0xff]
    %v4206 = vld [vmem:[%s3976 + $0x728] sm:$0xff]
    %v4207 = vld [vmem:[%s3976 + $0x730] sm:$0xff]
    %v4208 = vld [vmem:[%s3976 + $0x738] sm:$0xff]
    %v4209 = vld [vmem:[%s3976 + $0x740] sm:$0xff]
    %v4210 = vld [vmem:[%s3976 + $0x748] sm:$0xff]
    %v4211 = vld [vmem:[%s3976 + $0x750] sm:$0xff]
    %v4212 = vld [vmem:[%s3976 + $0x758] sm:$0xff]
    %v4213 = vld [vmem:[%s3976 + $0x760] sm:$0xff]
    %v4214 = vld [vmem:[%s3976 + $0x768] sm:$0xff]
    %v4215 = vld [vmem:[%s3976 + $0x770] sm:$0xff]
    %v4216 = vld [vmem:[%s3976 + $0x778] sm:$0xff]
    %v4217 = vld [vmem:[%s3976 + $0x780] sm:$0xff]
    %v4218 = vld [vmem:[%s3976 + $0x788] sm:$0xff]
    %v4219 = vld [vmem:[%s3976 + $0x790] sm:$0xff]
    %v4220 = vld [vmem:[%s3976 + $0x798] sm:$0xff]
    %v4221 = vld [vmem:[%s3976 + $0x7a0] sm:$0xff]
    %v4222 = vld [vmem:[%s3976 + $0x7a8] sm:$0xff]
    %v4223 = vld [vmem:[%s3976 + $0x7b0] sm:$0xff]
    %v4224 = vld [vmem:[%s3976 + $0x7b8] sm:$0xff]
    %v4225 = vld [vmem:[%s3976 + $0x7c0] sm:$0xff]
    %v4226 = vld [vmem:[%s3976 + $0x7c8] sm:$0xff]
    %v4227 = vld [vmem:[%s3976 + $0x7d0] sm:$0xff]
    %v4228 = vld [vmem:[%s3976 + $0x7d8] sm:$0xff]
    %v4229 = vld [vmem:[%s3976 + $0x7e0] sm:$0xff]
    %v4230 = vld [vmem:[%s3976 + $0x7e8] sm:$0xff]
    %v4231 = vld [vmem:[%s3976 + $0x7f0] sm:$0xff]
    %v4232 = vld [vmem:[%s3976 + $0x7f8] sm:$0xff]
    %s4233 = scalar_lea.vmem %s16, 1
    %v4234 = vld [vmem:[%s4233] sm:$0x1]
    %v4236 = vperm.slane %v4234, 0
    %4238 = vmatpush.msra.mxu0 %v3992
    %4239 = vmatpush.msra.mxu0 %v3991
    %4240 = vmatpush.msra.mxu0 %v3990
    %4241 = vmatpush.msra.mxu0 %v3989
    %4242 = vmatpush.msra.mxu0 %v3988
    %4243 = vmatpush.msra.mxu0 %v3987
    %4244 = vmatpush.msra.mxu0 %v3986
    %4245 = vmatpush.msra.mxu0 %v3985
    %4246 = vmatpush.msra.mxu0 %v3984
    %4247 = vmatpush.msra.mxu0 %v3983
    %4248 = vmatpush.msra.mxu0 %v3982
    %4249 = vmatpush.msra.mxu0 %v3981
    %4250 = vmatpush.msra.mxu0 %v3980
    %4251 = vmatpush.msra.mxu0 %v3979
    %4252 = vmatpush.msra.mxu0 %v3978
    %4253 = vmatpush.msra.mxu0 %v3977
    %4254 = vmatmul.f32.gmra.mxu0 %v3944
    %v4255 = vpop.f32.mrf.mxu0
    %v4256 = vadd.f32 %v4236, %v4255
    %4257 = vmatmul.f32.gmra.mxu0 %v3960
    %v4258 = vpop.f32.mrf.mxu0
    %v4259 = vadd.f32 %v4236, %v4258
    %4260 = vdwg.mxu0
    %4261 = vmatpush.msra.mxu0 %v4008
    %4262 = vmatpush.msra.mxu0 %v4007
    %4263 = vmatpush.msra.mxu0 %v4006
    %4264 = vmatpush.msra.mxu0 %v4005
    %4265 = vmatpush.msra.mxu0 %v4004
    %4266 = vmatpush.msra.mxu0 %v4003
    %4267 = vmatpush.msra.mxu0 %v4002
    %4268 = vmatpush.msra.mxu0 %v4001
    %4269 = vmatpush.msra.mxu0 %v4000
    %4270 = vmatpush.msra.mxu0 %v3999
    %4271 = vmatpush.msra.mxu0 %v3998
    %4272 = vmatpush.msra.mxu0 %v3997
    %4273 = vmatpush.msra.mxu0 %v3996
    %4274 = vmatpush.msra.mxu0 %v3995
    %4275 = vmatpush.msra.mxu0 %v3994
    %4276 = vmatpush.msra.mxu0 %v3993
    %4277 = vmatmul.f32.gmra.mxu0 %v3945
    %v4278 = vpop.f32.mrf.mxu0
    %v4279 = vadd.f32 %v4256, %v4278
    %4280 = vmatmul.f32.gmra.mxu0 %v3961
    %v4281 = vpop.f32.mrf.mxu0
    %v4282 = vadd.f32 %v4259, %v4281
    %4283 = vdwg.mxu0
    %4284 = vmatpush.msra.mxu0 %v4024
    %4285 = vmatpush.msra.mxu0 %v4023
    %4286 = vmatpush.msra.mxu0 %v4022
    %4287 = vmatpush.msra.mxu0 %v4021
    %4288 = vmatpush.msra.mxu0 %v4020
    %4289 = vmatpush.msra.mxu0 %v4019
    %4290 = vmatpush.msra.mxu0 %v4018
    %4291 = vmatpush.msra.mxu0 %v4017
    %4292 = vmatpush.msra.mxu0 %v4016
    %4293 = vmatpush.msra.mxu0 %v4015
    %4294 = vmatpush.msra.mxu0 %v4014
    %4295 = vmatpush.msra.mxu0 %v4013
    %4296 = vmatpush.msra.mxu0 %v4012
    %4297 = vmatpush.msra.mxu0 %v4011
    %4298 = vmatpush.msra.mxu0 %v4010
    %4299 = vmatpush.msra.mxu0 %v4009
    %4300 = vmatmul.f32.gmra.mxu0 %v3946
    %v4301 = vpop.f32.mrf.mxu0
    %v4302 = vadd.f32 %v4279, %v4301
    %4303 = vmatmul.f32.gmra.mxu0 %v3962
    %v4304 = vpop.f32.mrf.mxu0
    %v4305 = vadd.f32 %v4282, %v4304
    %4306 = vdwg.mxu0
    %4307 = vmatpush.msra.mxu0 %v4040
    %4308 = vmatpush.msra.mxu0 %v4039
    %4309 = vmatpush.msra.mxu0 %v4038
    %4310 = vmatpush.msra.mxu0 %v4037
    %4311 = vmatpush.msra.mxu0 %v4036
    %4312 = vmatpush.msra.mxu0 %v4035
    %4313 = vmatpush.msra.mxu0 %v4034
    %4314 = vmatpush.msra.mxu0 %v4033
    %4315 = vmatpush.msra.mxu0 %v4032
    %4316 = vmatpush.msra.mxu0 %v4031
    %4317 = vmatpush.msra.mxu0 %v4030
    %4318 = vmatpush.msra.mxu0 %v4029
    %4319 = vmatpush.msra.mxu0 %v4028
    %4320 = vmatpush.msra.mxu0 %v4027
    %4321 = vmatpush.msra.mxu0 %v4026
    %4322 = vmatpush.msra.mxu0 %v4025
    %4323 = vmatmul.f32.gmra.mxu0 %v3947
    %v4324 = vpop.f32.mrf.mxu0
    %v4325 = vadd.f32 %v4302, %v4324
    %4326 = vmatmul.f32.gmra.mxu0 %v3963
    %v4327 = vpop.f32.mrf.mxu0
    %v4328 = vadd.f32 %v4305, %v4327
    %4329 = vdwg.mxu0
    %4330 = vmatpush.msra.mxu0 %v4056
    %4331 = vmatpush.msra.mxu0 %v4055
    %4332 = vmatpush.msra.mxu0 %v4054
    %4333 = vmatpush.msra.mxu0 %v4053
    %4334 = vmatpush.msra.mxu0 %v4052
    %4335 = vmatpush.msra.mxu0 %v4051
    %4336 = vmatpush.msra.mxu0 %v4050
    %4337 = vmatpush.msra.mxu0 %v4049
    %4338 = vmatpush.msra.mxu0 %v4048
    %4339 = vmatpush.msra.mxu0 %v4047
    %4340 = vmatpush.msra.mxu0 %v4046
    %4341 = vmatpush.msra.mxu0 %v4045
    %4342 = vmatpush.msra.mxu0 %v4044
    %4343 = vmatpush.msra.mxu0 %v4043
    %4344 = vmatpush.msra.mxu0 %v4042
    %4345 = vmatpush.msra.mxu0 %v4041
    %4346 = vmatmul.f32.gmra.mxu0 %v3948
    %v4347 = vpop.f32.mrf.mxu0
    %v4348 = vadd.f32 %v4325, %v4347
    %4349 = vmatmul.f32.gmra.mxu0 %v3964
    %v4350 = vpop.f32.mrf.mxu0
    %v4351 = vadd.f32 %v4328, %v4350
    %4352 = vdwg.mxu0
    %4353 = vmatpush.msra.mxu0 %v4072
    %4354 = vmatpush.msra.mxu0 %v4071
    %4355 = vmatpush.msra.mxu0 %v4070
    %4356 = vmatpush.msra.mxu0 %v4069
    %4357 = vmatpush.msra.mxu0 %v4068
    %4358 = vmatpush.msra.mxu0 %v4067
    %4359 = vmatpush.msra.mxu0 %v4066
    %4360 = vmatpush.msra.mxu0 %v4065
    %4361 = vmatpush.msra.mxu0 %v4064
    %4362 = vmatpush.msra.mxu0 %v4063
    %4363 = vmatpush.msra.mxu0 %v4062
    %4364 = vmatpush.msra.mxu0 %v4061
    %4365 = vmatpush.msra.mxu0 %v4060
    %4366 = vmatpush.msra.mxu0 %v4059
    %4367 = vmatpush.msra.mxu0 %v4058
    %4368 = vmatpush.msra.mxu0 %v4057
    %4369 = vmatmul.f32.gmra.mxu0 %v3949
    %v4370 = vpop.f32.mrf.mxu0
    %v4371 = vadd.f32 %v4348, %v4370
    %4372 = vmatmul.f32.gmra.mxu0 %v3965
    %v4373 = vpop.f32.mrf.mxu0
    %v4374 = vadd.f32 %v4351, %v4373
    %4375 = vdwg.mxu0
    %4376 = vmatpush.msra.mxu0 %v4088
    %4377 = vmatpush.msra.mxu0 %v4087
    %4378 = vmatpush.msra.mxu0 %v4086
    %4379 = vmatpush.msra.mxu0 %v4085
    %4380 = vmatpush.msra.mxu0 %v4084
    %4381 = vmatpush.msra.mxu0 %v4083
    %4382 = vmatpush.msra.mxu0 %v4082
    %4383 = vmatpush.msra.mxu0 %v4081
    %4384 = vmatpush.msra.mxu0 %v4080
    %4385 = vmatpush.msra.mxu0 %v4079
    %4386 = vmatpush.msra.mxu0 %v4078
    %4387 = vmatpush.msra.mxu0 %v4077
    %4388 = vmatpush.msra.mxu0 %v4076
    %4389 = vmatpush.msra.mxu0 %v4075
    %4390 = vmatpush.msra.mxu0 %v4074
    %4391 = vmatpush.msra.mxu0 %v4073
    %4392 = vmatmul.f32.gmra.mxu0 %v3950
    %v4393 = vpop.f32.mrf.mxu0
    %v4394 = vadd.f32 %v4371, %v4393
    %4395 = vmatmul.f32.gmra.mxu0 %v3966
    %v4396 = vpop.f32.mrf.mxu0
    %v4397 = vadd.f32 %v4374, %v4396
    %4398 = vdwg.mxu0
    %4399 = vmatpush.msra.mxu0 %v4104
    %4400 = vmatpush.msra.mxu0 %v4103
    %4401 = vmatpush.msra.mxu0 %v4102
    %4402 = vmatpush.msra.mxu0 %v4101
    %4403 = vmatpush.msra.mxu0 %v4100
    %4404 = vmatpush.msra.mxu0 %v4099
    %4405 = vmatpush.msra.mxu0 %v4098
    %4406 = vmatpush.msra.mxu0 %v4097
    %4407 = vmatpush.msra.mxu0 %v4096
    %4408 = vmatpush.msra.mxu0 %v4095
    %4409 = vmatpush.msra.mxu0 %v4094
    %4410 = vmatpush.msra.mxu0 %v4093
    %4411 = vmatpush.msra.mxu0 %v4092
    %4412 = vmatpush.msra.mxu0 %v4091
    %4413 = vmatpush.msra.mxu0 %v4090
    %4414 = vmatpush.msra.mxu0 %v4089
    %4415 = vmatmul.f32.gmra.mxu0 %v3951
    %v4416 = vpop.f32.mrf.mxu0
    %v4417 = vadd.f32 %v4394, %v4416
    %4418 = vmatmul.f32.gmra.mxu0 %v3967
    %v4419 = vpop.f32.mrf.mxu0
    %v4420 = vadd.f32 %v4397, %v4419
    %4421 = vdwg.mxu0
    %4422 = vmatpush.msra.mxu0 %v4120
    %4423 = vmatpush.msra.mxu0 %v4119
    %4424 = vmatpush.msra.mxu0 %v4118
    %4425 = vmatpush.msra.mxu0 %v4117
    %4426 = vmatpush.msra.mxu0 %v4116
    %4427 = vmatpush.msra.mxu0 %v4115
    %4428 = vmatpush.msra.mxu0 %v4114
    %4429 = vmatpush.msra.mxu0 %v4113
    %4430 = vmatpush.msra.mxu0 %v4112
    %4431 = vmatpush.msra.mxu0 %v4111
    %4432 = vmatpush.msra.mxu0 %v4110
    %4433 = vmatpush.msra.mxu0 %v4109
    %4434 = vmatpush.msra.mxu0 %v4108
    %4435 = vmatpush.msra.mxu0 %v4107
    %4436 = vmatpush.msra.mxu0 %v4106
    %4437 = vmatpush.msra.mxu0 %v4105
    %4438 = vmatmul.f32.gmra.mxu0 %v3952
    %v4439 = vpop.f32.mrf.mxu0
    %v4440 = vadd.f32 %v4417, %v4439
    %4441 = vmatmul.f32.gmra.mxu0 %v3968
    %v4442 = vpop.f32.mrf.mxu0
    %v4443 = vadd.f32 %v4420, %v4442
    %4444 = vdwg.mxu0
    %4445 = vmatpush.msra.mxu0 %v4136
    %4446 = vmatpush.msra.mxu0 %v4135
    %4447 = vmatpush.msra.mxu0 %v4134
    %4448 = vmatpush.msra.mxu0 %v4133
    %4449 = vmatpush.msra.mxu0 %v4132
    %4450 = vmatpush.msra.mxu0 %v4131
    %4451 = vmatpush.msra.mxu0 %v4130
    %4452 = vmatpush.msra.mxu0 %v4129
    %4453 = vmatpush.msra.mxu0 %v4128
    %4454 = vmatpush.msra.mxu0 %v4127
    %4455 = vmatpush.msra.mxu0 %v4126
    %4456 = vmatpush.msra.mxu0 %v4125
    %4457 = vmatpush.msra.mxu0 %v4124
    %4458 = vmatpush.msra.mxu0 %v4123
    %4459 = vmatpush.msra.mxu0 %v4122
    %4460 = vmatpush.msra.mxu0 %v4121
    %4461 = vmatmul.f32.gmra.mxu0 %v3953
    %v4462 = vpop.f32.mrf.mxu0
    %v4463 = vadd.f32 %v4440, %v4462
    %4464 = vmatmul.f32.gmra.mxu0 %v3969
    %v4465 = vpop.f32.mrf.mxu0
    %v4466 = vadd.f32 %v4443, %v4465
    %4467 = vdwg.mxu0
    %4468 = vmatpush.msra.mxu0 %v4152
    %4469 = vmatpush.msra.mxu0 %v4151
    %4470 = vmatpush.msra.mxu0 %v4150
    %4471 = vmatpush.msra.mxu0 %v4149
    %4472 = vmatpush.msra.mxu0 %v4148
    %4473 = vmatpush.msra.mxu0 %v4147
    %4474 = vmatpush.msra.mxu0 %v4146
    %4475 = vmatpush.msra.mxu0 %v4145
    %4476 = vmatpush.msra.mxu0 %v4144
    %4477 = vmatpush.msra.mxu0 %v4143
    %4478 = vmatpush.msra.mxu0 %v4142
    %4479 = vmatpush.msra.mxu0 %v4141
    %4480 = vmatpush.msra.mxu0 %v4140
    %4481 = vmatpush.msra.mxu0 %v4139
    %4482 = vmatpush.msra.mxu0 %v4138
    %4483 = vmatpush.msra.mxu0 %v4137
    %4484 = vmatmul.f32.gmra.mxu0 %v3954
    %v4485 = vpop.f32.mrf.mxu0
    %v4486 = vadd.f32 %v4463, %v4485
    %4487 = vmatmul.f32.gmra.mxu0 %v3970
    %v4488 = vpop.f32.mrf.mxu0
    %v4489 = vadd.f32 %v4466, %v4488
    %4490 = vdwg.mxu0
    %4491 = vmatpush.msra.mxu0 %v4168
    %4492 = vmatpush.msra.mxu0 %v4167
    %4493 = vmatpush.msra.mxu0 %v4166
    %4494 = vmatpush.msra.mxu0 %v4165
    %4495 = vmatpush.msra.mxu0 %v4164
    %4496 = vmatpush.msra.mxu0 %v4163
    %4497 = vmatpush.msra.mxu0 %v4162
    %4498 = vmatpush.msra.mxu0 %v4161
    %4499 = vmatpush.msra.mxu0 %v4160
    %4500 = vmatpush.msra.mxu0 %v4159
    %4501 = vmatpush.msra.mxu0 %v4158
    %4502 = vmatpush.msra.mxu0 %v4157
    %4503 = vmatpush.msra.mxu0 %v4156
    %4504 = vmatpush.msra.mxu0 %v4155
    %4505 = vmatpush.msra.mxu0 %v4154
    %4506 = vmatpush.msra.mxu0 %v4153
    %4507 = vmatmul.f32.gmra.mxu0 %v3955
    %v4508 = vpop.f32.mrf.mxu0
    %v4509 = vadd.f32 %v4486, %v4508
    %4510 = vmatmul.f32.gmra.mxu0 %v3971
    %v4511 = vpop.f32.mrf.mxu0
    %v4512 = vadd.f32 %v4489, %v4511
    %4513 = vdwg.mxu0
    %4514 = vmatpush.msra.mxu0 %v4184
    %4515 = vmatpush.msra.mxu0 %v4183
    %4516 = vmatpush.msra.mxu0 %v4182
    %4517 = vmatpush.msra.mxu0 %v4181
    %4518 = vmatpush.msra.mxu0 %v4180
    %4519 = vmatpush.msra.mxu0 %v4179
    %4520 = vmatpush.msra.mxu0 %v4178
    %4521 = vmatpush.msra.mxu0 %v4177
    %4522 = vmatpush.msra.mxu0 %v4176
    %4523 = vmatpush.msra.mxu0 %v4175
    %4524 = vmatpush.msra.mxu0 %v4174
    %4525 = vmatpush.msra.mxu0 %v4173
    %4526 = vmatpush.msra.mxu0 %v4172
    %4527 = vmatpush.msra.mxu0 %v4171
    %4528 = vmatpush.msra.mxu0 %v4170
    %4529 = vmatpush.msra.mxu0 %v4169
    %4530 = vmatmul.f32.gmra.mxu0 %v3956
    %v4531 = vpop.f32.mrf.mxu0
    %v4532 = vadd.f32 %v4509, %v4531
    %4533 = vmatmul.f32.gmra.mxu0 %v3972
    %v4534 = vpop.f32.mrf.mxu0
    %v4535 = vadd.f32 %v4512, %v4534
    %4536 = vdwg.mxu0
    %4537 = vmatpush.msra.mxu0 %v4200
    %4538 = vmatpush.msra.mxu0 %v4199
    %4539 = vmatpush.msra.mxu0 %v4198
    %4540 = vmatpush.msra.mxu0 %v4197
    %4541 = vmatpush.msra.mxu0 %v4196
    %4542 = vmatpush.msra.mxu0 %v4195
    %4543 = vmatpush.msra.mxu0 %v4194
    %4544 = vmatpush.msra.mxu0 %v4193
    %4545 = vmatpush.msra.mxu0 %v4192
    %4546 = vmatpush.msra.mxu0 %v4191
    %4547 = vmatpush.msra.mxu0 %v4190
    %4548 = vmatpush.msra.mxu0 %v4189
    %4549 = vmatpush.msra.mxu0 %v4188
    %4550 = vmatpush.msra.mxu0 %v4187
    %4551 = vmatpush.msra.mxu0 %v4186
    %4552 = vmatpush.msra.mxu0 %v4185
    %4553 = vmatmul.f32.gmra.mxu0 %v3957
    %v4554 = vpop.f32.mrf.mxu0
    %v4555 = vadd.f32 %v4532, %v4554
    %4556 = vmatmul.f32.gmra.mxu0 %v3973
    %v4557 = vpop.f32.mrf.mxu0
    %v4558 = vadd.f32 %v4535, %v4557
    %4559 = vdwg.mxu0
    %4560 = vmatpush.msra.mxu0 %v4216
    %4561 = vmatpush.msra.mxu0 %v4215
    %4562 = vmatpush.msra.mxu0 %v4214
    %4563 = vmatpush.msra.mxu0 %v4213
    %4564 = vmatpush.msra.mxu0 %v4212
    %4565 = vmatpush.msra.mxu0 %v4211
    %4566 = vmatpush.msra.mxu0 %v4210
    %4567 = vmatpush.msra.mxu0 %v4209
    %4568 = vmatpush.msra.mxu0 %v4208
    %4569 = vmatpush.msra.mxu0 %v4207
    %4570 = vmatpush.msra.mxu0 %v4206
    %4571 = vmatpush.msra.mxu0 %v4205
    %4572 = vmatpush.msra.mxu0 %v4204
    %4573 = vmatpush.msra.mxu0 %v4203
    %4574 = vmatpush.msra.mxu0 %v4202
    %4575 = vmatpush.msra.mxu0 %v4201
    %4576 = vmatmul.f32.gmra.mxu0 %v3958
    %v4577 = vpop.f32.mrf.mxu0
    %v4578 = vadd.f32 %v4555, %v4577
    %4579 = vmatmul.f32.gmra.mxu0 %v3974
    %v4580 = vpop.f32.mrf.mxu0
    %v4581 = vadd.f32 %v4558, %v4580
    %4582 = vdwg.mxu0
    %4583 = vmatpush.msra.mxu0 %v4232
    %4584 = vmatpush.msra.mxu0 %v4231
    %4585 = vmatpush.msra.mxu0 %v4230
    %4586 = vmatpush.msra.mxu0 %v4229
    %4587 = vmatpush.msra.mxu0 %v4228
    %4588 = vmatpush.msra.mxu0 %v4227
    %4589 = vmatpush.msra.mxu0 %v4226
    %4590 = vmatpush.msra.mxu0 %v4225
    %4591 = vmatpush.msra.mxu0 %v4224
    %4592 = vmatpush.msra.mxu0 %v4223
    %4593 = vmatpush.msra.mxu0 %v4222
    %4594 = vmatpush.msra.mxu0 %v4221
    %4595 = vmatpush.msra.mxu0 %v4220
    %4596 = vmatpush.msra.mxu0 %v4219
    %4597 = vmatpush.msra.mxu0 %v4218
    %4598 = vmatpush.msra.mxu0 %v4217
    %4599 = vmatmul.f32.gmra.mxu0 %v3959
    %v4600 = vpop.f32.mrf.mxu0
    %v4601 = vadd.f32 %v4578, %v4600
    %4602 = vmatmul.f32.gmra.mxu0 %v3975
    %v4603 = vpop.f32.mrf.mxu0
    %v4604 = vadd.f32 %v4581, %v4603
    %4605 = vdwg.mxu0
    %v4606 = vadd.f32 %v3466, %v4601
    %v4607 = vadd.f32 %v3467, %v4604
    %s4608 = scalar_lea.vmem %s19, 1
    %v4609 = vld [vmem:[%s4608] sm:$0x1]
    %s4610 = scalar_lea.vmem %s20, 1
    %v4611 = vld [vmem:[%s4610] sm:$0x1]
    %v4612 = vsel %vm115, %v4606, 0.0
    %4613 = vadd.xlane.f32.xlu0 %v4612
    %v4614 = vpop.xlane.xlu0 %4613
    %v4615 = vsel %vm115, %v4607, 0.0
    %4616 = vadd.xlane.f32.xlu0 %v4615
    %v4617 = vpop.xlane.xlu0 %4616
    %v4618 = vmul.f32 %v4614, %v1142
    %v4619 = vmul.f32 %v4617, %v1142
    %v4620 = vsub.f32 %v4606, %v4618
    %v4621 = vsub.f32 %v4607, %v4619
    %v4622 = vmul.f32 %v4620, %v4620
    %v4623 = vmul.f32 %v4621, %v4621
    %v4624 = vsel %vm115, %v4622, 0.0
    %4625 = vadd.xlane.f32.xlu0 %v4624
    %v4626 = vpop.xlane.xlu0 %4625
    %v4627 = vsel %vm115, %v4623, 0.0
    %4628 = vadd.xlane.f32.xlu0 %v4627
    %v4629 = vpop.xlane.xlu0 %4628
    %v4630 = vmul.f32 %v4626, %v1142
    %v4631 = vmul.f32 %v4629, %v1142
    %v4632 = vadd.f32 %v4630, 1e-05
    %v4633 = vadd.f32 %v4631, 1e-05
    %v4634 = vrsqrt.pop %v4632
    %v4635 = vmul.f32 %v4634, %v4632
    %v4636 = vmul.f32 %v4635, %v4634
    %v4637 = vmul.f32 0.5, %v4636
    %v4638 = vsub.f32 1.5, %v4637
    %v4639 = vmul.f32 %v4634, %v4638
    %vm4640 = vweird.f32 %v4632
    %vm4641 = vweird.f32 %v4634
    %vm4642 = vmor %vm4640, %vm4641
    %v4643 = vsel %vm4642, %v4634, %v4639
    %v4644 = vrsqrt.pop %v4633
    %v4645 = vmul.f32 %v4644, %v4633
    %v4646 = vmul.f32 %v4645, %v4644
    %v4647 = vmul.f32 0.5, %v4646
    %v4648 = vsub.f32 1.5, %v4647
    %v4649 = vmul.f32 %v4644, %v4648
    %vm4650 = vweird.f32 %v4633
    %vm4651 = vweird.f32 %v4644
    %vm4652 = vmor %vm4650, %vm4651
    %v4653 = vsel %vm4652, %v4644, %v4649
    %v4654 = vmul.f32 %v4620, %v4643
    %v4655 = vmul.f32 %v4621, %v4653
    %v4657 = vperm.slane %v4609, 0
    %v4659 = vmul.f32 %v4654, %v4657
    %v4660 = vmul.f32 %v4655, %v4657
    %v4662 = vperm.slane %v4611, 0
    %v4664 = vadd.f32 %v4659, %v4662
    %v4665 = vadd.f32 %v4660, %v4662
    %v4666 = vld [vmem:[%s3] sm:$0xff]
    %v4667 = vld [vmem:[%s3 + $0x8] sm:$0xff]
    %v4668 = vld [vmem:[%s3 + $0x10] sm:$0xff]
    %v4669 = vld [vmem:[%s3 + $0x18] sm:$0xff]
    %v4670 = vld [vmem:[%s4] sm:$0x1]
    %v4672 = vperm.slane %v4670, 0
    %v4676 = vrot.slane %v4665, 7
    %vm4677 = vcmask 1041409
    %v4678 = vsel %vm4677, %v4676, %v4664
    %v4679 = vsel %vm115, %v4678, 0
    %4681 = vmatpush.msra.mxu0 0.0
    %4682 = vmatpush.msra.mxu0 0.0
    %4683 = vmatpush.msra.mxu0 0.0
    %4684 = vmatpush.msra.mxu0 0.0
    %4685 = vmatpush.msra.mxu0 0.0
    %4686 = vmatpush.msra.mxu0 0.0
    %4687 = vmatpush.msra.mxu0 0.0
    %4688 = vmatpush.msra.mxu0 0.0
    %4689 = vmatpush.msra.mxu0 0.0
    %4690 = vmatpush.msra.mxu0 0.0
    %4691 = vmatpush.msra.mxu0 0.0
    %4692 = vmatpush.msra.mxu0 0.0
    %4693 = vmatpush.msra.mxu0 %v4669
    %4694 = vmatpush.msra.mxu0 %v4668
    %4695 = vmatpush.msra.mxu0 %v4667
    %4696 = vmatpush.msra.mxu0 %v4666
    %4697 = vmatmul.f32.gmra.mxu0 %v4679
    %v4698 = vpop.f32.mrf.mxu0
    %v4699 = vadd.f32 %v4672, %v4698
    %4700 = vdwg.mxu0
    %v4701 = vxor.u32 %v4699, 2147483648
    %v4702 = vmul.f32 %v4701, 1.442695
    %v4703 = vpow.pop %v4702
    %v4704 = vadd.f32 %v4703, 1.0
    %v4705 = vrcp.pop %v4704
    %v4706 = vmul.f32 %v4704, %v4705
    %v4707 = vsub.f32 1.0, %v4706
    %v4708 = vmul.f32 %v4705, %v4707
    %v4709 = vadd.f32 %v4705, %v4708
    %vm4710 = vweird.f32 %v4704
    %vm4711 = vweird.f32 %v4705
    %vm4712 = vmor %vm4710, %vm4711
    %v4713 = vsel %vm4712, %v4705, %v4709
    %v4714 = vand.u32 2147483647, %v4704
    %vm4715 = vcmp.eq.f32.partialorder %v4714, 8.507059e+37
    %v4716 = vand.u32 %v4704, 2147483648
    %v4717 = vor.u32 1.1754944e-38, %v4716
    %v4718 = vsel %vm4715, %v4717, %v4713
    %v4719 = vmul.f32 1.0, %v4718
    %vm4720 = vcmask 25600
    %4721 = vst.msk [vmem:[#allocation2] sm:$0x3] %vm4720, %v4719
    // Predicated region
    $region86: #{transformer_forward.1} parent=1 // pred_check
      _
    $region87: #{transformer_forward.1} parent=1 // pred_check_branch
      %4723 = sbr.rel (0) target = $region89
    $region88: #{transformer_forward.1} parent=1 // pred_region
      %4725 = vsyncadd [#allocation3], 0
      %s4727 = sshll.u32 [#allocation2], 4
      %s4728 = int_to_ptr.vmem [resolvable:$true] %s4727
      %s4729 = sshll.u32 %s21, 4
      %s4730 = int_to_ptr.hbm [resolvable:$true] %s4729
      %4732 = dma.vmem_to_hbm [thread:$0]  %s4728, 32, %s4730, [#allocation3]
    $region89: #{transformer_forward.1} parent=1 // pred_fallthru
      _
    // Predicated region
    $region90: #{transformer_forward.1} parent=1 // pred_check
      _
    $region91: #{transformer_forward.1} parent=1 // pred_check_branch
      %4734 = sbr.rel (0) target = $region93
    $region92: #{transformer_forward.1} parent=1 // pred_region
      %4736 = dma.done [#allocation3], 32
    $region93: #{transformer_forward.1} parent=1 // pred_fallthru
      _
    %4737 = vsyncpa [#allocation3], 1

</llo_original>
